<compile_context>
chip_gen: v6e
topology: v6e:2x2x1
jax: 0.10.0
libtpu: 0.0.40
codegen_flags: <defaults>
</compile_context>

<pallas_src>
import functools

import numpy as np
import jax
import jax.numpy as jnp
from jax.experimental import pallas as pl
from jax.experimental.pallas import tpu as pltpu


def _mm(a_bf16, w_bf16):
    """2-D matmul on the MXU with f32 accumulation."""
    return jax.lax.dot_general(
        a_bf16, w_bf16, (((1,), (0,)), ((), ())),
        preferred_element_type=jnp.float32)


def _block_kernel(x_ref, w1b_ref, s1_ref, b1_ref, wband_ref, s2_ref, b2_ref,
                  out_ref, pad_ref, *, D, H, W, nIn, n, nOut, add_residual):
    bf16 = jnp.bfloat16
    DH = D * H
    Wn = W * n
    Wpn = (W + 4) * n

    # ---- zero only the 2-voxel halo of the padded c1-output scratch --------
    zeros = lambda s: jnp.zeros(s, pad_ref.dtype)
    pad_ref[0:2, :, :] = zeros((2, H + 4, Wpn))
    pad_ref[D + 2:D + 4, :, :] = zeros((2, H + 4, Wpn))
    pad_ref[2:D + 2, 0:2, :] = zeros((D, 2, Wpn))
    pad_ref[2:D + 2, H + 2:H + 4, :] = zeros((D, 2, Wpn))
    pad_ref[2:D + 2, 2:H + 2, 0:2 * n] = zeros((D, H, 2 * n))
    pad_ref[2:D + 2, 2:H + 2, (W + 2) * n:Wpn] = zeros((D, H, 2 * n))

    # ---- c1: 1x1x1 conv via ONE block-diagonal K = W*nIn matmul -------------
    # rows = (d, h), lanes = (w, c); the input reshape only merges leading dims.
    x2 = x_ref[0, :, :, :].reshape(DH, W * nIn)              # (DH, W*nIn) f32
    out1 = _mm(x2.astype(bf16), w1b_ref[...])                # (DH, W*n) f32
    out1 = jnp.maximum(out1 * s1_ref[...] + b1_ref[...], 0.0)

    # write interior of the padded scratch (halo stays zero)
    pad_ref[2:D + 2, 2:H + 2, 2 * n:2 * n + Wn] = out1.reshape(D, H, Wn)

    # ---- 18 banded matmuls: one (DH, (W+4)*n) x ((W+4)*n, W*nOut) per -------
    # (kd, kh, dilation); kw taps are folded into the band weight.
    # Output columns = [ d1 | d2 | d2+d4 | d2+d4+d8 ], already lane-dense.
    partials = []
    for di, dil in enumerate((1, 2)):
        acc = jnp.zeros((DH, W * nOut), jnp.float32)
        for kd in range(3):
            od = 2 + dil * (kd - 1)
            for kh in range(3):
                oh = 2 + dil * (kh - 1)
                win = pad_ref[od:od + D, oh:oh + H, :]        # (D, H, Wpn)
                acc = acc + _mm(win.reshape(DH, Wpn).astype(bf16),
                                wband_ref[di, kd, kh, :, :])
        partials.append(acc)
    acc = partials[0] + partials[1]   # independent partials per dilation

    # ---- final BN (eps=1e-5, inference), residual, ReLU ---------------------
    acc = acc * s2_ref[...] + b2_ref[...]
    if add_residual:                  # input.size() == combine.size()
        acc = acc + x2
    acc = jnp.maximum(acc, 0.0)

    # single full-width lane-dense store (rows (d,h), lanes (w,c))
    out_ref[0, :, :, :] = acc.reshape(D, H, W * nOut).astype(out_ref.dtype)


def _block_diag_1x1(w1, W):
    """(nIn, n) 1x1x1 weight -> block-diagonal (W*nIn, W*n) weight."""
    w1 = np.asarray(w1, np.float32)
    nIn, n = w1.shape
    bd = np.zeros((W * nIn, W * n), np.float32)
    for w in range(W):
        bd[w * nIn:(w + 1) * nIn, w * n:(w + 1) * n] = w1
    return bd


def _band_weight(wf, dil, W):
    """Fold the kw taps of a (3,3,3,n,nOut) weight into a band matrix.

    Returns (3, 3, (W+4)*n, W*nOut): for output w and tap kw the input lane
    block at padded-w index  w + 2 + dil*(kw-1)  carries wf[kd, kh, kw].
    """
    wf = np.asarray(wf, np.float32)
    n, nOut = wf.shape[-2:]
    Wp = W + 4
    band = np.zeros((3, 3, Wp * n, W * nOut), np.float32)
    for kd in range(3):
        for kh in range(3):
            for kw in range(3):
                for w in range(W):
                    pw = w + 2 + dil * (kw - 1)
                    band[kd, kh, pw * n:(pw + 1) * n,
                         w * nOut:(w + 1) * nOut] += wf[kd, kh, kw]
    return band


def dilated_parallel_residual_block_b1(x, params):
    w1, s1, b1, wd1, wd2, wd4, wd8, s2, b2 = params
    N, D, H, W, nIn = x.shape
    n = wd2.shape[-1]
    n1 = wd1.shape[-1]
    nOut = n1 + 3 * n

    # Fused branch weights per dilation (by conv linearity).
    wf1 = jnp.concatenate([wd1, wd2, wd2, wd2], axis=-1)                  # dil 1
    wf2 = jnp.concatenate([jnp.zeros((3, 3, 3, n, n1), wd4.dtype),
                           jnp.zeros((3, 3, 3, n, n), wd4.dtype),
                           wd4, wd4 + wd8], axis=-1)                      # dil 2

    # Host-side weight restructuring (bf16 for the MXU).
    w1b = jnp.asarray(_block_diag_1x1(w1, W), jnp.bfloat16)        # (W*nIn, W*n)
    wband = jnp.asarray(np.stack([_band_weight(wf1, 1, W),
                                  _band_weight(wf2, 2, W)], axis=0),
                        jnp.bfloat16)                              # (2,3,3,(W+4)n,W*nOut)

    # BN scale/shift replicated across the w lanes (lane index = w*C + c).
    s1w = jnp.tile(jnp.asarray(s1, jnp.float32).reshape(1, n), (1, W))
    b1w = jnp.tile(jnp.asarray(b1, jnp.float32).reshape(1, n), (1, W))
    s2w = jnp.tile(jnp.asarray(s2, jnp.float32).reshape(1, nOut), (1, W))
    b2w = jnp.tile(jnp.asarray(b2, jnp.float32).reshape(1, nOut), (1, W))

    # Lane-dense HBM layout: merge W into the channel (lane) axis.
    xm = x.reshape(N, D, H, W * nIn)

    kernel = functools.partial(_block_kernel, D=D, H=H, W=W, nIn=nIn, n=n,
                               nOut=nOut, add_residual=(nIn == nOut))

    def const_spec(arr):
        rank = arr.ndim
        return pl.BlockSpec(arr.shape, lambda b, _r=rank: (0,) * _r)

    DH = D * H
    Wpn = (W + 4) * n
    flops = int(N * (2 * DH * (W * nIn) * (W * n)
                     + 18 * 2 * DH * Wpn * (W * nOut)))
    bytes_accessed = int(xm.size * 4 + N * DH * W * nOut * 4
                         + (w1b.size + wband.size) * 2
                         + (s1w.size + b1w.size + s2w.size + b2w.size) * 4)

    out_m = pl.pallas_call(
        kernel,
        out_shape=jax.ShapeDtypeStruct((N, D, H, W * nOut), x.dtype),
        grid=(N,),
        in_specs=[pl.BlockSpec((1, D, H, W * nIn), lambda b: (b, 0, 0, 0))] +
                 [const_spec(a) for a in (w1b, s1w, b1w, wband, s2w, b2w)],
        out_specs=pl.BlockSpec((1, D, H, W * nOut), lambda b: (b, 0, 0, 0)),
        scratch_shapes=[
            pltpu.VMEM((D + 4, H + 4, Wpn), jnp.float32),   # padded c1 output
        ],
        compiler_params=pltpu.CompilerParams(
            dimension_semantics=("parallel",),
            vmem_limit_bytes=48 * 1024 * 1024),
        cost_estimate=pl.CostEstimate(flops=flops, transcendentals=0,
                                      bytes_accessed=bytes_accessed),
    )(xm, w1b, s1w, b1w, wband, s2w, b2w)

    return out_m.reshape(N, D, H, W, nOut)


def init_params(key, nIn, nOut):
    k = 4
    n = nOut // k
    n1 = nOut - (k - 1) * n
    ks = jax.random.split(key, 13)
    w1 = 0.2 * jax.random.normal(ks[0], (nIn, n), jnp.float32)
    wd1 = 0.2 * jax.random.normal(ks[1], (3, 3, 3, n, n1), jnp.float32)
    wd2 = 0.2 * jax.random.normal(ks[2], (3, 3, 3, n, n), jnp.float32)
    wd4 = 0.2 * jax.random.normal(ks[3], (3, 3, 3, n, n), jnp.float32)
    wd8 = 0.2 * jax.random.normal(ks[4], (3, 3, 3, n, n), jnp.float32)

    # c1's BatchNorm3d(n, eps=0.001) folded to scale/shift (inference mode).
    g1 = 1.0 + 0.1 * jax.random.normal(ks[5], (n,), jnp.float32)
    be1 = 0.05 * jax.random.normal(ks[6], (n,), jnp.float32)
    m1 = 0.1 * jax.random.normal(ks[7], (n,), jnp.float32)
    v1 = 0.5 + 0.5 * jnp.abs(jax.random.normal(ks[8], (n,), jnp.float32))
    s1 = g1 / jnp.sqrt(v1 + 1e-3)
    b1 = be1 - m1 * s1

    # Final BatchNorm3d(nOut, eps=1e-5) folded to scale/shift (inference mode).
    g2 = 1.0 + 0.1 * jax.random.normal(ks[9], (nOut,), jnp.float32)
    be2 = 0.05 * jax.random.normal(ks[10], (nOut,), jnp.float32)
    m2 = 0.1 * jax.random.normal(ks[11], (nOut,), jnp.float32)
    v2 = 0.5 + 0.5 * jnp.abs(jax.random.normal(ks[12], (nOut,), jnp.float32))
    s2 = g2 / jnp.sqrt(v2 + 1e-5)
    b2 = be2 - m2 * s2

    return (w1, s1, b1, wd1, wd2, wd4, wd8, s2, b2)


def ref_forward(x, params):
    """Pure-JAX reference (NDHWC) using the same bf16 matmul-input rounding."""
    w1, s1, b1, wd1, wd2, wd4, wd8, s2, b2 = params
    bf = jnp.bfloat16
    out1 = jnp.einsum('ndhwc,ck->ndhwk', x.astype(bf), w1.astype(bf),
                      preferred_element_type=jnp.float32)
    out1 = jnp.maximum(out1 * s1 + b1, 0.0)
    dn = jax.lax.conv_dimension_numbers(out1.shape, wd2.shape,
                                        ('NDHWC', 'DHWIO', 'NDHWC'))

    def conv(a, w, d):
        return jax.lax.conv_general_dilated(
            a.astype(bf), w.astype(bf), (1, 1, 1), [(d, d)] * 3,
            rhs_dilation=(d, d, d), dimension_numbers=dn,
            preferred_element_type=jnp.float32)

    d1 = conv(out1, wd1, 1)
    d2 = conv(out1, wd2, 1)
    d4 = conv(out1, wd4, 2)
    # d2 + d4 + d8 = d2 + conv(out1, wd4 + wd8) by conv linearity; the
    # pre-summed weight matches the fused kernel weight's bf16 rounding.
    d48 = conv(out1, wd4 + wd8, 2)
    comb = jnp.concatenate([d1, d2, d2 + d4, d2 + d48], axis=-1)
    comb = comb * s2 + b2
    if x.shape == comb.shape:
        comb = comb + x
    return jnp.maximum(comb, 0.0)


if __name__ == "__main__":
    key = jax.random.PRNGKey(0)
    k_x, k_p = jax.random.split(key)

    N, D, H, W = 2, 8, 8, 8
    nIn, nOut = 32, 32            # level-1 ESPNet block; nIn == nOut -> residual

    params = init_params(k_p, nIn, nOut)
    x = jax.random.normal(k_x, (N, D, H, W, nIn), jnp.float32)

    out = dilated_parallel_residual_block_b1(x, params)
    out = jax.block_until_ready(out)

    ref = ref_forward(x, params)
    if out.shape != ref.shape:
        raise AssertionError(f"shape mismatch: {out.shape} vs {ref.shape}")
    err = float(jnp.max(jnp.abs(out - ref)))
    if err > 2e-2:
        raise AssertionError(f"kernel/reference mismatch, max abs err = {err}")

    print("KERNEL_OK")
</pallas_src>

<mosaic_0001>
module attributes {stable_mosaic.version = 11 : i64} {
  func.func @_block_kernel(%arg0: i32, %arg1: memref<1x8x8x256xf32, #tpu.memory_space<vmem>>, %arg2: memref<256x64xbf16, #tpu.memory_space<vmem>>, %arg3: memref<1x64xf32, #tpu.memory_space<vmem>>, %arg4: memref<1x64xf32, #tpu.memory_space<vmem>>, %arg5: memref<2x3x3x96x256xbf16, #tpu.memory_space<vmem>>, %arg6: memref<1x256xf32, #tpu.memory_space<vmem>>, %arg7: memref<1x256xf32, #tpu.memory_space<vmem>>, %arg8: memref<1x8x8x256xf32, #tpu.memory_space<vmem>>, %arg9: memref<12x12x96xf32, #tpu.memory_space<vmem>>) attributes {dimension_semantics = [#tpu.dimension_semantics<parallel>], iteration_bounds = array<i64: 2>, scalar_prefetch = 0 : i64, scratch_operands = 1 : i64, tpu.core_type = #tpu.core_type<tc>, window_params = [{transform_indices = @transform_0, window_bounds = array<i64: 1, 8, 8, 256>}, {pipeline_mode = #tpu.pipeline_mode<synchronous>, transform_indices = @transform_1, window_bounds = array<i64: 256, 64>}, {pipeline_mode = #tpu.pipeline_mode<synchronous>, transform_indices = @transform_2, window_bounds = array<i64: 1, 64>}, {pipeline_mode = #tpu.pipeline_mode<synchronous>, transform_indices = @transform_3, window_bounds = array<i64: 1, 64>}, {pipeline_mode = #tpu.pipeline_mode<synchronous>, transform_indices = @transform_4, window_bounds = array<i64: 2, 3, 3, 96, 256>}, {pipeline_mode = #tpu.pipeline_mode<synchronous>, transform_indices = @transform_5, window_bounds = array<i64: 1, 256>}, {pipeline_mode = #tpu.pipeline_mode<synchronous>, transform_indices = @transform_6, window_bounds = array<i64: 1, 256>}, {transform_indices = @transform_7, window_bounds = array<i64: 1, 8, 8, 256>}]} {
    %cst = arith.constant 0.000000e+00 : f32
    %0 = vector.broadcast %cst : f32 to vector<2x12x96xf32>
    %c0 = arith.constant 0 : index
    %c0_0 = arith.constant 0 : index
    %c0_1 = arith.constant 0 : index
    %1 = vector.load %arg9[%c0, %c0_0, %c0_1] : memref<12x12x96xf32, #tpu.memory_space<vmem>>, vector<2x12x96xf32>
    tpu.vector_store %arg9[%c0, %c0_0, %c0_1], %0 {strides = array<i32>} : memref<12x12x96xf32, #tpu.memory_space<vmem>>, vector<2x12x96xf32>,
    %cst_2 = arith.constant 0.000000e+00 : f32
    %2 = vector.broadcast %cst_2 : f32 to vector<2x12x96xf32>
    %c10 = arith.constant 10 : index
    %c0_3 = arith.constant 0 : index
    %c0_4 = arith.constant 0 : index
    %3 = vector.load %arg9[%c10, %c0_3, %c0_4] : memref<12x12x96xf32, #tpu.memory_space<vmem>>, vector<2x12x96xf32>
    tpu.vector_store %arg9[%c10, %c0_3, %c0_4], %2 {strides = array<i32>} : memref<12x12x96xf32, #tpu.memory_space<vmem>>, vector<2x12x96xf32>,
    %cst_5 = arith.constant 0.000000e+00 : f32
    %4 = vector.broadcast %cst_5 : f32 to vector<8x2x96xf32>
    %c2 = arith.constant 2 : index
    %c0_6 = arith.constant 0 : index
    %c0_7 = arith.constant 0 : index
    %5 = vector.load %arg9[%c2, %c0_6, %c0_7] : memref<12x12x96xf32, #tpu.memory_space<vmem>>, vector<8x2x96xf32>
    tpu.vector_store %arg9[%c2, %c0_6, %c0_7], %4 {strides = array<i32>} : memref<12x12x96xf32, #tpu.memory_space<vmem>>, vector<8x2x96xf32>,
    %cst_8 = arith.constant 0.000000e+00 : f32
    %6 = vector.broadcast %cst_8 : f32 to vector<8x2x96xf32>
    %c2_9 = arith.constant 2 : index
    %c10_10 = arith.constant 10 : index
    %c0_11 = arith.constant 0 : index
    %7 = vector.load %arg9[%c2_9, %c10_10, %c0_11] : memref<12x12x96xf32, #tpu.memory_space<vmem>>, vector<8x2x96xf32>
    tpu.vector_store %arg9[%c2_9, %c10_10, %c0_11], %6 {strides = array<i32>} : memref<12x12x96xf32, #tpu.memory_space<vmem>>, vector<8x2x96xf32>,
    %cst_12 = arith.constant 0.000000e+00 : f32
    %8 = vector.broadcast %cst_12 : f32 to vector<8x8x16xf32>
    %c2_13 = arith.constant 2 : index
    %c2_14 = arith.constant 2 : index
    %c0_15 = arith.constant 0 : index
    %9 = vector.load %arg9[%c2_13, %c2_14, %c0_15] : memref<12x12x96xf32, #tpu.memory_space<vmem>>, vector<8x8x16xf32>
    tpu.vector_store %arg9[%c2_13, %c2_14, %c0_15], %8 {strides = array<i32>} : memref<12x12x96xf32, #tpu.memory_space<vmem>>, vector<8x8x16xf32>,
    %cst_16 = arith.constant 0.000000e+00 : f32
    %10 = vector.broadcast %cst_16 : f32 to vector<8x8x16xf32>
    %c2_17 = arith.constant 2 : index
    %c2_18 = arith.constant 2 : index
    %c80 = arith.constant 80 : index
    %11 = vector.load %arg9[%c2_17, %c2_18, %c80] : memref<12x12x96xf32, #tpu.memory_space<vmem>>, vector<8x8x16xf32>
    tpu.vector_store %arg9[%c2_17, %c2_18, %c80], %10 {strides = array<i32>} : memref<12x12x96xf32, #tpu.memory_space<vmem>>, vector<8x8x16xf32>,
    %c0_19 = arith.constant 0 : index
    %c0_20 = arith.constant 0 : index
    %c0_21 = arith.constant 0 : index
    %c0_22 = arith.constant 0 : index
    %12 = vector.load %arg1[%c0_19, %c0_20, %c0_21, %c0_22] : memref<1x8x8x256xf32, #tpu.memory_space<vmem>>, vector<1x8x8x256xf32>
    %13 = vector.shape_cast %12 : vector<1x8x8x256xf32> to vector<8x8x256xf32>
    %14 = vector.shape_cast %13 : vector<8x8x256xf32> to vector<64x256xf32>
    %15 = arith.truncf %14 : vector<64x256xf32> to vector<64x256xbf16>
    %c0_23 = arith.constant 0 : index
    %c0_24 = arith.constant 0 : index
    %16 = vector.load %arg2[%c0_23, %c0_24] : memref<256x64xbf16, #tpu.memory_space<vmem>>, vector<256x64xbf16>
    %cst_25 = arith.constant dense<0.000000e+00> : vector<64x64xf32>
    %17 = tpu.matmul %15, %16, %cst_25 {dimension_numbers = #tpu.dot_dimension_numbers<[1], [0], [0], [1], [0, 0, 1, 1], [], []>} : vector<64x256xbf16>, vector<256x64xbf16>, vector<64x64xf32> -> vector<64x64xf32>
    %c0_26 = arith.constant 0 : index
    %c0_27 = arith.constant 0 : index
    %18 = vector.load %arg3[%c0_26, %c0_27] : memref<1x64xf32, #tpu.memory_space<vmem>>, vector<1x64xf32>
    %19 = vector.broadcast %18 : vector<1x64xf32> to vector<64x64xf32>
    %20 = arith.mulf %17, %19 : vector<64x64xf32>
    %c0_28 = arith.constant 0 : index
    %c0_29 = arith.constant 0 : index
    %21 = vector.load %arg4[%c0_28, %c0_29] : memref<1x64xf32, #tpu.memory_space<vmem>>, vector<1x64xf32>
    %22 = vector.broadcast %21 : vector<1x64xf32> to vector<64x64xf32>
    %23 = arith.addf %20, %22 : vector<64x64xf32>
    %cst_30 = arith.constant 0.000000e+00 : f32
    %24 = vector.broadcast %cst_30 : f32 to vector<64x64xf32>
    %25 = arith.maximumf %23, %24 : vector<64x64xf32>
    %26 = vector.shape_cast %25 : vector<64x64xf32> to vector<8x8x64xf32>
    %c2_31 = arith.constant 2 : index
    %c2_32 = arith.constant 2 : index
    %c16 = arith.constant 16 : index
    %27 = vector.load %arg9[%c2_31, %c2_32, %c16] : memref<12x12x96xf32, #tpu.memory_space<vmem>>, vector<8x8x64xf32>
    tpu.vector_store %arg9[%c2_31, %c2_32, %c16], %26 {strides = array<i32>} : memref<12x12x96xf32, #tpu.memory_space<vmem>>, vector<8x8x64xf32>,
    %cst_33 = arith.constant 0.000000e+00 : f32
    %28 = vector.broadcast %cst_33 : f32 to vector<64x256xf32>
    %c1 = arith.constant 1 : index
    %c1_34 = arith.constant 1 : index
    %c0_35 = arith.constant 0 : index
    %29 = vector.load %arg9[%c1, %c1_34, %c0_35] : memref<12x12x96xf32, #tpu.memory_space<vmem>>, vector<8x8x96xf32>
    %30 = vector.shape_cast %29 : vector<8x8x96xf32> to vector<64x96xf32>
    %31 = arith.truncf %30 : vector<64x96xf32> to vector<64x96xbf16>
    %c0_36 = arith.constant 0 : index
    %c0_37 = arith.constant 0 : index
    %c0_38 = arith.constant 0 : index
    %c0_39 = arith.constant 0 : index
    %c0_40 = arith.constant 0 : index
    %32 = vector.load %arg5[%c0_36, %c0_37, %c0_38, %c0_39, %c0_40] : memref<2x3x3x96x256xbf16, #tpu.memory_space<vmem>>, vector<1x1x1x96x256xbf16>
    %33 = vector.shape_cast %32 : vector<1x1x1x96x256xbf16> to vector<96x256xbf16>
    %cst_41 = arith.constant dense<0.000000e+00> : vector<64x256xf32>
    %34 = tpu.matmul %31, %33, %cst_41 {dimension_numbers = #tpu.dot_dimension_numbers<[1], [0], [0], [1], [0, 0, 1, 1], [], []>} : vector<64x96xbf16>, vector<96x256xbf16>, vector<64x256xf32> -> vector<64x256xf32>
    %35 = arith.addf %28, %34 : vector<64x256xf32>
    %c1_42 = arith.constant 1 : index
    %c2_43 = arith.constant 2 : index
    %c0_44 = arith.constant 0 : index
    %36 = vector.load %arg9[%c1_42, %c2_43, %c0_44] : memref<12x12x96xf32, #tpu.memory_space<vmem>>, vector<8x8x96xf32>
    %37 = vector.shape_cast %36 : vector<8x8x96xf32> to vector<64x96xf32>
    %38 = arith.truncf %37 : vector<64x96xf32> to vector<64x96xbf16>
    %c0_45 = arith.constant 0 : index
    %c0_46 = arith.constant 0 : index
    %c1_47 = arith.constant 1 : index
    %c0_48 = arith.constant 0 : index
    %c0_49 = arith.constant 0 : index
    %39 = vector.load %arg5[%c0_45, %c0_46, %c1_47, %c0_48, %c0_49] : memref<2x3x3x96x256xbf16, #tpu.memory_space<vmem>>, vector<1x1x1x96x256xbf16>
    %40 = vector.shape_cast %39 : vector<1x1x1x96x256xbf16> to vector<96x256xbf16>
    %cst_50 = arith.constant dense<0.000000e+00> : vector<64x256xf32>
    %41 = tpu.matmul %38, %40, %cst_50 {dimension_numbers = #tpu.dot_dimension_numbers<[1], [0], [0], [1], [0, 0, 1, 1], [], []>} : vector<64x96xbf16>, vector<96x256xbf16>, vector<64x256xf32> -> vector<64x256xf32>
    %42 = arith.addf %35, %41 : vector<64x256xf32>
    %c1_51 = arith.constant 1 : index
    %c3 = arith.constant 3 : index
    %c0_52 = arith.constant 0 : index
    %43 = vector.load %arg9[%c1_51, %c3, %c0_52] : memref<12x12x96xf32, #tpu.memory_space<vmem>>, vector<8x8x96xf32>
    %44 = vector.shape_cast %43 : vector<8x8x96xf32> to vector<64x96xf32>
    %45 = arith.truncf %44 : vector<64x96xf32> to vector<64x96xbf16>
    %c0_53 = arith.constant 0 : index
    %c0_54 = arith.constant 0 : index
    %c2_55 = arith.constant 2 : index
    %c0_56 = arith.constant 0 : index
    %c0_57 = arith.constant 0 : index
    %46 = vector.load %arg5[%c0_53, %c0_54, %c2_55, %c0_56, %c0_57] : memref<2x3x3x96x256xbf16, #tpu.memory_space<vmem>>, vector<1x1x1x96x256xbf16>
    %47 = vector.shape_cast %46 : vector<1x1x1x96x256xbf16> to vector<96x256xbf16>
    %cst_58 = arith.constant dense<0.000000e+00> : vector<64x256xf32>
    %48 = tpu.matmul %45, %47, %cst_58 {dimension_numbers = #tpu.dot_dimension_numbers<[1], [0], [0], [1], [0, 0, 1, 1], [], []>} : vector<64x96xbf16>, vector<96x256xbf16>, vector<64x256xf32> -> vector<64x256xf32>
    %49 = arith.addf %42, %48 : vector<64x256xf32>
    %c2_59 = arith.constant 2 : index
    %c1_60 = arith.constant 1 : index
    %c0_61 = arith.constant 0 : index
    %50 = vector.load %arg9[%c2_59, %c1_60, %c0_61] : memref<12x12x96xf32, #tpu.memory_space<vmem>>, vector<8x8x96xf32>
    %51 = vector.shape_cast %50 : vector<8x8x96xf32> to vector<64x96xf32>
    %52 = arith.truncf %51 : vector<64x96xf32> to vector<64x96xbf16>
    %c0_62 = arith.constant 0 : index
    %c1_63 = arith.constant 1 : index
    %c0_64 = arith.constant 0 : index
    %c0_65 = arith.constant 0 : index
    %c0_66 = arith.constant 0 : index
    %53 = vector.load %arg5[%c0_62, %c1_63, %c0_64, %c0_65, %c0_66] : memref<2x3x3x96x256xbf16, #tpu.memory_space<vmem>>, vector<1x1x1x96x256xbf16>
    %54 = vector.shape_cast %53 : vector<1x1x1x96x256xbf16> to vector<96x256xbf16>
    %cst_67 = arith.constant dense<0.000000e+00> : vector<64x256xf32>
    %55 = tpu.matmul %52, %54, %cst_67 {dimension_numbers = #tpu.dot_dimension_numbers<[1], [0], [0], [1], [0, 0, 1, 1], [], []>} : vector<64x96xbf16>, vector<96x256xbf16>, vector<64x256xf32> -> vector<64x256xf32>
    %56 = arith.addf %49, %55 : vector<64x256xf32>
    %c2_68 = arith.constant 2 : index
    %c2_69 = arith.constant 2 : index
    %c0_70 = arith.constant 0 : index
    %57 = vector.load %arg9[%c2_68, %c2_69, %c0_70] : memref<12x12x96xf32, #tpu.memory_space<vmem>>, vector<8x8x96xf32>
    %58 = vector.shape_cast %57 : vector<8x8x96xf32> to vector<64x96xf32>
    %59 = arith.truncf %58 : vector<64x96xf32> to vector<64x96xbf16>
    %c0_71 = arith.constant 0 : index
    %c1_72 = arith.constant 1 : index
    %c1_73 = arith.constant 1 : index
    %c0_74 = arith.constant 0 : index
    %c0_75 = arith.constant 0 : index
    %60 = vector.load %arg5[%c0_71, %c1_72, %c1_73, %c0_74, %c0_75] : memref<2x3x3x96x256xbf16, #tpu.memory_space<vmem>>, vector<1x1x1x96x256xbf16>
    %61 = vector.shape_cast %60 : vector<1x1x1x96x256xbf16> to vector<96x256xbf16>
    %cst_76 = arith.constant dense<0.000000e+00> : vector<64x256xf32>
    %62 = tpu.matmul %59, %61, %cst_76 {dimension_numbers = #tpu.dot_dimension_numbers<[1], [0], [0], [1], [0, 0, 1, 1], [], []>} : vector<64x96xbf16>, vector<96x256xbf16>, vector<64x256xf32> -> vector<64x256xf32>
    %63 = arith.addf %56, %62 : vector<64x256xf32>
    %c2_77 = arith.constant 2 : index
    %c3_78 = arith.constant 3 : index
    %c0_79 = arith.constant 0 : index
    %64 = vector.load %arg9[%c2_77, %c3_78, %c0_79] : memref<12x12x96xf32, #tpu.memory_space<vmem>>, vector<8x8x96xf32>
    %65 = vector.shape_cast %64 : vector<8x8x96xf32> to vector<64x96xf32>
    %66 = arith.truncf %65 : vector<64x96xf32> to vector<64x96xbf16>
    %c0_80 = arith.constant 0 : index
    %c1_81 = arith.constant 1 : index
    %c2_82 = arith.constant 2 : index
    %c0_83 = arith.constant 0 : index
    %c0_84 = arith.constant 0 : index
    %67 = vector.load %arg5[%c0_80, %c1_81, %c2_82, %c0_83, %c0_84] : memref<2x3x3x96x256xbf16, #tpu.memory_space<vmem>>, vector<1x1x1x96x256xbf16>
    %68 = vector.shape_cast %67 : vector<1x1x1x96x256xbf16> to vector<96x256xbf16>
    %cst_85 = arith.constant dense<0.000000e+00> : vector<64x256xf32>
    %69 = tpu.matmul %66, %68, %cst_85 {dimension_numbers = #tpu.dot_dimension_numbers<[1], [0], [0], [1], [0, 0, 1, 1], [], []>} : vector<64x96xbf16>, vector<96x256xbf16>, vector<64x256xf32> -> vector<64x256xf32>
    %70 = arith.addf %63, %69 : vector<64x256xf32>
    %c3_86 = arith.constant 3 : index
    %c1_87 = arith.constant 1 : index
    %c0_88 = arith.constant 0 : index
    %71 = vector.load %arg9[%c3_86, %c1_87, %c0_88] : memref<12x12x96xf32, #tpu.memory_space<vmem>>, vector<8x8x96xf32>
    %72 = vector.shape_cast %71 : vector<8x8x96xf32> to vector<64x96xf32>
    %73 = arith.truncf %72 : vector<64x96xf32> to vector<64x96xbf16>
    %c0_89 = arith.constant 0 : index
    %c2_90 = arith.constant 2 : index
    %c0_91 = arith.constant 0 : index
    %c0_92 = arith.constant 0 : index
    %c0_93 = arith.constant 0 : index
    %74 = vector.load %arg5[%c0_89, %c2_90, %c0_91, %c0_92, %c0_93] : memref<2x3x3x96x256xbf16, #tpu.memory_space<vmem>>, vector<1x1x1x96x256xbf16>
    %75 = vector.shape_cast %74 : vector<1x1x1x96x256xbf16> to vector<96x256xbf16>
    %cst_94 = arith.constant dense<0.000000e+00> : vector<64x256xf32>
    %76 = tpu.matmul %73, %75, %cst_94 {dimension_numbers = #tpu.dot_dimension_numbers<[1], [0], [0], [1], [0, 0, 1, 1], [], []>} : vector<64x96xbf16>, vector<96x256xbf16>, vector<64x256xf32> -> vector<64x256xf32>
    %77 = arith.addf %70, %76 : vector<64x256xf32>
    %c3_95 = arith.constant 3 : index
    %c2_96 = arith.constant 2 : index
    %c0_97 = arith.constant 0 : index
    %78 = vector.load %arg9[%c3_95, %c2_96, %c0_97] : memref<12x12x96xf32, #tpu.memory_space<vmem>>, vector<8x8x96xf32>
    %79 = vector.shape_cast %78 : vector<8x8x96xf32> to vector<64x96xf32>
    %80 = arith.truncf %79 : vector<64x96xf32> to vector<64x96xbf16>
    %c0_98 = arith.constant 0 : index
    %c2_99 = arith.constant 2 : index
    %c1_100 = arith.constant 1 : index
    %c0_101 = arith.constant 0 : index
    %c0_102 = arith.constant 0 : index
    %81 = vector.load %arg5[%c0_98, %c2_99, %c1_100, %c0_101, %c0_102] : memref<2x3x3x96x256xbf16, #tpu.memory_space<vmem>>, vector<1x1x1x96x256xbf16>
    %82 = vector.shape_cast %81 : vector<1x1x1x96x256xbf16> to vector<96x256xbf16>
    %cst_103 = arith.constant dense<0.000000e+00> : vector<64x256xf32>
    %83 = tpu.matmul %80, %82, %cst_103 {dimension_numbers = #tpu.dot_dimension_numbers<[1], [0], [0], [1], [0, 0, 1, 1], [], []>} : vector<64x96xbf16>, vector<96x256xbf16>, vector<64x256xf32> -> vector<64x256xf32>
    %84 = arith.addf %77, %83 : vector<64x256xf32>
    %c3_104 = arith.constant 3 : index
    %c3_105 = arith.constant 3 : index
    %c0_106 = arith.constant 0 : index
    %85 = vector.load %arg9[%c3_104, %c3_105, %c0_106] : memref<12x12x96xf32, #tpu.memory_space<vmem>>, vector<8x8x96xf32>
    %86 = vector.shape_cast %85 : vector<8x8x96xf32> to vector<64x96xf32>
    %87 = arith.truncf %86 : vector<64x96xf32> to vector<64x96xbf16>
    %c0_107 = arith.constant 0 : index
    %c2_108 = arith.constant 2 : index
    %c2_109 = arith.constant 2 : index
    %c0_110 = arith.constant 0 : index
    %c0_111 = arith.constant 0 : index
    %88 = vector.load %arg5[%c0_107, %c2_108, %c2_109, %c0_110, %c0_111] : memref<2x3x3x96x256xbf16, #tpu.memory_space<vmem>>, vector<1x1x1x96x256xbf16>
    %89 = vector.shape_cast %88 : vector<1x1x1x96x256xbf16> to vector<96x256xbf16>
    %cst_112 = arith.constant dense<0.000000e+00> : vector<64x256xf32>
    %90 = tpu.matmul %87, %89, %cst_112 {dimension_numbers = #tpu.dot_dimension_numbers<[1], [0], [0], [1], [0, 0, 1, 1], [], []>} : vector<64x96xbf16>, vector<96x256xbf16>, vector<64x256xf32> -> vector<64x256xf32>
    %91 = arith.addf %84, %90 : vector<64x256xf32>
    %cst_113 = arith.constant 0.000000e+00 : f32
    %92 = vector.broadcast %cst_113 : f32 to vector<64x256xf32>
    %c0_114 = arith.constant 0 : index
    %c0_115 = arith.constant 0 : index
    %c0_116 = arith.constant 0 : index
    %93 = vector.load %arg9[%c0_114, %c0_115, %c0_116] : memref<12x12x96xf32, #tpu.memory_space<vmem>>, vector<8x8x96xf32>
    %94 = vector.shape_cast %93 : vector<8x8x96xf32> to vector<64x96xf32>
    %95 = arith.truncf %94 : vector<64x96xf32> to vector<64x96xbf16>
    %c1_117 = arith.constant 1 : index
    %c0_118 = arith.constant 0 : index
    %c0_119 = arith.constant 0 : index
    %c0_120 = arith.constant 0 : index
    %c0_121 = arith.constant 0 : index
    %96 = vector.load %arg5[%c1_117, %c0_118, %c0_119, %c0_120, %c0_121] : memref<2x3x3x96x256xbf16, #tpu.memory_space<vmem>>, vector<1x1x1x96x256xbf16>
    %97 = vector.shape_cast %96 : vector<1x1x1x96x256xbf16> to vector<96x256xbf16>
    %cst_122 = arith.constant dense<0.000000e+00> : vector<64x256xf32>
    %98 = tpu.matmul %95, %97, %cst_122 {dimension_numbers = #tpu.dot_dimension_numbers<[1], [0], [0], [1], [0, 0, 1, 1], [], []>} : vector<64x96xbf16>, vector<96x256xbf16>, vector<64x256xf32> -> vector<64x256xf32>
    %99 = arith.addf %92, %98 : vector<64x256xf32>
    %c0_123 = arith.constant 0 : index
    %c2_124 = arith.constant 2 : index
    %c0_125 = arith.constant 0 : index
    %100 = vector.load %arg9[%c0_123, %c2_124, %c0_125] : memref<12x12x96xf32, #tpu.memory_space<vmem>>, vector<8x8x96xf32>
    %101 = vector.shape_cast %100 : vector<8x8x96xf32> to vector<64x96xf32>
    %102 = arith.truncf %101 : vector<64x96xf32> to vector<64x96xbf16>
    %c1_126 = arith.constant 1 : index
    %c0_127 = arith.constant 0 : index
    %c1_128 = arith.constant 1 : index
    %c0_129 = arith.constant 0 : index
    %c0_130 = arith.constant 0 : index
    %103 = vector.load %arg5[%c1_126, %c0_127, %c1_128, %c0_129, %c0_130] : memref<2x3x3x96x256xbf16, #tpu.memory_space<vmem>>, vector<1x1x1x96x256xbf16>
    %104 = vector.shape_cast %103 : vector<1x1x1x96x256xbf16> to vector<96x256xbf16>
    %cst_131 = arith.constant dense<0.000000e+00> : vector<64x256xf32>
    %105 = tpu.matmul %102, %104, %cst_131 {dimension_numbers = #tpu.dot_dimension_numbers<[1], [0], [0], [1], [0, 0, 1, 1], [], []>} : vector<64x96xbf16>, vector<96x256xbf16>, vector<64x256xf32> -> vector<64x256xf32>
    %106 = arith.addf %99, %105 : vector<64x256xf32>
    %c0_132 = arith.constant 0 : index
    %c4 = arith.constant 4 : index
    %c0_133 = arith.constant 0 : index
    %107 = vector.load %arg9[%c0_132, %c4, %c0_133] : memref<12x12x96xf32, #tpu.memory_space<vmem>>, vector<8x8x96xf32>
    %108 = vector.shape_cast %107 : vector<8x8x96xf32> to vector<64x96xf32>
    %109 = arith.truncf %108 : vector<64x96xf32> to vector<64x96xbf16>
    %c1_134 = arith.constant 1 : index
    %c0_135 = arith.constant 0 : index
    %c2_136 = arith.constant 2 : index
    %c0_137 = arith.constant 0 : index
    %c0_138 = arith.constant 0 : index
    %110 = vector.load %arg5[%c1_134, %c0_135, %c2_136, %c0_137, %c0_138] : memref<2x3x3x96x256xbf16, #tpu.memory_space<vmem>>, vector<1x1x1x96x256xbf16>
    %111 = vector.shape_cast %110 : vector<1x1x1x96x256xbf16> to vector<96x256xbf16>
    %cst_139 = arith.constant dense<0.000000e+00> : vector<64x256xf32>
    %112 = tpu.matmul %109, %111, %cst_139 {dimension_numbers = #tpu.dot_dimension_numbers<[1], [0], [0], [1], [0, 0, 1, 1], [], []>} : vector<64x96xbf16>, vector<96x256xbf16>, vector<64x256xf32> -> vector<64x256xf32>
    %113 = arith.addf %106, %112 : vector<64x256xf32>
    %c2_140 = arith.constant 2 : index
    %c0_141 = arith.constant 0 : index
    %c0_142 = arith.constant 0 : index
    %114 = vector.load %arg9[%c2_140, %c0_141, %c0_142] : memref<12x12x96xf32, #tpu.memory_space<vmem>>, vector<8x8x96xf32>
    %115 = vector.shape_cast %114 : vector<8x8x96xf32> to vector<64x96xf32>
    %116 = arith.truncf %115 : vector<64x96xf32> to vector<64x96xbf16>
    %c1_143 = arith.constant 1 : index
    %c1_144 = arith.constant 1 : index
    %c0_145 = arith.constant 0 : index
    %c0_146 = arith.constant 0 : index
    %c0_147 = arith.constant 0 : index
    %117 = vector.load %arg5[%c1_143, %c1_144, %c0_145, %c0_146, %c0_147] : memref<2x3x3x96x256xbf16, #tpu.memory_space<vmem>>, vector<1x1x1x96x256xbf16>
    %118 = vector.shape_cast %117 : vector<1x1x1x96x256xbf16> to vector<96x256xbf16>
    %cst_148 = arith.constant dense<0.000000e+00> : vector<64x256xf32>
    %119 = tpu.matmul %116, %118, %cst_148 {dimension_numbers = #tpu.dot_dimension_numbers<[1], [0], [0], [1], [0, 0, 1, 1], [], []>} : vector<64x96xbf16>, vector<96x256xbf16>, vector<64x256xf32> -> vector<64x256xf32>
    %120 = arith.addf %113, %119 : vector<64x256xf32>
    %c2_149 = arith.constant 2 : index
    %c2_150 = arith.constant 2 : index
    %c0_151 = arith.constant 0 : index
    %121 = vector.load %arg9[%c2_149, %c2_150, %c0_151] : memref<12x12x96xf32, #tpu.memory_space<vmem>>, vector<8x8x96xf32>
    %122 = vector.shape_cast %121 : vector<8x8x96xf32> to vector<64x96xf32>
    %123 = arith.truncf %122 : vector<64x96xf32> to vector<64x96xbf16>
    %c1_152 = arith.constant 1 : index
    %c1_153 = arith.constant 1 : index
    %c1_154 = arith.constant 1 : index
    %c0_155 = arith.constant 0 : index
    %c0_156 = arith.constant 0 : index
    %124 = vector.load %arg5[%c1_152, %c1_153, %c1_154, %c0_155, %c0_156] : memref<2x3x3x96x256xbf16, #tpu.memory_space<vmem>>, vector<1x1x1x96x256xbf16>
    %125 = vector.shape_cast %124 : vector<1x1x1x96x256xbf16> to vector<96x256xbf16>
    %cst_157 = arith.constant dense<0.000000e+00> : vector<64x256xf32>
    %126 = tpu.matmul %123, %125, %cst_157 {dimension_numbers = #tpu.dot_dimension_numbers<[1], [0], [0], [1], [0, 0, 1, 1], [], []>} : vector<64x96xbf16>, vector<96x256xbf16>, vector<64x256xf32> -> vector<64x256xf32>
    %127 = arith.addf %120, %126 : vector<64x256xf32>
    %c2_158 = arith.constant 2 : index
    %c4_159 = arith.constant 4 : index
    %c0_160 = arith.constant 0 : index
    %128 = vector.load %arg9[%c2_158, %c4_159, %c0_160] : memref<12x12x96xf32, #tpu.memory_space<vmem>>, vector<8x8x96xf32>
    %129 = vector.shape_cast %128 : vector<8x8x96xf32> to vector<64x96xf32>
    %130 = arith.truncf %129 : vector<64x96xf32> to vector<64x96xbf16>
    %c1_161 = arith.constant 1 : index
    %c1_162 = arith.constant 1 : index
    %c2_163 = arith.constant 2 : index
    %c0_164 = arith.constant 0 : index
    %c0_165 = arith.constant 0 : index
    %131 = vector.load %arg5[%c1_161, %c1_162, %c2_163, %c0_164, %c0_165] : memref<2x3x3x96x256xbf16, #tpu.memory_space<vmem>>, vector<1x1x1x96x256xbf16>
    %132 = vector.shape_cast %131 : vector<1x1x1x96x256xbf16> to vector<96x256xbf16>
    %cst_166 = arith.constant dense<0.000000e+00> : vector<64x256xf32>
    %133 = tpu.matmul %130, %132, %cst_166 {dimension_numbers = #tpu.dot_dimension_numbers<[1], [0], [0], [1], [0, 0, 1, 1], [], []>} : vector<64x96xbf16>, vector<96x256xbf16>, vector<64x256xf32> -> vector<64x256xf32>
    %134 = arith.addf %127, %133 : vector<64x256xf32>
    %c4_167 = arith.constant 4 : index
    %c0_168 = arith.constant 0 : index
    %c0_169 = arith.constant 0 : index
    %135 = vector.load %arg9[%c4_167, %c0_168, %c0_169] : memref<12x12x96xf32, #tpu.memory_space<vmem>>, vector<8x8x96xf32>
    %136 = vector.shape_cast %135 : vector<8x8x96xf32> to vector<64x96xf32>
    %137 = arith.truncf %136 : vector<64x96xf32> to vector<64x96xbf16>
    %c1_170 = arith.constant 1 : index
    %c2_171 = arith.constant 2 : index
    %c0_172 = arith.constant 0 : index
    %c0_173 = arith.constant 0 : index
    %c0_174 = arith.constant 0 : index
    %138 = vector.load %arg5[%c1_170, %c2_171, %c0_172, %c0_173, %c0_174] : memref<2x3x3x96x256xbf16, #tpu.memory_space<vmem>>, vector<1x1x1x96x256xbf16>
    %139 = vector.shape_cast %138 : vector<1x1x1x96x256xbf16> to vector<96x256xbf16>
    %cst_175 = arith.constant dense<0.000000e+00> : vector<64x256xf32>
    %140 = tpu.matmul %137, %139, %cst_175 {dimension_numbers = #tpu.dot_dimension_numbers<[1], [0], [0], [1], [0, 0, 1, 1], [], []>} : vector<64x96xbf16>, vector<96x256xbf16>, vector<64x256xf32> -> vector<64x256xf32>
    %141 = arith.addf %134, %140 : vector<64x256xf32>
    %c4_176 = arith.constant 4 : index
    %c2_177 = arith.constant 2 : index
    %c0_178 = arith.constant 0 : index
    %142 = vector.load %arg9[%c4_176, %c2_177, %c0_178] : memref<12x12x96xf32, #tpu.memory_space<vmem>>, vector<8x8x96xf32>
    %143 = vector.shape_cast %142 : vector<8x8x96xf32> to vector<64x96xf32>
    %144 = arith.truncf %143 : vector<64x96xf32> to vector<64x96xbf16>
    %c1_179 = arith.constant 1 : index
    %c2_180 = arith.constant 2 : index
    %c1_181 = arith.constant 1 : index
    %c0_182 = arith.constant 0 : index
    %c0_183 = arith.constant 0 : index
    %145 = vector.load %arg5[%c1_179, %c2_180, %c1_181, %c0_182, %c0_183] : memref<2x3x3x96x256xbf16, #tpu.memory_space<vmem>>, vector<1x1x1x96x256xbf16>
    %146 = vector.shape_cast %145 : vector<1x1x1x96x256xbf16> to vector<96x256xbf16>
    %cst_184 = arith.constant dense<0.000000e+00> : vector<64x256xf32>
    %147 = tpu.matmul %144, %146, %cst_184 {dimension_numbers = #tpu.dot_dimension_numbers<[1], [0], [0], [1], [0, 0, 1, 1], [], []>} : vector<64x96xbf16>, vector<96x256xbf16>, vector<64x256xf32> -> vector<64x256xf32>
    %148 = arith.addf %141, %147 : vector<64x256xf32>
    %c4_185 = arith.constant 4 : index
    %c4_186 = arith.constant 4 : index
    %c0_187 = arith.constant 0 : index
    %149 = vector.load %arg9[%c4_185, %c4_186, %c0_187] : memref<12x12x96xf32, #tpu.memory_space<vmem>>, vector<8x8x96xf32>
    %150 = vector.shape_cast %149 : vector<8x8x96xf32> to vector<64x96xf32>
    %151 = arith.truncf %150 : vector<64x96xf32> to vector<64x96xbf16>
    %c1_188 = arith.constant 1 : index
    %c2_189 = arith.constant 2 : index
    %c2_190 = arith.constant 2 : index
    %c0_191 = arith.constant 0 : index
    %c0_192 = arith.constant 0 : index
    %152 = vector.load %arg5[%c1_188, %c2_189, %c2_190, %c0_191, %c0_192] : memref<2x3x3x96x256xbf16, #tpu.memory_space<vmem>>, vector<1x1x1x96x256xbf16>
    %153 = vector.shape_cast %152 : vector<1x1x1x96x256xbf16> to vector<96x256xbf16>
    %cst_193 = arith.constant dense<0.000000e+00> : vector<64x256xf32>
    %154 = tpu.matmul %151, %153, %cst_193 {dimension_numbers = #tpu.dot_dimension_numbers<[1], [0], [0], [1], [0, 0, 1, 1], [], []>} : vector<64x96xbf16>, vector<96x256xbf16>, vector<64x256xf32> -> vector<64x256xf32>
    %155 = arith.addf %148, %154 : vector<64x256xf32>
    %156 = arith.addf %91, %155 : vector<64x256xf32>
    %c0_194 = arith.constant 0 : index
    %c0_195 = arith.constant 0 : index
    %157 = vector.load %arg6[%c0_194, %c0_195] : memref<1x256xf32, #tpu.memory_space<vmem>>, vector<1x256xf32>
    %158 = vector.broadcast %157 : vector<1x256xf32> to vector<64x256xf32>
    %159 = arith.mulf %156, %158 : vector<64x256xf32>
    %c0_196 = arith.constant 0 : index
    %c0_197 = arith.constant 0 : index
    %160 = vector.load %arg7[%c0_196, %c0_197] : memref<1x256xf32, #tpu.memory_space<vmem>>, vector<1x256xf32>
    %161 = vector.broadcast %160 : vector<1x256xf32> to vector<64x256xf32>
    %162 = arith.addf %159, %161 : vector<64x256xf32>
    %163 = arith.addf %162, %14 : vector<64x256xf32>
    %cst_198 = arith.constant 0.000000e+00 : f32
    %164 = vector.broadcast %cst_198 : f32 to vector<64x256xf32>
    %165 = arith.maximumf %163, %164 : vector<64x256xf32>
    %166 = vector.shape_cast %165 : vector<64x256xf32> to vector<8x8x256xf32>
    %c0_199 = arith.constant 0 : index
    %c0_200 = arith.constant 0 : index
    %c0_201 = arith.constant 0 : index
    %c0_202 = arith.constant 0 : index
    %167 = vector.load %arg8[%c0_199, %c0_200, %c0_201, %c0_202] : memref<1x8x8x256xf32, #tpu.memory_space<vmem>>, vector<1x8x8x256xf32>
    %168 = vector.shape_cast %167 : vector<1x8x8x256xf32> to vector<8x8x256xf32>
    %169 = vector.shape_cast %166 : vector<8x8x256xf32> to vector<1x8x8x256xf32>
    tpu.vector_store %arg8[%c0_199, %c0_200, %c0_201, %c0_202], %169 {strides = array<i32>} : memref<1x8x8x256xf32, #tpu.memory_space<vmem>>, vector<1x8x8x256xf32>,
    return
  }
  func.func @transform_0(%arg0: i32) -> (i32, i32, i32, i32) {
    %c0_i32 = arith.constant 0 : i32
    %c0_i32_0 = arith.constant 0 : i32
    %c0_i32_1 = arith.constant 0 : i32
    %c0_i32_2 = arith.constant 0 : i32
    return %arg0, %c0_i32, %c0_i32_0, %c0_i32_1 : i32, i32, i32, i32
  }
  func.func @transform_1(%arg0: i32) -> (i32, i32) {
    %c0_i32 = arith.constant 0 : i32
    %c0_i32_0 = arith.constant 0 : i32
    %c0_i32_1 = arith.constant 0 : i32
    return %c0_i32, %c0_i32_0 : i32, i32
  }
  func.func @transform_2(%arg0: i32) -> (i32, i32) {
    %c0_i32 = arith.constant 0 : i32
    %c0_i32_0 = arith.constant 0 : i32
    %c0_i32_1 = arith.constant 0 : i32
    return %c0_i32, %c0_i32_0 : i32, i32
  }
  func.func @transform_3(%arg0: i32) -> (i32, i32) {
    %c0_i32 = arith.constant 0 : i32
    %c0_i32_0 = arith.constant 0 : i32
    %c0_i32_1 = arith.constant 0 : i32
    return %c0_i32, %c0_i32_0 : i32, i32
  }
  func.func @transform_4(%arg0: i32) -> (i32, i32, i32, i32, i32) {
    %c0_i32 = arith.constant 0 : i32
    %c0_i32_0 = arith.constant 0 : i32
    %c0_i32_1 = arith.constant 0 : i32
    %c0_i32_2 = arith.constant 0 : i32
    %c0_i32_3 = arith.constant 0 : i32
    %c0_i32_4 = arith.constant 0 : i32
    return %c0_i32, %c0_i32_0, %c0_i32_1, %c0_i32_2, %c0_i32_3 : i32, i32, i32, i32, i32
  }
  func.func @transform_5(%arg0: i32) -> (i32, i32) {
    %c0_i32 = arith.constant 0 : i32
    %c0_i32_0 = arith.constant 0 : i32
    %c0_i32_1 = arith.constant 0 : i32
    return %c0_i32, %c0_i32_0 : i32, i32
  }
  func.func @transform_6(%arg0: i32) -> (i32, i32) {
    %c0_i32 = arith.constant 0 : i32
    %c0_i32_0 = arith.constant 0 : i32
    %c0_i32_1 = arith.constant 0 : i32
    return %c0_i32, %c0_i32_0 : i32, i32
  }
  func.func @transform_7(%arg0: i32) -> (i32, i32, i32, i32) {
    %c0_i32 = arith.constant 0 : i32
    %c0_i32_0 = arith.constant 0 : i32
    %c0_i32_1 = arith.constant 0 : i32
    %c0_i32_2 = arith.constant 0 : i32
    return %arg0, %c0_i32, %c0_i32_0, %c0_i32_1 : i32, i32, i32, i32
  }
}

</mosaic_0001>

<llo_original>
// kernel: tpu_custom_call.1
$region0: #{tpu_custom_call.1}
  #allocation0 [shape = 'u32[]', space=smem, size = 0x4, offset = 0x4, fixed_abs, tag = 'smem constant byte address 0x4 - core index']
  #allocation1 [shape = 'u32[144,128]{1,0:T(1,128)}', space=vmem, size = 0x12000, scoped, tag = 'internal scratch']
  #allocation2 [shape = 'f32[12,12,96]{2,1,0:T(8,128)}', space=vmem, size = 0x18000, scoped, tag = 'scratch operand']
  %s0 = inlined_call_operand.hbm [shape: f32[2,8,8,256], index: 0, kind: input, shape index: {}]
  %s1 = inlined_call_operand.vmem [shape: bf16[256,64], index: 1, kind: input, shape index: {}]
  %s2 = inlined_call_operand.vmem [shape: f32[1,64], index: 2, kind: input, shape index: {}]
  %s3 = inlined_call_operand.vmem [shape: f32[1,64], index: 3, kind: input, shape index: {}]
  %s4 = inlined_call_operand.hbm [shape: bf16[2,3,3,96,256], index: 4, kind: input, shape index: {}]
  %s5 = inlined_call_operand.vmem [shape: f32[1,256], index: 5, kind: input, shape index: {}]
  %s6 = inlined_call_operand.vmem [shape: f32[1,256], index: 6, kind: input, shape index: {}]
  %s7 = inlined_call_operand.hbm [shape: f32[2,8,8,256], index: 7, kind: output, shape index: {}]
  %s8 = sld [smem:[#allocation0]]
  $region69: #{tpu_custom_call.1} parent=0
    _
  %s10 = ssub.s32 1, %s8
  %s11 = scalar_select 0, %s10, %s8
  $region1: #{tpu_custom_call.1} parent=0
    #allocation3 [shape = 'u8[131072]{0}', space=vmem, size = 0x20000, scoped, tag = 'input window, operand 0']
    #allocation4 [shape = 's32[2]{0}', space=sflag, size = 0x8, scoped, tag = 'scoped memory for tpu_custom_call.1']
    #allocation5 [shape = 's32[2]{0}', space=sflag, size = 0x8, scoped, tag = 'scoped memory for tpu_custom_call.1']
    #allocation6 [shape = 'u8[884736]{0}', space=vmem, size = 0xd8000, scoped, tag = 'input window, operand 4, single buffered']
    #allocation7 [shape = 's32[1]{0}', space=sflag, size = 0x4, scoped, tag = 'scoped memory for tpu_custom_call.1']
    #allocation8 [shape = 'u8[131072]{0}', space=vmem, size = 0x20000, scoped, tag = 'output window, operand 0']
    %12 = vsyncpa [#allocation4], 0
    %s13 = scalar_lea.sflag [#allocation4], 1
    %14 = vsyncpa %s13, 0
    %15 = vsyncpa [#allocation7], 0
    %16 = vsyncpa [#allocation5], 0
    %s17 = scalar_lea.sflag [#allocation5], 1
    %18 = vsyncpa %s17, 0
    loop: start=0, step=1, limit=4
    $region2: #{tpu_custom_call.1} parent=1 // loop_pre_header
      _
    $region3: #{tpu_custom_call.1} parent=1 // loop_header
      %s20 = sphi 0, %s24
      %p21 = scmp.ge.s32.totalorder %s20, 4
      %s30 = sphi 0, %s32
      %s33 = sphi 0, %s30
      %s34 = sphi 0, %s33
      %s50 = sphi 0, %s34
      %s54 = sphi 0, %s54
      %s56 = sphi 0, %s54
      %s57 = sphi 0, %s56
      %s71 = sphi 0, %s57
      %s75 = sphi 0, %s75
      %s77 = sphi 0, %s75
      %s78 = sphi 0, %s77
      %s92 = sphi 0, %s78
      %s96 = sphi 0, %s96
      %s98 = sphi 0, %s96
      %s99 = sphi 0, %s98
      %s113 = sphi 0, %s99
      %s117 = sphi 0, %s117
      %s119 = sphi 0, %s117
      %s120 = sphi 0, %s119
      %s134 = sphi 0, %s120
      %s138 = sphi 0, %s138
      %s140 = sphi 0, %s138
      %s141 = sphi 0, %s140
      %s155 = sphi 0, %s141
      %s159 = sphi 0, %s159
      %s161 = sphi 0, %s159
      %s162 = sphi 0, %s161
      %s176 = sphi 0, %s162
      %s182 = sphi 0, %s184
      %s185 = sphi 0, %s182
      %s186 = sphi 0, %s185
      %s202 = sphi 0, %s186
    $region4: #{tpu_custom_call.1} parent=1 // loop_header_branch
      %23 = sbr.rel (%p21) target = $region8
    $region5: #{tpu_custom_call.1} parent=1 // loop_body
      %s25 = ssub.s32 %s20, 1
      %s26 = ssub.s32 %s20, 2
      %s27 = sadd.s32 %s20, 1
      %s28 = ssub.s32 %s20, %s27
      %p29 = scmp.eq.s32.totalorder %s28, 0
      %s31 = sadd.s32 %s30, 1
      %s32 = scalar_select %p29, %s30, %s31
      %p35 = pneg %p29
      %p36 = scmp.eq.s32.totalorder %s20, 1
      %p37 = por %p35, %p36
      %p38 = scmp.ne.s32.totalorder %s30, %s33
      %p39 = scmp.eq.s32.totalorder %s20, 0
      %p40 = por %p38, %p39
      %p41 = scmp.ne.s32.totalorder %s30, %s33
      %p42 = scmp.eq.s32.totalorder %s25, 1
      %p43 = por %p41, %p42
      %p44 = scmp.ne.s32.totalorder %s33, %s34
      %p45 = scmp.eq.s32.totalorder %s25, 0
      %p46 = por %p44, %p45
      %p47 = scmp.ne.s32.totalorder %s33, %s34
      %p48 = scmp.eq.s32.totalorder %s26, 1
      %p49 = por %p47, %p48
      %p51 = scmp.ne.s32.totalorder %s34, %s50
      %p52 = scmp.eq.s32.totalorder %s26, 0
      %p53 = por %p51, %p52
      %s55 = sadd.s32 %s54, 1
      %p58 = scmp.eq.s32.totalorder %s20, 1
      %p59 = scmp.ne.s32.totalorder %s54, %s56
      %p60 = scmp.eq.s32.totalorder %s20, 0
      %p61 = por %p59, %p60
      %p62 = scmp.ne.s32.totalorder %s54, %s56
      %p63 = scmp.eq.s32.totalorder %s25, 1
      %p64 = por %p62, %p63
      %p65 = scmp.ne.s32.totalorder %s56, %s57
      %p66 = scmp.eq.s32.totalorder %s25, 0
      %p67 = por %p65, %p66
      %p68 = scmp.ne.s32.totalorder %s56, %s57
      %p69 = scmp.eq.s32.totalorder %s26, 1
      %p70 = por %p68, %p69
      %p72 = scmp.ne.s32.totalorder %s57, %s71
      %p73 = scmp.eq.s32.totalorder %s26, 0
      %p74 = por %p72, %p73
      %s76 = sadd.s32 %s75, 1
      %p79 = scmp.eq.s32.totalorder %s20, 1
      %p80 = scmp.ne.s32.totalorder %s75, %s77
      %p81 = scmp.eq.s32.totalorder %s20, 0
      %p82 = por %p80, %p81
      %p83 = scmp.ne.s32.totalorder %s75, %s77
      %p84 = scmp.eq.s32.totalorder %s25, 1
      %p85 = por %p83, %p84
      %p86 = scmp.ne.s32.totalorder %s77, %s78
      %p87 = scmp.eq.s32.totalorder %s25, 0
      %p88 = por %p86, %p87
      %p89 = scmp.ne.s32.totalorder %s77, %s78
      %p90 = scmp.eq.s32.totalorder %s26, 1
      %p91 = por %p89, %p90
      %p93 = scmp.ne.s32.totalorder %s78, %s92
      %p94 = scmp.eq.s32.totalorder %s26, 0
      %p95 = por %p93, %p94
      %s97 = sadd.s32 %s96, 1
      %p100 = scmp.eq.s32.totalorder %s20, 1
      %p101 = scmp.ne.s32.totalorder %s96, %s98
      %p102 = scmp.eq.s32.totalorder %s20, 0
      %p103 = por %p101, %p102
      %p104 = scmp.ne.s32.totalorder %s96, %s98
      %p105 = scmp.eq.s32.totalorder %s25, 1
      %p106 = por %p104, %p105
      %p107 = scmp.ne.s32.totalorder %s98, %s99
      %p108 = scmp.eq.s32.totalorder %s25, 0
      %p109 = por %p107, %p108
      %p110 = scmp.ne.s32.totalorder %s98, %s99
      %p111 = scmp.eq.s32.totalorder %s26, 1
      %p112 = por %p110, %p111
      %p114 = scmp.ne.s32.totalorder %s99, %s113
      %p115 = scmp.eq.s32.totalorder %s26, 0
      %p116 = por %p114, %p115
      %s118 = sadd.s32 %s117, 1
      %p121 = scmp.eq.s32.totalorder %s20, 1
      %p122 = scmp.ne.s32.totalorder %s117, %s119
      %p123 = scmp.eq.s32.totalorder %s20, 0
      %p124 = por %p122, %p123
      %p125 = scmp.ne.s32.totalorder %s117, %s119
      %p126 = scmp.eq.s32.totalorder %s25, 1
      %p127 = por %p125, %p126
      %p128 = scmp.ne.s32.totalorder %s119, %s120
      %p129 = scmp.eq.s32.totalorder %s25, 0
      %p130 = por %p128, %p129
      %p131 = scmp.ne.s32.totalorder %s119, %s120
      %p132 = scmp.eq.s32.totalorder %s26, 1
      %p133 = por %p131, %p132
      %p135 = scmp.ne.s32.totalorder %s120, %s134
      %p136 = scmp.eq.s32.totalorder %s26, 0
      %p137 = por %p135, %p136
      %s139 = sadd.s32 %s138, 1
      %p142 = scmp.eq.s32.totalorder %s20, 1
      %p143 = scmp.ne.s32.totalorder %s138, %s140
      %p144 = scmp.eq.s32.totalorder %s20, 0
      %p145 = por %p143, %p144
      %p146 = scmp.ne.s32.totalorder %s138, %s140
      %p147 = scmp.eq.s32.totalorder %s25, 1
      %p148 = por %p146, %p147
      %p149 = scmp.ne.s32.totalorder %s140, %s141
      %p150 = scmp.eq.s32.totalorder %s25, 0
      %p151 = por %p149, %p150
      %p152 = scmp.ne.s32.totalorder %s140, %s141
      %p153 = scmp.eq.s32.totalorder %s26, 1
      %p154 = por %p152, %p153
      %p156 = scmp.ne.s32.totalorder %s141, %s155
      %p157 = scmp.eq.s32.totalorder %s26, 0
      %p158 = por %p156, %p157
      %s160 = sadd.s32 %s159, 1
      %p163 = scmp.eq.s32.totalorder %s20, 1
      %p164 = scmp.ne.s32.totalorder %s159, %s161
      %p165 = scmp.eq.s32.totalorder %s20, 0
      %p166 = por %p164, %p165
      %p167 = scmp.ne.s32.totalorder %s159, %s161
      %p168 = scmp.eq.s32.totalorder %s25, 1
      %p169 = por %p167, %p168
      %p170 = scmp.ne.s32.totalorder %s161, %s162
      %p171 = scmp.eq.s32.totalorder %s25, 0
      %p172 = por %p170, %p171
      %p173 = scmp.ne.s32.totalorder %s161, %s162
      %p174 = scmp.eq.s32.totalorder %s26, 1
      %p175 = por %p173, %p174
      %p177 = scmp.ne.s32.totalorder %s162, %s176
      %p178 = scmp.eq.s32.totalorder %s26, 0
      %p179 = por %p177, %p178
      %s180 = ssub.s32 %s20, %s27
      %p181 = scmp.eq.s32.totalorder %s180, 0
      %s183 = sadd.s32 %s182, 1
      %s184 = scalar_select %p181, %s182, %s183
      %p187 = pneg %p181
      %p188 = scmp.eq.s32.totalorder %s20, 1
      %p189 = por %p187, %p188
      %p190 = scmp.ne.s32.totalorder %s182, %s185
      %p191 = scmp.eq.s32.totalorder %s20, 0
      %p192 = por %p190, %p191
      %p193 = scmp.ne.s32.totalorder %s182, %s185
      %p194 = scmp.eq.s32.totalorder %s25, 1
      %p195 = por %p193, %p194
      %p196 = scmp.ne.s32.totalorder %s185, %s186
      %p197 = scmp.eq.s32.totalorder %s25, 0
      %p198 = por %p196, %p197
      %p199 = scmp.ne.s32.totalorder %s185, %s186
      %p200 = scmp.eq.s32.totalorder %s26, 1
      %p201 = por %p199, %p200
      %p203 = scmp.ne.s32.totalorder %s186, %s202
      %p204 = scmp.eq.s32.totalorder %s26, 0
      %p205 = por %p203, %p204
      %p206 = scmp.le.s32.totalorder 1, %s20
      %p207 = scmp.lt.s32.totalorder %s20, 3
      %p208 = pnand %p206, %p207
      %p209 = pneg %p208
      // Predicated region
      $region9: #{tpu_custom_call.1} parent=5 // pred_check
        _
      $region10: #{tpu_custom_call.1} parent=5 // pred_check_branch
        %211 = sbr.rel (%p208) target = $region12
      $region11: #{tpu_custom_call.1} parent=5 // pred_region
        %s212 = ssub.s32 %s20, 1
        // Predicated region
        $region13: #{tpu_custom_call.1} parent=11 // pred_check
          %p213 = pneg %p67
        $region14: #{tpu_custom_call.1} parent=11 // pred_check_branch
          %215 = sbr.rel (%p213) target = $region16
        $region15: #{tpu_custom_call.1} parent=11 // pred_region
          _
        $region16: #{tpu_custom_call.1} parent=11 // pred_fallthru
          _
        // Predicated region
        $region17: #{tpu_custom_call.1} parent=11 // pred_check
          %p216 = pneg %p88
        $region18: #{tpu_custom_call.1} parent=11 // pred_check_branch
          %218 = sbr.rel (%p216) target = $region20
        $region19: #{tpu_custom_call.1} parent=11 // pred_region
          _
        $region20: #{tpu_custom_call.1} parent=11 // pred_fallthru
          _
        // Predicated region
        $region21: #{tpu_custom_call.1} parent=11 // pred_check
          %p219 = pneg %p109
        $region22: #{tpu_custom_call.1} parent=11 // pred_check_branch
          %221 = sbr.rel (%p219) target = $region24
        $region23: #{tpu_custom_call.1} parent=11 // pred_region
          _
        $region24: #{tpu_custom_call.1} parent=11 // pred_fallthru
          _
        // Predicated region
        $region25: #{tpu_custom_call.1} parent=11 // pred_check
          %p222 = pneg %p130
        $region26: #{tpu_custom_call.1} parent=11 // pred_check_branch
          %224 = sbr.rel (%p222) target = $region28
        $region27: #{tpu_custom_call.1} parent=11 // pred_region
          %s226 = ssub.s32 27648, 27648
          %227 = vsyncadd [#allocation7], %s226
          %s228 = sshll.u32 [#allocation6], 4
          %s229 = int_to_ptr.vmem [resolvable:$true] %s228
          %234 = dma.hbm_to_vmem [thread:$0]  %s4, 27648, %s229, [#allocation7], 128, 128, 8
        $region28: #{tpu_custom_call.1} parent=11 // pred_fallthru
          _
        // Predicated region
        $region29: #{tpu_custom_call.1} parent=11 // pred_check
          %p235 = pneg %p151
        $region30: #{tpu_custom_call.1} parent=11 // pred_check_branch
          %237 = sbr.rel (%p235) target = $region32
        $region31: #{tpu_custom_call.1} parent=11 // pred_region
          _
        $region32: #{tpu_custom_call.1} parent=11 // pred_fallthru
          _
        // Predicated region
        $region33: #{tpu_custom_call.1} parent=11 // pred_check
          %p238 = pneg %p172
        $region34: #{tpu_custom_call.1} parent=11 // pred_check_branch
          %240 = sbr.rel (%p238) target = $region36
        $region35: #{tpu_custom_call.1} parent=11 // pred_region
          _
        $region36: #{tpu_custom_call.1} parent=11 // pred_fallthru
          _
      $region12: #{tpu_custom_call.1} parent=5 // pred_fallthru
        _
      %p241 = scmp.lt.s32.totalorder %s20, 2
      // Predicated region
      $region37: #{tpu_custom_call.1} parent=5 // pred_check
        %p242 = pneg %p241
      $region38: #{tpu_custom_call.1} parent=5 // pred_check_branch
        %244 = sbr.rel (%p242) target = $region40
      $region39: #{tpu_custom_call.1} parent=5 // pred_region
        // Predicated region
        $region41: #{tpu_custom_call.1} parent=39 // pred_check
          %p245 = pneg %p40
        $region42: #{tpu_custom_call.1} parent=39 // pred_check_branch
          %247 = sbr.rel (%p245) target = $region44
        $region43: #{tpu_custom_call.1} parent=39 // pred_region
          %s248 = sand.u32 %s30, 1
          %s249 = scalar_lea.sflag [#allocation4], %s248
          %s250 = sand.u32 %s30, 1
          %s251 = smul.addr %s250, 128
          %s252 = scalar_lea.vmem [#allocation3], %s251
          %s254 = ssub.s32 2048, 2048
          %255 = vsyncadd %s249, %s254
          %s256 = smul.addr %s20, 16
          %s257 = smul.addr %s256, 128
          %s258 = scalar_lea.hbm %s0, %s257
          %s259 = sshll.u32 %s252, 4
          %s260 = int_to_ptr.vmem [resolvable:$true] %s259
          %265 = dma.hbm_to_vmem [thread:$0]  %s258, 2048, %s260, %s249, 256, 256, 16
        $region44: #{tpu_custom_call.1} parent=39 // pred_fallthru
          _
      $region40: #{tpu_custom_call.1} parent=5 // pred_fallthru
        _
      %p266 = scmp.le.s32.totalorder 1, %s20
      %p267 = scmp.lt.s32.totalorder %s20, 3
      %p268 = pnand %p266, %p267
      %p269 = pneg %p268
      // Predicated region
      $region45: #{tpu_custom_call.1} parent=5 // pred_check
        _
      $region46: #{tpu_custom_call.1} parent=5 // pred_check_branch
        %271 = sbr.rel (%p268) target = $region48
      $region47: #{tpu_custom_call.1} parent=5 // pred_region
        %s272 = ssub.s32 %s20, 1
        %s273 = sand.u32 %s33, 1
        %s274 = scalar_lea.sflag [#allocation4], %s273
        %s275 = sand.u32 %s33, 1
        %s276 = smul.addr %s275, 128
        %s277 = scalar_lea.vmem [#allocation3], %s276
        // Predicated region
        $region49: #{tpu_custom_call.1} parent=47 // pred_check
          %p278 = pneg %p46
        $region50: #{tpu_custom_call.1} parent=47 // pred_check_branch
          %280 = sbr.rel (%p278) target = $region52
        $region51: #{tpu_custom_call.1} parent=47 // pred_region
          %281 = dma.done %s274, 2048
        $region52: #{tpu_custom_call.1} parent=47 // pred_fallthru
          _
        // Predicated region
        $region53: #{tpu_custom_call.1} parent=47 // pred_check
          %p282 = pneg %p130
        $region54: #{tpu_custom_call.1} parent=47 // pred_check_branch
          %284 = sbr.rel (%p282) target = $region56
        $region55: #{tpu_custom_call.1} parent=47 // pred_region
          %285 = dma.done [#allocation7], 27648
        $region56: #{tpu_custom_call.1} parent=47 // pred_fallthru
          _
        %s286 = sand.u32 %s33, 1
        %s287 = scalar_lea.sflag [#allocation4], %s286
        %s288 = sand.u32 %s33, 1
        %s289 = smul.addr %s288, 128
        %s290 = scalar_lea.vmem [#allocation3], %s289
        %p291 = pneg %p46
        %p292 = pneg %p43
        %p293 = pneg %p67
        %p294 = pneg %p64
        %p295 = pneg %p88
        %p296 = pneg %p85
        %p297 = pneg %p109
        %p298 = pneg %p106
        %p299 = pneg %p130
        %p300 = pneg %p127
        %p301 = pneg %p151
        %p302 = pneg %p148
        %p303 = pneg %p172
        %p304 = pneg %p169
        %p305 = pneg %p198
        %p306 = pneg %p195
        %s307 = sand.u32 %s185, 1
        %s308 = scalar_lea.sflag [#allocation5], %s307
        %s309 = sand.u32 %s185, 1
        %s310 = smul.addr %s309, 128
        %s311 = scalar_lea.vmem [#allocation8], %s310
        %vm313 = vcmask 785408
        %314 = vst.msk [vmem:[#allocation2] sm:$0xff] %vm313, 0.0
        %vm315 = vcmask 781312
        %316 = vst.msk [vmem:[#allocation2 + $0x8] sm:$0xf] %vm315, 0.0
        %317 = vst.msk [vmem:[#allocation2 + $0x10] sm:$0xff] %vm313, 0.0
        %318 = vst.msk [vmem:[#allocation2 + $0x18] sm:$0xf] %vm315, 0.0
        %s319 = scalar_lea.vmem [#allocation2], 160
        %320 = vst.msk [vmem:[%s319] sm:$0xff] %vm313, 0.0
        %321 = vst.msk [vmem:[%s319 + $0x8] sm:$0xf] %vm315, 0.0
        %322 = vst.msk [vmem:[%s319 + $0x10] sm:$0xff] %vm313, 0.0
        %323 = vst.msk [vmem:[%s319 + $0x18] sm:$0xf] %vm315, 0.0
        %s324 = scalar_lea.vmem [#allocation2], 32
        %vm325 = vcmask 779264
        %326 = vst.msk [vmem:[%s324] sm:$0x3] %vm325, 0.0
        %327 = vst.msk [vmem:[%s324 + $0x10] sm:$0x3] %vm325, 0.0
        %328 = vst.msk [vmem:[%s324 + $0x20] sm:$0x3] %vm325, 0.0
        %329 = vst.msk [vmem:[%s324 + $0x30] sm:$0x3] %vm325, 0.0
        %330 = vst.msk [vmem:[%s324 + $0x40] sm:$0x3] %vm325, 0.0
        %331 = vst.msk [vmem:[%s324 + $0x50] sm:$0x3] %vm325, 0.0
        %332 = vst.msk [vmem:[%s324 + $0x60] sm:$0x3] %vm325, 0.0
        %333 = vst.msk [vmem:[%s324 + $0x70] sm:$0x3] %vm325, 0.0
        %334 = vst.msk [vmem:[%s324 + $0xa] sm:$0x3] %vm325, 0.0
        %335 = vst.msk [vmem:[%s324 + $0x1a] sm:$0x3] %vm325, 0.0
        %336 = vst.msk [vmem:[%s324 + $0x2a] sm:$0x3] %vm325, 0.0
        %337 = vst.msk [vmem:[%s324 + $0x3a] sm:$0x3] %vm325, 0.0
        %338 = vst.msk [vmem:[%s324 + $0x4a] sm:$0x3] %vm325, 0.0
        %339 = vst.msk [vmem:[%s324 + $0x5a] sm:$0x3] %vm325, 0.0
        %340 = vst.msk [vmem:[%s324 + $0x6a] sm:$0x3] %vm325, 0.0
        %341 = vst.msk [vmem:[%s324 + $0x7a] sm:$0x3] %vm325, 0.0
        %vm342 = vcmask 130048
        %343 = vst.msk [vmem:[%s324 + $0x2] sm:$0xff] %vm342, 0.0
        %344 = vst.msk [vmem:[%s324 + $0x12] sm:$0xff] %vm342, 0.0
        %345 = vst.msk [vmem:[%s324 + $0x22] sm:$0xff] %vm342, 0.0
        %346 = vst.msk [vmem:[%s324 + $0x32] sm:$0xff] %vm342, 0.0
        %347 = vst.msk [vmem:[%s324 + $0x42] sm:$0xff] %vm342, 0.0
        %348 = vst.msk [vmem:[%s324 + $0x52] sm:$0xff] %vm342, 0.0
        %349 = vst.msk [vmem:[%s324 + $0x62] sm:$0xff] %vm342, 0.0
        %350 = vst.msk [vmem:[%s324 + $0x72] sm:$0xff] %vm342, 0.0
        %vm351 = vcmask 786048
        %352 = vst.msk [vmem:[%s324 + $0x2] sm:$0xff] %vm351, 0.0
        %353 = vst.msk [vmem:[%s324 + $0x12] sm:$0xff] %vm351, 0.0
        %354 = vst.msk [vmem:[%s324 + $0x22] sm:$0xff] %vm351, 0.0
        %355 = vst.msk [vmem:[%s324 + $0x32] sm:$0xff] %vm351, 0.0
        %356 = vst.msk [vmem:[%s324 + $0x42] sm:$0xff] %vm351, 0.0
        %357 = vst.msk [vmem:[%s324 + $0x52] sm:$0xff] %vm351, 0.0
        %358 = vst.msk [vmem:[%s324 + $0x62] sm:$0xff] %vm351, 0.0
        %359 = vst.msk [vmem:[%s324 + $0x72] sm:$0xff] %vm351, 0.0
        %v360 = vld [vmem:[%s277] sm:$0xff]
        %v361 = vld [vmem:[%s277 + $0x8] sm:$0xff]
        %v362 = vld [vmem:[%s277 + $0x10] sm:$0xff]
        %v363 = vld [vmem:[%s277 + $0x18] sm:$0xff]
        %v364 = vld [vmem:[%s277 + $0x20] sm:$0xff]
        %v365 = vld [vmem:[%s277 + $0x28] sm:$0xff]
        %v366 = vld [vmem:[%s277 + $0x30] sm:$0xff]
        %v367 = vld [vmem:[%s277 + $0x38] sm:$0xff]
        %v368 = vld [vmem:[%s277 + $0x40] sm:$0xff]
        %v369 = vld [vmem:[%s277 + $0x48] sm:$0xff]
        %v370 = vld [vmem:[%s277 + $0x50] sm:$0xff]
        %v371 = vld [vmem:[%s277 + $0x58] sm:$0xff]
        %v372 = vld [vmem:[%s277 + $0x60] sm:$0xff]
        %v373 = vld [vmem:[%s277 + $0x68] sm:$0xff]
        %v374 = vld [vmem:[%s277 + $0x70] sm:$0xff]
        %v375 = vld [vmem:[%s277 + $0x78] sm:$0xff]
        %v376 = vpack.c.bf16 %v362, %v360
        %v377 = vpack.c.bf16 %v363, %v361
        %v378 = vpack.c.bf16 %v366, %v364
        %v379 = vpack.c.bf16 %v367, %v365
        %v380 = vpack.c.bf16 %v370, %v368
        %v381 = vpack.c.bf16 %v371, %v369
        %v382 = vpack.c.bf16 %v374, %v372
        %v383 = vpack.c.bf16 %v375, %v373
        %v384 = vld [vmem:[%s1] sm:$0xf]
        %v385 = vld [vmem:[%s1 + $0x4] sm:$0xf]
        %v386 = vld [vmem:[%s1 + $0x8] sm:$0xf]
        %v387 = vld [vmem:[%s1 + $0xc] sm:$0xf]
        %v388 = vld [vmem:[%s1 + $0x10] sm:$0xf]
        %v389 = vld [vmem:[%s1 + $0x14] sm:$0xf]
        %v390 = vld [vmem:[%s1 + $0x18] sm:$0xf]
        %v391 = vld [vmem:[%s1 + $0x1c] sm:$0xf]
        %v392 = vld [vmem:[%s1 + $0x20] sm:$0xf]
        %v393 = vld [vmem:[%s1 + $0x24] sm:$0xf]
        %v394 = vld [vmem:[%s1 + $0x28] sm:$0xf]
        %v395 = vld [vmem:[%s1 + $0x2c] sm:$0xf]
        %v396 = vld [vmem:[%s1 + $0x30] sm:$0xf]
        %v397 = vld [vmem:[%s1 + $0x34] sm:$0xf]
        %v398 = vld [vmem:[%s1 + $0x38] sm:$0xf]
        %v399 = vld [vmem:[%s1 + $0x3c] sm:$0xf]
        %v400 = vld [vmem:[%s1 + $0x40] sm:$0xf]
        %v401 = vld [vmem:[%s1 + $0x44] sm:$0xf]
        %v402 = vld [vmem:[%s1 + $0x48] sm:$0xf]
        %v403 = vld [vmem:[%s1 + $0x4c] sm:$0xf]
        %v404 = vld [vmem:[%s1 + $0x50] sm:$0xf]
        %v405 = vld [vmem:[%s1 + $0x54] sm:$0xf]
        %v406 = vld [vmem:[%s1 + $0x58] sm:$0xf]
        %v407 = vld [vmem:[%s1 + $0x5c] sm:$0xf]
        %v408 = vld [vmem:[%s1 + $0x60] sm:$0xf]
        %v409 = vld [vmem:[%s1 + $0x64] sm:$0xf]
        %v410 = vld [vmem:[%s1 + $0x68] sm:$0xf]
        %v411 = vld [vmem:[%s1 + $0x6c] sm:$0xf]
        %v412 = vld [vmem:[%s1 + $0x70] sm:$0xf]
        %v413 = vld [vmem:[%s1 + $0x74] sm:$0xf]
        %v414 = vld [vmem:[%s1 + $0x78] sm:$0xf]
        %v415 = vld [vmem:[%s1 + $0x7c] sm:$0xf]
        %v448 = vunpack.c.l.b16 %v384
        %v449 = vunpack.c.l.b16 %v385
        %v450 = vunpack.c.l.b16 %v386
        %v451 = vunpack.c.l.b16 %v387
        %v452 = vunpack.c.l.b16 %v388
        %v453 = vunpack.c.l.b16 %v389
        %v454 = vunpack.c.l.b16 %v390
        %v455 = vunpack.c.l.b16 %v391
        %v456 = vunpack.c.l.b16 %v392
        %v457 = vunpack.c.l.b16 %v393
        %v458 = vunpack.c.l.b16 %v394
        %v459 = vunpack.c.l.b16 %v395
        %v460 = vunpack.c.l.b16 %v396
        %v461 = vunpack.c.l.b16 %v397
        %v462 = vunpack.c.l.b16 %v398
        %v463 = vunpack.c.l.b16 %v399
        %v464 = vunpack.c.l.b16 %v400
        %v465 = vunpack.c.l.b16 %v401
        %v466 = vunpack.c.l.b16 %v402
        %v467 = vunpack.c.l.b16 %v403
        %v468 = vunpack.c.l.b16 %v404
        %v469 = vunpack.c.l.b16 %v405
        %v470 = vunpack.c.l.b16 %v406
        %v471 = vunpack.c.l.b16 %v407
        %v472 = vunpack.c.l.b16 %v408
        %v473 = vunpack.c.l.b16 %v409
        %v474 = vunpack.c.l.b16 %v410
        %v475 = vunpack.c.l.b16 %v411
        %v476 = vunpack.c.l.b16 %v412
        %v477 = vunpack.c.l.b16 %v413
        %v478 = vunpack.c.l.b16 %v414
        %v479 = vunpack.c.l.b16 %v415
        %v480 = vpack.c.b16 %v449, %v448
        %v481 = vpack.c.b16 %v451, %v450
        %v482 = vpack.c.b16 %v453, %v452
        %v483 = vpack.c.b16 %v455, %v454
        %v484 = vpack.c.b16 %v457, %v456
        %v485 = vpack.c.b16 %v459, %v458
        %v486 = vpack.c.b16 %v461, %v460
        %v487 = vpack.c.b16 %v463, %v462
        %v488 = vpack.c.b16 %v465, %v464
        %v489 = vpack.c.b16 %v467, %v466
        %v490 = vpack.c.b16 %v469, %v468
        %v491 = vpack.c.b16 %v471, %v470
        %v492 = vpack.c.b16 %v473, %v472
        %v493 = vpack.c.b16 %v475, %v474
        %v494 = vpack.c.b16 %v477, %v476
        %v495 = vpack.c.b16 %v479, %v478
        %512 = vmatprep.subr.bf16.mxu0 0
        %513 = vmatpush1.bf16.msra.mxu0 %v487
        %514 = vmatprep.subr.bf16.mxu0 0
        %515 = vmatpush1.bf16.msra.mxu0 %v486
        %516 = vmatprep.subr.bf16.mxu0 0
        %517 = vmatpush1.bf16.msra.mxu0 %v485
        %518 = vmatprep.subr.bf16.mxu0 0
        %519 = vmatpush1.bf16.msra.mxu0 %v484
        %520 = vmatprep.subr.bf16.mxu0 0
        %521 = vmatpush1.bf16.msra.mxu0 %v483
        %522 = vmatprep.subr.bf16.mxu0 0
        %523 = vmatpush1.bf16.msra.mxu0 %v482
        %524 = vmatprep.subr.bf16.mxu0 0
        %525 = vmatpush1.bf16.msra.mxu0 %v481
        %526 = vmatprep.subr.bf16.mxu0 0
        %527 = vmatpush1.bf16.msra.mxu0 %v480
        %528 = vmatprep.subr.bf16.mxu0 0
        %529 = vmatpush2.bf16.msra.mxu0 %v495
        %530 = vmatprep.subr.bf16.mxu0 0
        %531 = vmatpush2.bf16.msra.mxu0 %v494
        %532 = vmatprep.subr.bf16.mxu0 0
        %533 = vmatpush2.bf16.msra.mxu0 %v493
        %534 = vmatprep.subr.bf16.mxu0 0
        %535 = vmatpush2.bf16.msra.mxu0 %v492
        %536 = vmatprep.subr.bf16.mxu0 0
        %537 = vmatpush2.bf16.msra.mxu0 %v491
        %538 = vmatprep.subr.bf16.mxu0 0
        %539 = vmatpush2.bf16.msra.mxu0 %v490
        %540 = vmatprep.subr.bf16.mxu0 0
        %541 = vmatpush2.bf16.msra.mxu0 %v489
        %542 = vmatprep.subr.bf16.mxu0 0
        %543 = vmatpush2.bf16.msra.mxu0 %v488
        %544 = vmatprep.mubr.bf16.mxu0 %v377
        %545 = vmatmul.mubr.bf16.gmra.mxu0 %v376
        %v546 = vpop.f32.mrf.mxu0
        %v547 = vadd.f32 0.0, %v546
        %v548 = vpop.f32.mrf.mxu0
        %v549 = vpop.f32.mrf.mxu0
        %v550 = vadd.f32 0.0, %v549
        %v551 = vpop.f32.mrf.mxu0
        %552 = vmatprep.mubr.bf16.mxu0 %v379
        %553 = vmatmul.mubr.bf16.gmra.mxu0 %v378
        %v554 = vpop.f32.mrf.mxu0
        %v555 = vadd.f32 0.0, %v554
        %v556 = vpop.f32.mrf.mxu0
        %v557 = vpop.f32.mrf.mxu0
        %v558 = vadd.f32 0.0, %v557
        %v559 = vpop.f32.mrf.mxu0
        %560 = vmatprep.mubr.bf16.mxu0 %v381
        %561 = vmatmul.mubr.bf16.gmra.mxu0 %v380
        %v562 = vpop.f32.mrf.mxu0
        %v563 = vadd.f32 0.0, %v562
        %v564 = vpop.f32.mrf.mxu0
        %v565 = vpop.f32.mrf.mxu0
        %v566 = vadd.f32 0.0, %v565
        %v567 = vpop.f32.mrf.mxu0
        %568 = vmatprep.mubr.bf16.mxu0 %v383
        %569 = vmatmul.mubr.bf16.gmra.mxu0 %v382
        %v570 = vpop.f32.mrf.mxu0
        %v571 = vadd.f32 0.0, %v570
        %v572 = vpop.f32.mrf.mxu0
        %v573 = vpop.f32.mrf.mxu0
        %v574 = vadd.f32 0.0, %v573
        %v575 = vpop.f32.mrf.mxu0
        %576 = vdwg.mxu0
        %v577 = vld [vmem:[%s2] sm:$0x1]
        %v579 = vlaneseq
        %v580 = vshrl.u32 %v579, 7
        %v581 = vsub.s32 0, %v580
        %v582 = vrot.slane %v577, %v581
        %v584 = vmul.f32 %v547, %v582
        %v585 = vmul.f32 %v550, %v582
        %v586 = vmul.f32 %v555, %v582
        %v587 = vmul.f32 %v558, %v582
        %v588 = vmul.f32 %v563, %v582
        %v589 = vmul.f32 %v566, %v582
        %v590 = vmul.f32 %v571, %v582
        %v591 = vmul.f32 %v574, %v582
        %v592 = vld [vmem:[%s3] sm:$0x1]
        %v594 = vlaneseq
        %v595 = vshrl.u32 %v594, 7
        %v596 = vsub.s32 0, %v595
        %v597 = vrot.slane %v592, %v596
        %v599 = vadd.f32 %v584, %v597
        %v600 = vadd.f32 %v585, %v597
        %v601 = vadd.f32 %v586, %v597
        %v602 = vadd.f32 %v587, %v597
        %v603 = vadd.f32 %v588, %v597
        %v604 = vadd.f32 %v589, %v597
        %v605 = vadd.f32 %v590, %v597
        %v606 = vadd.f32 %v591, %v597
        %v607 = vmax.f32 %v599, 0.0
        %v608 = vmax.f32 %v600, 0.0
        %v609 = vmax.f32 %v601, 0.0
        %v610 = vmax.f32 %v602, 0.0
        %v611 = vmax.f32 %v603, 0.0
        %v612 = vmax.f32 %v604, 0.0
        %v613 = vmax.f32 %v605, 0.0
        %v614 = vmax.f32 %v606, 0.0
        %623 = vrot.lane.b32.xlu0 %v607, 16
        %v624 = vpop.permute.xlu0 %623
        %625 = vrot.lane.b32.xlu0 %v608, 16
        %v626 = vpop.permute.xlu0 %625
        %627 = vrot.lane.b32.xlu0 %v609, 16
        %v628 = vpop.permute.xlu0 %627
        %629 = vrot.lane.b32.xlu0 %v610, 16
        %v630 = vpop.permute.xlu0 %629
        %631 = vrot.lane.b32.xlu0 %v611, 16
        %v632 = vpop.permute.xlu0 %631
        %633 = vrot.lane.b32.xlu0 %v612, 16
        %v634 = vpop.permute.xlu0 %633
        %635 = vrot.lane.b32.xlu0 %v613, 16
        %v636 = vpop.permute.xlu0 %635
        %637 = vrot.lane.b32.xlu0 %v614, 16
        %v638 = vpop.permute.xlu0 %637
        %vm647 = vcmask 654464
        %648 = vst.msk [vmem:[%s324 + $0x2] sm:$0xff] %vm647, %v624
        %649 = vst.msk [vmem:[%s324 + $0x12] sm:$0xff] %vm647, %v626
        %650 = vst.msk [vmem:[%s324 + $0x22] sm:$0xff] %vm647, %v628
        %651 = vst.msk [vmem:[%s324 + $0x32] sm:$0xff] %vm647, %v630
        %652 = vst.msk [vmem:[%s324 + $0x42] sm:$0xff] %vm647, %v632
        %653 = vst.msk [vmem:[%s324 + $0x52] sm:$0xff] %vm647, %v634
        %654 = vst.msk [vmem:[%s324 + $0x62] sm:$0xff] %vm647, %v636
        %655 = vst.msk [vmem:[%s324 + $0x72] sm:$0xff] %vm647, %v638
        %s656 = scalar_lea.vmem [#allocation2], 16
        %v657 = vld [vmem:[%s656 + $0x1] sm:$0xff]
        %v658 = vld [vmem:[%s656 + $0x11] sm:$0xff]
        %v659 = vld [vmem:[%s656 + $0x21] sm:$0xff]
        %v660 = vld [vmem:[%s656 + $0x31] sm:$0xff]
        %v661 = vld [vmem:[%s656 + $0x41] sm:$0xff]
        %v662 = vld [vmem:[%s656 + $0x51] sm:$0xff]
        %v663 = vld [vmem:[%s656 + $0x61] sm:$0xff]
        %v664 = vld [vmem:[%s656 + $0x71] sm:$0xff]
        %v665 = vpack.c.bf16 %v658, %v657
        %v666 = vpack.c.bf16 %v660, %v659
        %v667 = vpack.c.bf16 %v662, %v661
        %v668 = vpack.c.bf16 %v664, %v663
        %v669 = vld [vmem:[#allocation6] sm:$0xff]
        %v670 = vld [vmem:[#allocation6 + $0x8] sm:$0xff]
        %v671 = vld [vmem:[#allocation6 + $0x10] sm:$0xff]
        %v672 = vld [vmem:[#allocation6 + $0x18] sm:$0xff]
        %v673 = vld [vmem:[#allocation6 + $0x20] sm:$0xff]
        %v674 = vld [vmem:[#allocation6 + $0x28] sm:$0xff]
        %v675 = vld [vmem:[#allocation6 + $0x30] sm:$0xff]
        %v676 = vld [vmem:[#allocation6 + $0x38] sm:$0xff]
        %v677 = vld [vmem:[#allocation6 + $0x40] sm:$0xff]
        %v678 = vld [vmem:[#allocation6 + $0x48] sm:$0xff]
        %v679 = vld [vmem:[#allocation6 + $0x50] sm:$0xff]
        %v680 = vld [vmem:[#allocation6 + $0x58] sm:$0xff]
        %v681 = vld [vmem:[%s656 + $0x2] sm:$0xff]
        %v682 = vld [vmem:[%s656 + $0x12] sm:$0xff]
        %v683 = vld [vmem:[%s656 + $0x22] sm:$0xff]
        %v684 = vld [vmem:[%s656 + $0x32] sm:$0xff]
        %v685 = vld [vmem:[%s656 + $0x42] sm:$0xff]
        %v686 = vld [vmem:[%s656 + $0x52] sm:$0xff]
        %v687 = vld [vmem:[%s656 + $0x62] sm:$0xff]
        %v688 = vld [vmem:[%s656 + $0x72] sm:$0xff]
        %v689 = vpack.c.bf16 %v682, %v681
        %v690 = vpack.c.bf16 %v684, %v683
        %v691 = vpack.c.bf16 %v686, %v685
        %v692 = vpack.c.bf16 %v688, %v687
        %s693 = scalar_lea.vmem [#allocation6], 96
        %v694 = vld [vmem:[%s693] sm:$0xff]
        %v695 = vld [vmem:[%s693 + $0x8] sm:$0xff]
        %v696 = vld [vmem:[%s693 + $0x10] sm:$0xff]
        %v697 = vld [vmem:[%s693 + $0x18] sm:$0xff]
        %v698 = vld [vmem:[%s693 + $0x20] sm:$0xff]
        %v699 = vld [vmem:[%s693 + $0x28] sm:$0xff]
        %v700 = vld [vmem:[%s693 + $0x30] sm:$0xff]
        %v701 = vld [vmem:[%s693 + $0x38] sm:$0xff]
        %v702 = vld [vmem:[%s693 + $0x40] sm:$0xff]
        %v703 = vld [vmem:[%s693 + $0x48] sm:$0xff]
        %v704 = vld [vmem:[%s693 + $0x50] sm:$0xff]
        %v705 = vld [vmem:[%s693 + $0x58] sm:$0xff]
        %v718 = vunpack.c.l.b16 %v694
        %v719 = vunpack.c.h.b16 %v694
        %v720 = vunpack.c.l.b16 %v695
        %v721 = vunpack.c.h.b16 %v695
        %v722 = vunpack.c.l.b16 %v696
        %v723 = vunpack.c.h.b16 %v696
        %v724 = vunpack.c.l.b16 %v697
        %v725 = vunpack.c.h.b16 %v697
        %v726 = vunpack.c.l.b16 %v698
        %v727 = vunpack.c.h.b16 %v698
        %v728 = vunpack.c.l.b16 %v699
        %v729 = vunpack.c.h.b16 %v699
        %v730 = vunpack.c.l.b16 %v700
        %v731 = vunpack.c.h.b16 %v700
        %v732 = vunpack.c.l.b16 %v701
        %v733 = vunpack.c.h.b16 %v701
        %v734 = vunpack.c.l.b16 %v702
        %v735 = vunpack.c.h.b16 %v702
        %v736 = vunpack.c.l.b16 %v703
        %v737 = vunpack.c.h.b16 %v703
        %v738 = vunpack.c.l.b16 %v704
        %v739 = vunpack.c.h.b16 %v704
        %v740 = vunpack.c.l.b16 %v705
        %v741 = vunpack.c.h.b16 %v705
        %v742 = vpack.c.b16 %v720, %v718
        %v743 = vpack.c.b16 %v721, %v719
        %v744 = vpack.c.b16 %v724, %v722
        %v745 = vpack.c.b16 %v725, %v723
        %v746 = vpack.c.b16 %v728, %v726
        %v747 = vpack.c.b16 %v729, %v727
        %v748 = vpack.c.b16 %v732, %v730
        %v749 = vpack.c.b16 %v733, %v731
        %v750 = vpack.c.b16 %v736, %v734
        %v751 = vpack.c.b16 %v737, %v735
        %v752 = vpack.c.b16 %v740, %v738
        %v753 = vpack.c.b16 %v741, %v739
        %v767 = vsel %vm313, %v689, 0
        %v770 = vsel %vm313, %v690, 0
        %v773 = vsel %vm313, %v691, 0
        %v776 = vsel %vm313, %v692, 0
        %778 = vmatprep.subr.bf16.mxu0 0
        %779 = vmatpush1.bf16.msra.mxu0 0
        %780 = vmatprep.subr.bf16.mxu0 0
        %781 = vmatpush1.bf16.msra.mxu0 0
        %782 = vmatprep.subr.bf16.mxu0 %v753
        %783 = vmatpush1.bf16.msra.mxu0 %v752
        %784 = vmatprep.subr.bf16.mxu0 %v751
        %785 = vmatpush1.bf16.msra.mxu0 %v750
        %786 = vmatprep.subr.bf16.mxu0 %v749
        %787 = vmatpush1.bf16.msra.mxu0 %v748
        %788 = vmatprep.subr.bf16.mxu0 %v747
        %789 = vmatpush1.bf16.msra.mxu0 %v746
        %790 = vmatprep.subr.bf16.mxu0 %v745
        %791 = vmatpush1.bf16.msra.mxu0 %v744
        %792 = vmatprep.subr.bf16.mxu0 %v743
        %793 = vmatpush1.bf16.msra.mxu0 %v742
        %794 = vmatprep.subr.bf16.mxu0 0
        %795 = vmatpush2.bf16.msra.mxu0 0
        %796 = vmatprep.subr.bf16.mxu0 0
        %797 = vmatpush2.bf16.msra.mxu0 0
        %798 = vmatprep.subr.bf16.mxu0 0
        %799 = vmatpush2.bf16.msra.mxu0 0
        %800 = vmatprep.subr.bf16.mxu0 0
        %801 = vmatpush2.bf16.msra.mxu0 0
        %802 = vmatprep.subr.bf16.mxu0 0
        %803 = vmatpush2.bf16.msra.mxu0 0
        %804 = vmatprep.subr.bf16.mxu0 0
        %805 = vmatpush2.bf16.msra.mxu0 0
        %806 = vmatprep.subr.bf16.mxu0 0
        %807 = vmatpush2.bf16.msra.mxu0 0
        %808 = vmatprep.subr.bf16.mxu0 0
        %809 = vmatpush2.bf16.msra.mxu0 0
        %810 = vmatprep.mubr.bf16.mxu0 0
        %811 = vmatmul.mubr.bf16.gmra.mxu0 %v767
        %v812 = vpop.f32.mrf.mxu0
        %v813 = vadd.f32 0.0, %v812
        %v814 = vpop.f32.mrf.mxu0
        %v815 = vadd.f32 0.0, %v814
        %v816 = vpop.f32.mrf.mxu0
        %v817 = vadd.f32 0.0, %v816
        %v818 = vpop.f32.mrf.mxu0
        %v819 = vadd.f32 0.0, %v818
        %820 = vmatprep.mubr.bf16.mxu0 0
        %821 = vmatmul.mubr.bf16.gmra.mxu0 %v770
        %v822 = vpop.f32.mrf.mxu0
        %v823 = vadd.f32 0.0, %v822
        %v824 = vpop.f32.mrf.mxu0
        %v825 = vadd.f32 0.0, %v824
        %v826 = vpop.f32.mrf.mxu0
        %v827 = vadd.f32 0.0, %v826
        %v828 = vpop.f32.mrf.mxu0
        %v829 = vadd.f32 0.0, %v828
        %830 = vmatprep.mubr.bf16.mxu0 0
        %831 = vmatmul.mubr.bf16.gmra.mxu0 %v773
        %v832 = vpop.f32.mrf.mxu0
        %v833 = vadd.f32 0.0, %v832
        %v834 = vpop.f32.mrf.mxu0
        %v835 = vadd.f32 0.0, %v834
        %v836 = vpop.f32.mrf.mxu0
        %v837 = vadd.f32 0.0, %v836
        %v838 = vpop.f32.mrf.mxu0
        %v839 = vadd.f32 0.0, %v838
        %840 = vmatprep.mubr.bf16.mxu0 0
        %841 = vmatmul.mubr.bf16.gmra.mxu0 %v776
        %v842 = vpop.f32.mrf.mxu0
        %v843 = vadd.f32 0.0, %v842
        %v844 = vpop.f32.mrf.mxu0
        %v845 = vadd.f32 0.0, %v844
        %v846 = vpop.f32.mrf.mxu0
        %v847 = vadd.f32 0.0, %v846
        %v848 = vpop.f32.mrf.mxu0
        %v849 = vadd.f32 0.0, %v848
        %850 = vdwg.mxu0
        %v863 = vunpack.c.l.b16 %v669
        %v864 = vunpack.c.h.b16 %v669
        %v865 = vunpack.c.l.b16 %v670
        %v866 = vunpack.c.h.b16 %v670
        %v867 = vunpack.c.l.b16 %v671
        %v868 = vunpack.c.h.b16 %v671
        %v869 = vunpack.c.l.b16 %v672
        %v870 = vunpack.c.h.b16 %v672
        %v871 = vunpack.c.l.b16 %v673
        %v872 = vunpack.c.h.b16 %v673
        %v873 = vunpack.c.l.b16 %v674
        %v874 = vunpack.c.h.b16 %v674
        %v875 = vunpack.c.l.b16 %v675
        %v876 = vunpack.c.h.b16 %v675
        %v877 = vunpack.c.l.b16 %v676
        %v878 = vunpack.c.h.b16 %v676
        %v879 = vunpack.c.l.b16 %v677
        %v880 = vunpack.c.h.b16 %v677
        %v881 = vunpack.c.l.b16 %v678
        %v882 = vunpack.c.h.b16 %v678
        %v883 = vunpack.c.l.b16 %v679
        %v884 = vunpack.c.h.b16 %v679
        %v885 = vunpack.c.l.b16 %v680
        %v886 = vunpack.c.h.b16 %v680
        %v887 = vpack.c.b16 %v865, %v863
        %v888 = vpack.c.b16 %v866, %v864
        %v889 = vpack.c.b16 %v869, %v867
        %v890 = vpack.c.b16 %v870, %v868
        %v891 = vpack.c.b16 %v873, %v871
        %v892 = vpack.c.b16 %v874, %v872
        %v893 = vpack.c.b16 %v877, %v875
        %v894 = vpack.c.b16 %v878, %v876
        %v895 = vpack.c.b16 %v881, %v879
        %v896 = vpack.c.b16 %v882, %v880
        %v897 = vpack.c.b16 %v885, %v883
        %v898 = vpack.c.b16 %v886, %v884
        %v912 = vsel %vm313, %v665, 0
        %v915 = vsel %vm313, %v666, 0
        %v918 = vsel %vm313, %v667, 0
        %v921 = vsel %vm313, %v668, 0
        %923 = vmatprep.subr.bf16.mxu0 0
        %924 = vmatpush1.bf16.msra.mxu0 0
        %925 = vmatprep.subr.bf16.mxu0 0
        %926 = vmatpush1.bf16.msra.mxu0 0
        %927 = vmatprep.subr.bf16.mxu0 %v898
        %928 = vmatpush1.bf16.msra.mxu0 %v897
        %929 = vmatprep.subr.bf16.mxu0 %v896
        %930 = vmatpush1.bf16.msra.mxu0 %v895
        %931 = vmatprep.subr.bf16.mxu0 %v894
        %932 = vmatpush1.bf16.msra.mxu0 %v893
        %933 = vmatprep.subr.bf16.mxu0 %v892
        %934 = vmatpush1.bf16.msra.mxu0 %v891
        %935 = vmatprep.subr.bf16.mxu0 %v890
        %936 = vmatpush1.bf16.msra.mxu0 %v889
        %937 = vmatprep.subr.bf16.mxu0 %v888
        %938 = vmatpush1.bf16.msra.mxu0 %v887
        %939 = vmatprep.subr.bf16.mxu0 0
        %940 = vmatpush2.bf16.msra.mxu0 0
        %941 = vmatprep.subr.bf16.mxu0 0
        %942 = vmatpush2.bf16.msra.mxu0 0
        %943 = vmatprep.subr.bf16.mxu0 0
        %944 = vmatpush2.bf16.msra.mxu0 0
        %945 = vmatprep.subr.bf16.mxu0 0
        %946 = vmatpush2.bf16.msra.mxu0 0
        %947 = vmatprep.subr.bf16.mxu0 0
        %948 = vmatpush2.bf16.msra.mxu0 0
        %949 = vmatprep.subr.bf16.mxu0 0
        %950 = vmatpush2.bf16.msra.mxu0 0
        %951 = vmatprep.subr.bf16.mxu0 0
        %952 = vmatpush2.bf16.msra.mxu0 0
        %953 = vmatprep.subr.bf16.mxu0 0
        %954 = vmatpush2.bf16.msra.mxu0 0
        %955 = vmatprep.mubr.bf16.mxu0 0
        %956 = vmatmul.mubr.bf16.gmra.mxu0 %v912
        %v957 = vpop.f32.mrf.mxu0
        %v958 = vadd.f32 %v813, %v957
        %v959 = vpop.f32.mrf.mxu0
        %v960 = vadd.f32 %v815, %v959
        %v961 = vpop.f32.mrf.mxu0
        %v962 = vadd.f32 %v817, %v961
        %v963 = vpop.f32.mrf.mxu0
        %v964 = vadd.f32 %v819, %v963
        %965 = vmatprep.mubr.bf16.mxu0 0
        %966 = vmatmul.mubr.bf16.gmra.mxu0 %v915
        %v967 = vpop.f32.mrf.mxu0
        %v968 = vadd.f32 %v823, %v967
        %v969 = vpop.f32.mrf.mxu0
        %v970 = vadd.f32 %v825, %v969
        %v971 = vpop.f32.mrf.mxu0
        %v972 = vadd.f32 %v827, %v971
        %v973 = vpop.f32.mrf.mxu0
        %v974 = vadd.f32 %v829, %v973
        %975 = vmatprep.mubr.bf16.mxu0 0
        %976 = vmatmul.mubr.bf16.gmra.mxu0 %v918
        %v977 = vpop.f32.mrf.mxu0
        %v978 = vadd.f32 %v833, %v977
        %v979 = vpop.f32.mrf.mxu0
        %v980 = vadd.f32 %v835, %v979
        %v981 = vpop.f32.mrf.mxu0
        %v982 = vadd.f32 %v837, %v981
        %v983 = vpop.f32.mrf.mxu0
        %v984 = vadd.f32 %v839, %v983
        %985 = vmatprep.mubr.bf16.mxu0 0
        %986 = vmatmul.mubr.bf16.gmra.mxu0 %v921
        %v987 = vpop.f32.mrf.mxu0
        %v988 = vadd.f32 %v843, %v987
        %v989 = vpop.f32.mrf.mxu0
        %v990 = vadd.f32 %v845, %v989
        %v991 = vpop.f32.mrf.mxu0
        %v992 = vadd.f32 %v847, %v991
        %v993 = vpop.f32.mrf.mxu0
        %v994 = vadd.f32 %v849, %v993
        %995 = vdwg.mxu0
        %v996 = vld [vmem:[%s656 + $0x3] sm:$0xff]
        %v997 = vld [vmem:[%s656 + $0x13] sm:$0xff]
        %v998 = vld [vmem:[%s656 + $0x23] sm:$0xff]
        %v999 = vld [vmem:[%s656 + $0x33] sm:$0xff]
        %v1000 = vld [vmem:[%s656 + $0x43] sm:$0xff]
        %v1001 = vld [vmem:[%s656 + $0x53] sm:$0xff]
        %v1002 = vld [vmem:[%s656 + $0x63] sm:$0xff]
        %v1003 = vld [vmem:[%s656 + $0x73] sm:$0xff]
        %v1004 = vpack.c.bf16 %v997, %v996
        %v1005 = vpack.c.bf16 %v999, %v998
        %v1006 = vpack.c.bf16 %v1001, %v1000
        %v1007 = vpack.c.bf16 %v1003, %v1002
        %s1008 = scalar_lea.vmem [#allocation6], 192
        %v1009 = vld [vmem:[%s1008] sm:$0xff]
        %v1010 = vld [vmem:[%s1008 + $0x8] sm:$0xff]
        %v1011 = vld [vmem:[%s1008 + $0x10] sm:$0xff]
        %v1012 = vld [vmem:[%s1008 + $0x18] sm:$0xff]
        %v1013 = vld [vmem:[%s1008 + $0x20] sm:$0xff]
        %v1014 = vld [vmem:[%s1008 + $0x28] sm:$0xff]
        %v1015 = vld [vmem:[%s1008 + $0x30] sm:$0xff]
        %v1016 = vld [vmem:[%s1008 + $0x38] sm:$0xff]
        %v1017 = vld [vmem:[%s1008 + $0x40] sm:$0xff]
        %v1018 = vld [vmem:[%s1008 + $0x48] sm:$0xff]
        %v1019 = vld [vmem:[%s1008 + $0x50] sm:$0xff]
        %v1020 = vld [vmem:[%s1008 + $0x58] sm:$0xff]
        %v1033 = vunpack.c.l.b16 %v1009
        %v1034 = vunpack.c.h.b16 %v1009
        %v1035 = vunpack.c.l.b16 %v1010
        %v1036 = vunpack.c.h.b16 %v1010
        %v1037 = vunpack.c.l.b16 %v1011
        %v1038 = vunpack.c.h.b16 %v1011
        %v1039 = vunpack.c.l.b16 %v1012
        %v1040 = vunpack.c.h.b16 %v1012
        %v1041 = vunpack.c.l.b16 %v1013
        %v1042 = vunpack.c.h.b16 %v1013
        %v1043 = vunpack.c.l.b16 %v1014
        %v1044 = vunpack.c.h.b16 %v1014
        %v1045 = vunpack.c.l.b16 %v1015
        %v1046 = vunpack.c.h.b16 %v1015
        %v1047 = vunpack.c.l.b16 %v1016
        %v1048 = vunpack.c.h.b16 %v1016
        %v1049 = vunpack.c.l.b16 %v1017
        %v1050 = vunpack.c.h.b16 %v1017
        %v1051 = vunpack.c.l.b16 %v1018
        %v1052 = vunpack.c.h.b16 %v1018
        %v1053 = vunpack.c.l.b16 %v1019
        %v1054 = vunpack.c.h.b16 %v1019
        %v1055 = vunpack.c.l.b16 %v1020
        %v1056 = vunpack.c.h.b16 %v1020
        %v1057 = vpack.c.b16 %v1035, %v1033
        %v1058 = vpack.c.b16 %v1036, %v1034
        %v1059 = vpack.c.b16 %v1039, %v1037
        %v1060 = vpack.c.b16 %v1040, %v1038
        %v1061 = vpack.c.b16 %v1043, %v1041
        %v1062 = vpack.c.b16 %v1044, %v1042
        %v1063 = vpack.c.b16 %v1047, %v1045
        %v1064 = vpack.c.b16 %v1048, %v1046
        %v1065 = vpack.c.b16 %v1051, %v1049
        %v1066 = vpack.c.b16 %v1052, %v1050
        %v1067 = vpack.c.b16 %v1055, %v1053
        %v1068 = vpack.c.b16 %v1056, %v1054
        %v1082 = vsel %vm313, %v1004, 0
        %v1085 = vsel %vm313, %v1005, 0
        %v1088 = vsel %vm313, %v1006, 0
        %v1091 = vsel %vm313, %v1007, 0
        %1093 = vmatprep.subr.bf16.mxu0 0
        %1094 = vmatpush1.bf16.msra.mxu0 0
        %1095 = vmatprep.subr.bf16.mxu0 0
        %1096 = vmatpush1.bf16.msra.mxu0 0
        %1097 = vmatprep.subr.bf16.mxu0 %v1068
        %1098 = vmatpush1.bf16.msra.mxu0 %v1067
        %1099 = vmatprep.subr.bf16.mxu0 %v1066
        %1100 = vmatpush1.bf16.msra.mxu0 %v1065
        %1101 = vmatprep.subr.bf16.mxu0 %v1064
        %1102 = vmatpush1.bf16.msra.mxu0 %v1063
        %1103 = vmatprep.subr.bf16.mxu0 %v1062
        %1104 = vmatpush1.bf16.msra.mxu0 %v1061
        %1105 = vmatprep.subr.bf16.mxu0 %v1060
        %1106 = vmatpush1.bf16.msra.mxu0 %v1059
        %1107 = vmatprep.subr.bf16.mxu0 %v1058
        %1108 = vmatpush1.bf16.msra.mxu0 %v1057
        %1109 = vmatprep.subr.bf16.mxu0 0
        %1110 = vmatpush2.bf16.msra.mxu0 0
        %1111 = vmatprep.subr.bf16.mxu0 0
        %1112 = vmatpush2.bf16.msra.mxu0 0
        %1113 = vmatprep.subr.bf16.mxu0 0
        %1114 = vmatpush2.bf16.msra.mxu0 0
        %1115 = vmatprep.subr.bf16.mxu0 0
        %1116 = vmatpush2.bf16.msra.mxu0 0
        %1117 = vmatprep.subr.bf16.mxu0 0
        %1118 = vmatpush2.bf16.msra.mxu0 0
        %1119 = vmatprep.subr.bf16.mxu0 0
        %1120 = vmatpush2.bf16.msra.mxu0 0
        %1121 = vmatprep.subr.bf16.mxu0 0
        %1122 = vmatpush2.bf16.msra.mxu0 0
        %1123 = vmatprep.subr.bf16.mxu0 0
        %1124 = vmatpush2.bf16.msra.mxu0 0
        %1125 = vmatprep.mubr.bf16.mxu0 0
        %1126 = vmatmul.mubr.bf16.gmra.mxu0 %v1082
        %v1127 = vpop.f32.mrf.mxu0
        %v1128 = vadd.f32 0.0, %v1127
        %v1129 = vpop.f32.mrf.mxu0
        %v1130 = vadd.f32 0.0, %v1129
        %v1131 = vpop.f32.mrf.mxu0
        %v1132 = vadd.f32 0.0, %v1131
        %v1133 = vpop.f32.mrf.mxu0
        %v1134 = vadd.f32 0.0, %v1133
        %1135 = vmatprep.mubr.bf16.mxu0 0
        %1136 = vmatmul.mubr.bf16.gmra.mxu0 %v1085
        %v1137 = vpop.f32.mrf.mxu0
        %v1138 = vadd.f32 0.0, %v1137
        %v1139 = vpop.f32.mrf.mxu0
        %v1140 = vadd.f32 0.0, %v1139
        %v1141 = vpop.f32.mrf.mxu0
        %v1142 = vadd.f32 0.0, %v1141
        %v1143 = vpop.f32.mrf.mxu0
        %v1144 = vadd.f32 0.0, %v1143
        %1145 = vmatprep.mubr.bf16.mxu0 0
        %1146 = vmatmul.mubr.bf16.gmra.mxu0 %v1088
        %v1147 = vpop.f32.mrf.mxu0
        %v1148 = vadd.f32 0.0, %v1147
        %v1149 = vpop.f32.mrf.mxu0
        %v1150 = vadd.f32 0.0, %v1149
        %v1151 = vpop.f32.mrf.mxu0
        %v1152 = vadd.f32 0.0, %v1151
        %v1153 = vpop.f32.mrf.mxu0
        %v1154 = vadd.f32 0.0, %v1153
        %1155 = vmatprep.mubr.bf16.mxu0 0
        %1156 = vmatmul.mubr.bf16.gmra.mxu0 %v1091
        %v1157 = vpop.f32.mrf.mxu0
        %v1158 = vadd.f32 0.0, %v1157
        %v1159 = vpop.f32.mrf.mxu0
        %v1160 = vadd.f32 0.0, %v1159
        %v1161 = vpop.f32.mrf.mxu0
        %v1162 = vadd.f32 0.0, %v1161
        %v1163 = vpop.f32.mrf.mxu0
        %v1164 = vadd.f32 0.0, %v1163
        %1165 = vdwg.mxu0
        %v1166 = vadd.f32 %v958, %v1128
        %v1167 = vadd.f32 %v960, %v1130
        %v1168 = vadd.f32 %v962, %v1132
        %v1169 = vadd.f32 %v964, %v1134
        %v1170 = vadd.f32 %v968, %v1138
        %v1171 = vadd.f32 %v970, %v1140
        %v1172 = vadd.f32 %v972, %v1142
        %v1173 = vadd.f32 %v974, %v1144
        %v1174 = vadd.f32 %v978, %v1148
        %v1175 = vadd.f32 %v980, %v1150
        %v1176 = vadd.f32 %v982, %v1152
        %v1177 = vadd.f32 %v984, %v1154
        %v1178 = vadd.f32 %v988, %v1158
        %v1179 = vadd.f32 %v990, %v1160
        %v1180 = vadd.f32 %v992, %v1162
        %v1181 = vadd.f32 %v994, %v1164
        %v1182 = vld [vmem:[%s324 + $0x1] sm:$0xff]
        %v1183 = vld [vmem:[%s324 + $0x11] sm:$0xff]
        %v1184 = vld [vmem:[%s324 + $0x21] sm:$0xff]
        %v1185 = vld [vmem:[%s324 + $0x31] sm:$0xff]
        %v1186 = vld [vmem:[%s324 + $0x41] sm:$0xff]
        %v1187 = vld [vmem:[%s324 + $0x51] sm:$0xff]
        %v1188 = vld [vmem:[%s324 + $0x61] sm:$0xff]
        %v1189 = vld [vmem:[%s324 + $0x71] sm:$0xff]
        %v1190 = vpack.c.bf16 %v1183, %v1182
        %v1191 = vpack.c.bf16 %v1185, %v1184
        %v1192 = vpack.c.bf16 %v1187, %v1186
        %v1193 = vpack.c.bf16 %v1189, %v1188
        %s1194 = scalar_lea.vmem [#allocation6], 288
        %v1195 = vld [vmem:[%s1194] sm:$0xff]
        %v1196 = vld [vmem:[%s1194 + $0x8] sm:$0xff]
        %v1197 = vld [vmem:[%s1194 + $0x10] sm:$0xff]
        %v1198 = vld [vmem:[%s1194 + $0x18] sm:$0xff]
        %v1199 = vld [vmem:[%s1194 + $0x20] sm:$0xff]
        %v1200 = vld [vmem:[%s1194 + $0x28] sm:$0xff]
        %v1201 = vld [vmem:[%s1194 + $0x30] sm:$0xff]
        %v1202 = vld [vmem:[%s1194 + $0x38] sm:$0xff]
        %v1203 = vld [vmem:[%s1194 + $0x40] sm:$0xff]
        %v1204 = vld [vmem:[%s1194 + $0x48] sm:$0xff]
        %v1205 = vld [vmem:[%s1194 + $0x50] sm:$0xff]
        %v1206 = vld [vmem:[%s1194 + $0x58] sm:$0xff]
        %v1219 = vunpack.c.l.b16 %v1195
        %v1220 = vunpack.c.h.b16 %v1195
        %v1221 = vunpack.c.l.b16 %v1196
        %v1222 = vunpack.c.h.b16 %v1196
        %v1223 = vunpack.c.l.b16 %v1197
        %v1224 = vunpack.c.h.b16 %v1197
        %v1225 = vunpack.c.l.b16 %v1198
        %v1226 = vunpack.c.h.b16 %v1198
        %v1227 = vunpack.c.l.b16 %v1199
        %v1228 = vunpack.c.h.b16 %v1199
        %v1229 = vunpack.c.l.b16 %v1200
        %v1230 = vunpack.c.h.b16 %v1200
        %v1231 = vunpack.c.l.b16 %v1201
        %v1232 = vunpack.c.h.b16 %v1201
        %v1233 = vunpack.c.l.b16 %v1202
        %v1234 = vunpack.c.h.b16 %v1202
        %v1235 = vunpack.c.l.b16 %v1203
        %v1236 = vunpack.c.h.b16 %v1203
        %v1237 = vunpack.c.l.b16 %v1204
        %v1238 = vunpack.c.h.b16 %v1204
        %v1239 = vunpack.c.l.b16 %v1205
        %v1240 = vunpack.c.h.b16 %v1205
        %v1241 = vunpack.c.l.b16 %v1206
        %v1242 = vunpack.c.h.b16 %v1206
        %v1243 = vpack.c.b16 %v1221, %v1219
        %v1244 = vpack.c.b16 %v1222, %v1220
        %v1245 = vpack.c.b16 %v1225, %v1223
        %v1246 = vpack.c.b16 %v1226, %v1224
        %v1247 = vpack.c.b16 %v1229, %v1227
        %v1248 = vpack.c.b16 %v1230, %v1228
        %v1249 = vpack.c.b16 %v1233, %v1231
        %v1250 = vpack.c.b16 %v1234, %v1232
        %v1251 = vpack.c.b16 %v1237, %v1235
        %v1252 = vpack.c.b16 %v1238, %v1236
        %v1253 = vpack.c.b16 %v1241, %v1239
        %v1254 = vpack.c.b16 %v1242, %v1240
        %v1268 = vsel %vm313, %v1190, 0
        %v1271 = vsel %vm313, %v1191, 0
        %v1274 = vsel %vm313, %v1192, 0
        %v1277 = vsel %vm313, %v1193, 0
        %1279 = vmatprep.subr.bf16.mxu0 0
        %1280 = vmatpush1.bf16.msra.mxu0 0
        %1281 = vmatprep.subr.bf16.mxu0 0
        %1282 = vmatpush1.bf16.msra.mxu0 0
        %1283 = vmatprep.subr.bf16.mxu0 %v1254
        %1284 = vmatpush1.bf16.msra.mxu0 %v1253
        %1285 = vmatprep.subr.bf16.mxu0 %v1252
        %1286 = vmatpush1.bf16.msra.mxu0 %v1251
        %1287 = vmatprep.subr.bf16.mxu0 %v1250
        %1288 = vmatpush1.bf16.msra.mxu0 %v1249
        %1289 = vmatprep.subr.bf16.mxu0 %v1248
        %1290 = vmatpush1.bf16.msra.mxu0 %v1247
        %1291 = vmatprep.subr.bf16.mxu0 %v1246
        %1292 = vmatpush1.bf16.msra.mxu0 %v1245
        %1293 = vmatprep.subr.bf16.mxu0 %v1244
        %1294 = vmatpush1.bf16.msra.mxu0 %v1243
        %1295 = vmatprep.subr.bf16.mxu0 0
        %1296 = vmatpush2.bf16.msra.mxu0 0
        %1297 = vmatprep.subr.bf16.mxu0 0
        %1298 = vmatpush2.bf16.msra.mxu0 0
        %1299 = vmatprep.subr.bf16.mxu0 0
        %1300 = vmatpush2.bf16.msra.mxu0 0
        %1301 = vmatprep.subr.bf16.mxu0 0
        %1302 = vmatpush2.bf16.msra.mxu0 0
        %1303 = vmatprep.subr.bf16.mxu0 0
        %1304 = vmatpush2.bf16.msra.mxu0 0
        %1305 = vmatprep.subr.bf16.mxu0 0
        %1306 = vmatpush2.bf16.msra.mxu0 0
        %1307 = vmatprep.subr.bf16.mxu0 0
        %1308 = vmatpush2.bf16.msra.mxu0 0
        %1309 = vmatprep.subr.bf16.mxu0 0
        %1310 = vmatpush2.bf16.msra.mxu0 0
        %1311 = vmatprep.mubr.bf16.mxu0 0
        %1312 = vmatmul.mubr.bf16.gmra.mxu0 %v1268
        %v1313 = vpop.f32.mrf.mxu0
        %v1314 = vadd.f32 0.0, %v1313
        %v1315 = vpop.f32.mrf.mxu0
        %v1316 = vadd.f32 0.0, %v1315
        %v1317 = vpop.f32.mrf.mxu0
        %v1318 = vadd.f32 0.0, %v1317
        %v1319 = vpop.f32.mrf.mxu0
        %v1320 = vadd.f32 0.0, %v1319
        %1321 = vmatprep.mubr.bf16.mxu0 0
        %1322 = vmatmul.mubr.bf16.gmra.mxu0 %v1271
        %v1323 = vpop.f32.mrf.mxu0
        %v1324 = vadd.f32 0.0, %v1323
        %v1325 = vpop.f32.mrf.mxu0
        %v1326 = vadd.f32 0.0, %v1325
        %v1327 = vpop.f32.mrf.mxu0
        %v1328 = vadd.f32 0.0, %v1327
        %v1329 = vpop.f32.mrf.mxu0
        %v1330 = vadd.f32 0.0, %v1329
        %1331 = vmatprep.mubr.bf16.mxu0 0
        %1332 = vmatmul.mubr.bf16.gmra.mxu0 %v1274
        %v1333 = vpop.f32.mrf.mxu0
        %v1334 = vadd.f32 0.0, %v1333
        %v1335 = vpop.f32.mrf.mxu0
        %v1336 = vadd.f32 0.0, %v1335
        %v1337 = vpop.f32.mrf.mxu0
        %v1338 = vadd.f32 0.0, %v1337
        %v1339 = vpop.f32.mrf.mxu0
        %v1340 = vadd.f32 0.0, %v1339
        %1341 = vmatprep.mubr.bf16.mxu0 0
        %1342 = vmatmul.mubr.bf16.gmra.mxu0 %v1277
        %v1343 = vpop.f32.mrf.mxu0
        %v1344 = vadd.f32 0.0, %v1343
        %v1345 = vpop.f32.mrf.mxu0
        %v1346 = vadd.f32 0.0, %v1345
        %v1347 = vpop.f32.mrf.mxu0
        %v1348 = vadd.f32 0.0, %v1347
        %v1349 = vpop.f32.mrf.mxu0
        %v1350 = vadd.f32 0.0, %v1349
        %1351 = vdwg.mxu0
        %v1352 = vadd.f32 %v1166, %v1314
        %v1353 = vadd.f32 %v1167, %v1316
        %v1354 = vadd.f32 %v1168, %v1318
        %v1355 = vadd.f32 %v1169, %v1320
        %v1356 = vadd.f32 %v1170, %v1324
        %v1357 = vadd.f32 %v1171, %v1326
        %v1358 = vadd.f32 %v1172, %v1328
        %v1359 = vadd.f32 %v1173, %v1330
        %v1360 = vadd.f32 %v1174, %v1334
        %v1361 = vadd.f32 %v1175, %v1336
        %v1362 = vadd.f32 %v1176, %v1338
        %v1363 = vadd.f32 %v1177, %v1340
        %v1364 = vadd.f32 %v1178, %v1344
        %v1365 = vadd.f32 %v1179, %v1346
        %v1366 = vadd.f32 %v1180, %v1348
        %v1367 = vadd.f32 %v1181, %v1350
        %v1368 = vld [vmem:[%s324 + $0x2] sm:$0xff]
        %v1369 = vld [vmem:[%s324 + $0x12] sm:$0xff]
        %v1370 = vld [vmem:[%s324 + $0x22] sm:$0xff]
        %v1371 = vld [vmem:[%s324 + $0x32] sm:$0xff]
        %v1372 = vld [vmem:[%s324 + $0x42] sm:$0xff]
        %v1373 = vld [vmem:[%s324 + $0x52] sm:$0xff]
        %v1374 = vld [vmem:[%s324 + $0x62] sm:$0xff]
        %v1375 = vld [vmem:[%s324 + $0x72] sm:$0xff]
        %v1376 = vpack.c.bf16 %v1369, %v1368
        %v1377 = vpack.c.bf16 %v1371, %v1370
        %v1378 = vpack.c.bf16 %v1373, %v1372
        %v1379 = vpack.c.bf16 %v1375, %v1374
        %s1380 = scalar_lea.vmem [#allocation6], 384
        %v1381 = vld [vmem:[%s1380] sm:$0xff]
        %v1382 = vld [vmem:[%s1380 + $0x8] sm:$0xff]
        %v1383 = vld [vmem:[%s1380 + $0x10] sm:$0xff]
        %v1384 = vld [vmem:[%s1380 + $0x18] sm:$0xff]
        %v1385 = vld [vmem:[%s1380 + $0x20] sm:$0xff]
        %v1386 = vld [vmem:[%s1380 + $0x28] sm:$0xff]
        %v1387 = vld [vmem:[%s1380 + $0x30] sm:$0xff]
        %v1388 = vld [vmem:[%s1380 + $0x38] sm:$0xff]
        %v1389 = vld [vmem:[%s1380 + $0x40] sm:$0xff]
        %v1390 = vld [vmem:[%s1380 + $0x48] sm:$0xff]
        %v1391 = vld [vmem:[%s1380 + $0x50] sm:$0xff]
        %v1392 = vld [vmem:[%s1380 + $0x58] sm:$0xff]
        %v1405 = vunpack.c.l.b16 %v1381
        %v1406 = vunpack.c.h.b16 %v1381
        %v1407 = vunpack.c.l.b16 %v1382
        %v1408 = vunpack.c.h.b16 %v1382
        %v1409 = vunpack.c.l.b16 %v1383
        %v1410 = vunpack.c.h.b16 %v1383
        %v1411 = vunpack.c.l.b16 %v1384
        %v1412 = vunpack.c.h.b16 %v1384
        %v1413 = vunpack.c.l.b16 %v1385
        %v1414 = vunpack.c.h.b16 %v1385
        %v1415 = vunpack.c.l.b16 %v1386
        %v1416 = vunpack.c.h.b16 %v1386
        %v1417 = vunpack.c.l.b16 %v1387
        %v1418 = vunpack.c.h.b16 %v1387
        %v1419 = vunpack.c.l.b16 %v1388
        %v1420 = vunpack.c.h.b16 %v1388
        %v1421 = vunpack.c.l.b16 %v1389
        %v1422 = vunpack.c.h.b16 %v1389
        %v1423 = vunpack.c.l.b16 %v1390
        %v1424 = vunpack.c.h.b16 %v1390
        %v1425 = vunpack.c.l.b16 %v1391
        %v1426 = vunpack.c.h.b16 %v1391
        %v1427 = vunpack.c.l.b16 %v1392
        %v1428 = vunpack.c.h.b16 %v1392
        %v1429 = vpack.c.b16 %v1407, %v1405
        %v1430 = vpack.c.b16 %v1408, %v1406
        %v1431 = vpack.c.b16 %v1411, %v1409
        %v1432 = vpack.c.b16 %v1412, %v1410
        %v1433 = vpack.c.b16 %v1415, %v1413
        %v1434 = vpack.c.b16 %v1416, %v1414
        %v1435 = vpack.c.b16 %v1419, %v1417
        %v1436 = vpack.c.b16 %v1420, %v1418
        %v1437 = vpack.c.b16 %v1423, %v1421
        %v1438 = vpack.c.b16 %v1424, %v1422
        %v1439 = vpack.c.b16 %v1427, %v1425
        %v1440 = vpack.c.b16 %v1428, %v1426
        %v1454 = vsel %vm313, %v1376, 0
        %v1457 = vsel %vm313, %v1377, 0
        %v1460 = vsel %vm313, %v1378, 0
        %v1463 = vsel %vm313, %v1379, 0
        %1465 = vmatprep.subr.bf16.mxu0 0
        %1466 = vmatpush1.bf16.msra.mxu0 0
        %1467 = vmatprep.subr.bf16.mxu0 0
        %1468 = vmatpush1.bf16.msra.mxu0 0
        %1469 = vmatprep.subr.bf16.mxu0 %v1440
        %1470 = vmatpush1.bf16.msra.mxu0 %v1439
        %1471 = vmatprep.subr.bf16.mxu0 %v1438
        %1472 = vmatpush1.bf16.msra.mxu0 %v1437
        %1473 = vmatprep.subr.bf16.mxu0 %v1436
        %1474 = vmatpush1.bf16.msra.mxu0 %v1435
        %1475 = vmatprep.subr.bf16.mxu0 %v1434
        %1476 = vmatpush1.bf16.msra.mxu0 %v1433
        %1477 = vmatprep.subr.bf16.mxu0 %v1432
        %1478 = vmatpush1.bf16.msra.mxu0 %v1431
        %1479 = vmatprep.subr.bf16.mxu0 %v1430
        %1480 = vmatpush1.bf16.msra.mxu0 %v1429
        %1481 = vmatprep.subr.bf16.mxu0 0
        %1482 = vmatpush2.bf16.msra.mxu0 0
        %1483 = vmatprep.subr.bf16.mxu0 0
        %1484 = vmatpush2.bf16.msra.mxu0 0
        %1485 = vmatprep.subr.bf16.mxu0 0
        %1486 = vmatpush2.bf16.msra.mxu0 0
        %1487 = vmatprep.subr.bf16.mxu0 0
        %1488 = vmatpush2.bf16.msra.mxu0 0
        %1489 = vmatprep.subr.bf16.mxu0 0
        %1490 = vmatpush2.bf16.msra.mxu0 0
        %1491 = vmatprep.subr.bf16.mxu0 0
        %1492 = vmatpush2.bf16.msra.mxu0 0
        %1493 = vmatprep.subr.bf16.mxu0 0
        %1494 = vmatpush2.bf16.msra.mxu0 0
        %1495 = vmatprep.subr.bf16.mxu0 0
        %1496 = vmatpush2.bf16.msra.mxu0 0
        %1497 = vmatprep.mubr.bf16.mxu0 0
        %1498 = vmatmul.mubr.bf16.gmra.mxu0 %v1454
        %v1499 = vpop.f32.mrf.mxu0
        %v1500 = vadd.f32 0.0, %v1499
        %v1501 = vpop.f32.mrf.mxu0
        %v1502 = vadd.f32 0.0, %v1501
        %v1503 = vpop.f32.mrf.mxu0
        %v1504 = vadd.f32 0.0, %v1503
        %v1505 = vpop.f32.mrf.mxu0
        %v1506 = vadd.f32 0.0, %v1505
        %1507 = vmatprep.mubr.bf16.mxu0 0
        %1508 = vmatmul.mubr.bf16.gmra.mxu0 %v1457
        %v1509 = vpop.f32.mrf.mxu0
        %v1510 = vadd.f32 0.0, %v1509
        %v1511 = vpop.f32.mrf.mxu0
        %v1512 = vadd.f32 0.0, %v1511
        %v1513 = vpop.f32.mrf.mxu0
        %v1514 = vadd.f32 0.0, %v1513
        %v1515 = vpop.f32.mrf.mxu0
        %v1516 = vadd.f32 0.0, %v1515
        %1517 = vmatprep.mubr.bf16.mxu0 0
        %1518 = vmatmul.mubr.bf16.gmra.mxu0 %v1460
        %v1519 = vpop.f32.mrf.mxu0
        %v1520 = vadd.f32 0.0, %v1519
        %v1521 = vpop.f32.mrf.mxu0
        %v1522 = vadd.f32 0.0, %v1521
        %v1523 = vpop.f32.mrf.mxu0
        %v1524 = vadd.f32 0.0, %v1523
        %v1525 = vpop.f32.mrf.mxu0
        %v1526 = vadd.f32 0.0, %v1525
        %1527 = vmatprep.mubr.bf16.mxu0 0
        %1528 = vmatmul.mubr.bf16.gmra.mxu0 %v1463
        %v1529 = vpop.f32.mrf.mxu0
        %v1530 = vadd.f32 0.0, %v1529
        %v1531 = vpop.f32.mrf.mxu0
        %v1532 = vadd.f32 0.0, %v1531
        %v1533 = vpop.f32.mrf.mxu0
        %v1534 = vadd.f32 0.0, %v1533
        %v1535 = vpop.f32.mrf.mxu0
        %v1536 = vadd.f32 0.0, %v1535
        %1537 = vdwg.mxu0
        %v1538 = vadd.f32 %v1352, %v1500
        %v1539 = vadd.f32 %v1353, %v1502
        %v1540 = vadd.f32 %v1354, %v1504
        %v1541 = vadd.f32 %v1355, %v1506
        %v1542 = vadd.f32 %v1356, %v1510
        %v1543 = vadd.f32 %v1357, %v1512
        %v1544 = vadd.f32 %v1358, %v1514
        %v1545 = vadd.f32 %v1359, %v1516
        %v1546 = vadd.f32 %v1360, %v1520
        %v1547 = vadd.f32 %v1361, %v1522
        %v1548 = vadd.f32 %v1362, %v1524
        %v1549 = vadd.f32 %v1363, %v1526
        %v1550 = vadd.f32 %v1364, %v1530
        %v1551 = vadd.f32 %v1365, %v1532
        %v1552 = vadd.f32 %v1366, %v1534
        %v1553 = vadd.f32 %v1367, %v1536
        %v1554 = vld [vmem:[%s324 + $0x3] sm:$0xff]
        %v1555 = vld [vmem:[%s324 + $0x13] sm:$0xff]
        %v1556 = vld [vmem:[%s324 + $0x23] sm:$0xff]
        %v1557 = vld [vmem:[%s324 + $0x33] sm:$0xff]
        %v1558 = vld [vmem:[%s324 + $0x43] sm:$0xff]
        %v1559 = vld [vmem:[%s324 + $0x53] sm:$0xff]
        %v1560 = vld [vmem:[%s324 + $0x63] sm:$0xff]
        %v1561 = vld [vmem:[%s324 + $0x73] sm:$0xff]
        %v1562 = vpack.c.bf16 %v1555, %v1554
        %v1563 = vpack.c.bf16 %v1557, %v1556
        %v1564 = vpack.c.bf16 %v1559, %v1558
        %v1565 = vpack.c.bf16 %v1561, %v1560
        %s1566 = scalar_lea.vmem [#allocation6], 480
        %v1567 = vld [vmem:[%s1566] sm:$0xff]
        %v1568 = vld [vmem:[%s1566 + $0x8] sm:$0xff]
        %v1569 = vld [vmem:[%s1566 + $0x10] sm:$0xff]
        %v1570 = vld [vmem:[%s1566 + $0x18] sm:$0xff]
        %v1571 = vld [vmem:[%s1566 + $0x20] sm:$0xff]
        %v1572 = vld [vmem:[%s1566 + $0x28] sm:$0xff]
        %v1573 = vld [vmem:[%s1566 + $0x30] sm:$0xff]
        %v1574 = vld [vmem:[%s1566 + $0x38] sm:$0xff]
        %v1575 = vld [vmem:[%s1566 + $0x40] sm:$0xff]
        %v1576 = vld [vmem:[%s1566 + $0x48] sm:$0xff]
        %v1577 = vld [vmem:[%s1566 + $0x50] sm:$0xff]
        %v1578 = vld [vmem:[%s1566 + $0x58] sm:$0xff]
        %v1591 = vunpack.c.l.b16 %v1567
        %v1592 = vunpack.c.h.b16 %v1567
        %v1593 = vunpack.c.l.b16 %v1568
        %v1594 = vunpack.c.h.b16 %v1568
        %v1595 = vunpack.c.l.b16 %v1569
        %v1596 = vunpack.c.h.b16 %v1569
        %v1597 = vunpack.c.l.b16 %v1570
        %v1598 = vunpack.c.h.b16 %v1570
        %v1599 = vunpack.c.l.b16 %v1571
        %v1600 = vunpack.c.h.b16 %v1571
        %v1601 = vunpack.c.l.b16 %v1572
        %v1602 = vunpack.c.h.b16 %v1572
        %v1603 = vunpack.c.l.b16 %v1573
        %v1604 = vunpack.c.h.b16 %v1573
        %v1605 = vunpack.c.l.b16 %v1574
        %v1606 = vunpack.c.h.b16 %v1574
        %v1607 = vunpack.c.l.b16 %v1575
        %v1608 = vunpack.c.h.b16 %v1575
        %v1609 = vunpack.c.l.b16 %v1576
        %v1610 = vunpack.c.h.b16 %v1576
        %v1611 = vunpack.c.l.b16 %v1577
        %v1612 = vunpack.c.h.b16 %v1577
        %v1613 = vunpack.c.l.b16 %v1578
        %v1614 = vunpack.c.h.b16 %v1578
        %v1615 = vpack.c.b16 %v1593, %v1591
        %v1616 = vpack.c.b16 %v1594, %v1592
        %v1617 = vpack.c.b16 %v1597, %v1595
        %v1618 = vpack.c.b16 %v1598, %v1596
        %v1619 = vpack.c.b16 %v1601, %v1599
        %v1620 = vpack.c.b16 %v1602, %v1600
        %v1621 = vpack.c.b16 %v1605, %v1603
        %v1622 = vpack.c.b16 %v1606, %v1604
        %v1623 = vpack.c.b16 %v1609, %v1607
        %v1624 = vpack.c.b16 %v1610, %v1608
        %v1625 = vpack.c.b16 %v1613, %v1611
        %v1626 = vpack.c.b16 %v1614, %v1612
        %v1640 = vsel %vm313, %v1562, 0
        %v1643 = vsel %vm313, %v1563, 0
        %v1646 = vsel %vm313, %v1564, 0
        %v1649 = vsel %vm313, %v1565, 0
        %1651 = vmatprep.subr.bf16.mxu0 0
        %1652 = vmatpush1.bf16.msra.mxu0 0
        %1653 = vmatprep.subr.bf16.mxu0 0
        %1654 = vmatpush1.bf16.msra.mxu0 0
        %1655 = vmatprep.subr.bf16.mxu0 %v1626
        %1656 = vmatpush1.bf16.msra.mxu0 %v1625
        %1657 = vmatprep.subr.bf16.mxu0 %v1624
        %1658 = vmatpush1.bf16.msra.mxu0 %v1623
        %1659 = vmatprep.subr.bf16.mxu0 %v1622
        %1660 = vmatpush1.bf16.msra.mxu0 %v1621
        %1661 = vmatprep.subr.bf16.mxu0 %v1620
        %1662 = vmatpush1.bf16.msra.mxu0 %v1619
        %1663 = vmatprep.subr.bf16.mxu0 %v1618
        %1664 = vmatpush1.bf16.msra.mxu0 %v1617
        %1665 = vmatprep.subr.bf16.mxu0 %v1616
        %1666 = vmatpush1.bf16.msra.mxu0 %v1615
        %1667 = vmatprep.subr.bf16.mxu0 0
        %1668 = vmatpush2.bf16.msra.mxu0 0
        %1669 = vmatprep.subr.bf16.mxu0 0
        %1670 = vmatpush2.bf16.msra.mxu0 0
        %1671 = vmatprep.subr.bf16.mxu0 0
        %1672 = vmatpush2.bf16.msra.mxu0 0
        %1673 = vmatprep.subr.bf16.mxu0 0
        %1674 = vmatpush2.bf16.msra.mxu0 0
        %1675 = vmatprep.subr.bf16.mxu0 0
        %1676 = vmatpush2.bf16.msra.mxu0 0
        %1677 = vmatprep.subr.bf16.mxu0 0
        %1678 = vmatpush2.bf16.msra.mxu0 0
        %1679 = vmatprep.subr.bf16.mxu0 0
        %1680 = vmatpush2.bf16.msra.mxu0 0
        %1681 = vmatprep.subr.bf16.mxu0 0
        %1682 = vmatpush2.bf16.msra.mxu0 0
        %1683 = vmatprep.mubr.bf16.mxu0 0
        %1684 = vmatmul.mubr.bf16.gmra.mxu0 %v1640
        %v1685 = vpop.f32.mrf.mxu0
        %v1686 = vadd.f32 0.0, %v1685
        %v1687 = vpop.f32.mrf.mxu0
        %v1688 = vadd.f32 0.0, %v1687
        %v1689 = vpop.f32.mrf.mxu0
        %v1690 = vadd.f32 0.0, %v1689
        %v1691 = vpop.f32.mrf.mxu0
        %v1692 = vadd.f32 0.0, %v1691
        %1693 = vmatprep.mubr.bf16.mxu0 0
        %1694 = vmatmul.mubr.bf16.gmra.mxu0 %v1643
        %v1695 = vpop.f32.mrf.mxu0
        %v1696 = vadd.f32 0.0, %v1695
        %v1697 = vpop.f32.mrf.mxu0
        %v1698 = vadd.f32 0.0, %v1697
        %v1699 = vpop.f32.mrf.mxu0
        %v1700 = vadd.f32 0.0, %v1699
        %v1701 = vpop.f32.mrf.mxu0
        %v1702 = vadd.f32 0.0, %v1701
        %1703 = vmatprep.mubr.bf16.mxu0 0
        %1704 = vmatmul.mubr.bf16.gmra.mxu0 %v1646
        %v1705 = vpop.f32.mrf.mxu0
        %v1706 = vadd.f32 0.0, %v1705
        %v1707 = vpop.f32.mrf.mxu0
        %v1708 = vadd.f32 0.0, %v1707
        %v1709 = vpop.f32.mrf.mxu0
        %v1710 = vadd.f32 0.0, %v1709
        %v1711 = vpop.f32.mrf.mxu0
        %v1712 = vadd.f32 0.0, %v1711
        %1713 = vmatprep.mubr.bf16.mxu0 0
        %1714 = vmatmul.mubr.bf16.gmra.mxu0 %v1649
        %v1715 = vpop.f32.mrf.mxu0
        %v1716 = vadd.f32 0.0, %v1715
        %v1717 = vpop.f32.mrf.mxu0
        %v1718 = vadd.f32 0.0, %v1717
        %v1719 = vpop.f32.mrf.mxu0
        %v1720 = vadd.f32 0.0, %v1719
        %v1721 = vpop.f32.mrf.mxu0
        %v1722 = vadd.f32 0.0, %v1721
        %1723 = vdwg.mxu0
        %v1724 = vadd.f32 %v1538, %v1686
        %v1725 = vadd.f32 %v1539, %v1688
        %v1726 = vadd.f32 %v1540, %v1690
        %v1727 = vadd.f32 %v1541, %v1692
        %v1728 = vadd.f32 %v1542, %v1696
        %v1729 = vadd.f32 %v1543, %v1698
        %v1730 = vadd.f32 %v1544, %v1700
        %v1731 = vadd.f32 %v1545, %v1702
        %v1732 = vadd.f32 %v1546, %v1706
        %v1733 = vadd.f32 %v1547, %v1708
        %v1734 = vadd.f32 %v1548, %v1710
        %v1735 = vadd.f32 %v1549, %v1712
        %v1736 = vadd.f32 %v1550, %v1716
        %v1737 = vadd.f32 %v1551, %v1718
        %v1738 = vadd.f32 %v1552, %v1720
        %v1739 = vadd.f32 %v1553, %v1722
        %s1740 = scalar_lea.vmem [#allocation2], 48
        %v1741 = vld [vmem:[%s1740 + $0x1] sm:$0xff]
        %v1742 = vld [vmem:[%s1740 + $0x11] sm:$0xff]
        %v1743 = vld [vmem:[%s1740 + $0x21] sm:$0xff]
        %v1744 = vld [vmem:[%s1740 + $0x31] sm:$0xff]
        %v1745 = vld [vmem:[%s1740 + $0x41] sm:$0xff]
        %v1746 = vld [vmem:[%s1740 + $0x51] sm:$0xff]
        %v1747 = vld [vmem:[%s1740 + $0x61] sm:$0xff]
        %v1748 = vld [vmem:[%s1740 + $0x71] sm:$0xff]
        %v1749 = vpack.c.bf16 %v1742, %v1741
        %v1750 = vpack.c.bf16 %v1744, %v1743
        %v1751 = vpack.c.bf16 %v1746, %v1745
        %v1752 = vpack.c.bf16 %v1748, %v1747
        %s1753 = scalar_lea.vmem [#allocation6], 576
        %v1754 = vld [vmem:[%s1753] sm:$0xff]
        %v1755 = vld [vmem:[%s1753 + $0x8] sm:$0xff]
        %v1756 = vld [vmem:[%s1753 + $0x10] sm:$0xff]
        %v1757 = vld [vmem:[%s1753 + $0x18] sm:$0xff]
        %v1758 = vld [vmem:[%s1753 + $0x20] sm:$0xff]
        %v1759 = vld [vmem:[%s1753 + $0x28] sm:$0xff]
        %v1760 = vld [vmem:[%s1753 + $0x30] sm:$0xff]
        %v1761 = vld [vmem:[%s1753 + $0x38] sm:$0xff]
        %v1762 = vld [vmem:[%s1753 + $0x40] sm:$0xff]
        %v1763 = vld [vmem:[%s1753 + $0x48] sm:$0xff]
        %v1764 = vld [vmem:[%s1753 + $0x50] sm:$0xff]
        %v1765 = vld [vmem:[%s1753 + $0x58] sm:$0xff]
        %v1778 = vunpack.c.l.b16 %v1754
        %v1779 = vunpack.c.h.b16 %v1754
        %v1780 = vunpack.c.l.b16 %v1755
        %v1781 = vunpack.c.h.b16 %v1755
        %v1782 = vunpack.c.l.b16 %v1756
        %v1783 = vunpack.c.h.b16 %v1756
        %v1784 = vunpack.c.l.b16 %v1757
        %v1785 = vunpack.c.h.b16 %v1757
        %v1786 = vunpack.c.l.b16 %v1758
        %v1787 = vunpack.c.h.b16 %v1758
        %v1788 = vunpack.c.l.b16 %v1759
        %v1789 = vunpack.c.h.b16 %v1759
        %v1790 = vunpack.c.l.b16 %v1760
        %v1791 = vunpack.c.h.b16 %v1760
        %v1792 = vunpack.c.l.b16 %v1761
        %v1793 = vunpack.c.h.b16 %v1761
        %v1794 = vunpack.c.l.b16 %v1762
        %v1795 = vunpack.c.h.b16 %v1762
        %v1796 = vunpack.c.l.b16 %v1763
        %v1797 = vunpack.c.h.b16 %v1763
        %v1798 = vunpack.c.l.b16 %v1764
        %v1799 = vunpack.c.h.b16 %v1764
        %v1800 = vunpack.c.l.b16 %v1765
        %v1801 = vunpack.c.h.b16 %v1765
        %v1802 = vpack.c.b16 %v1780, %v1778
        %v1803 = vpack.c.b16 %v1781, %v1779
        %v1804 = vpack.c.b16 %v1784, %v1782
        %v1805 = vpack.c.b16 %v1785, %v1783
        %v1806 = vpack.c.b16 %v1788, %v1786
        %v1807 = vpack.c.b16 %v1789, %v1787
        %v1808 = vpack.c.b16 %v1792, %v1790
        %v1809 = vpack.c.b16 %v1793, %v1791
        %v1810 = vpack.c.b16 %v1796, %v1794
        %v1811 = vpack.c.b16 %v1797, %v1795
        %v1812 = vpack.c.b16 %v1800, %v1798
        %v1813 = vpack.c.b16 %v1801, %v1799
        %v1827 = vsel %vm313, %v1749, 0
        %v1830 = vsel %vm313, %v1750, 0
        %v1833 = vsel %vm313, %v1751, 0
        %v1836 = vsel %vm313, %v1752, 0
        %1838 = vmatprep.subr.bf16.mxu0 0
        %1839 = vmatpush1.bf16.msra.mxu0 0
        %1840 = vmatprep.subr.bf16.mxu0 0
        %1841 = vmatpush1.bf16.msra.mxu0 0
        %1842 = vmatprep.subr.bf16.mxu0 %v1813
        %1843 = vmatpush1.bf16.msra.mxu0 %v1812
        %1844 = vmatprep.subr.bf16.mxu0 %v1811
        %1845 = vmatpush1.bf16.msra.mxu0 %v1810
        %1846 = vmatprep.subr.bf16.mxu0 %v1809
        %1847 = vmatpush1.bf16.msra.mxu0 %v1808
        %1848 = vmatprep.subr.bf16.mxu0 %v1807
        %1849 = vmatpush1.bf16.msra.mxu0 %v1806
        %1850 = vmatprep.subr.bf16.mxu0 %v1805
        %1851 = vmatpush1.bf16.msra.mxu0 %v1804
        %1852 = vmatprep.subr.bf16.mxu0 %v1803
        %1853 = vmatpush1.bf16.msra.mxu0 %v1802
        %1854 = vmatprep.subr.bf16.mxu0 0
        %1855 = vmatpush2.bf16.msra.mxu0 0
        %1856 = vmatprep.subr.bf16.mxu0 0
        %1857 = vmatpush2.bf16.msra.mxu0 0
        %1858 = vmatprep.subr.bf16.mxu0 0
        %1859 = vmatpush2.bf16.msra.mxu0 0
        %1860 = vmatprep.subr.bf16.mxu0 0
        %1861 = vmatpush2.bf16.msra.mxu0 0
        %1862 = vmatprep.subr.bf16.mxu0 0
        %1863 = vmatpush2.bf16.msra.mxu0 0
        %1864 = vmatprep.subr.bf16.mxu0 0
        %1865 = vmatpush2.bf16.msra.mxu0 0
        %1866 = vmatprep.subr.bf16.mxu0 0
        %1867 = vmatpush2.bf16.msra.mxu0 0
        %1868 = vmatprep.subr.bf16.mxu0 0
        %1869 = vmatpush2.bf16.msra.mxu0 0
        %1870 = vmatprep.mubr.bf16.mxu0 0
        %1871 = vmatmul.mubr.bf16.gmra.mxu0 %v1827
        %v1872 = vpop.f32.mrf.mxu0
        %v1873 = vadd.f32 0.0, %v1872
        %v1874 = vpop.f32.mrf.mxu0
        %v1875 = vadd.f32 0.0, %v1874
        %v1876 = vpop.f32.mrf.mxu0
        %v1877 = vadd.f32 0.0, %v1876
        %v1878 = vpop.f32.mrf.mxu0
        %v1879 = vadd.f32 0.0, %v1878
        %1880 = vmatprep.mubr.bf16.mxu0 0
        %1881 = vmatmul.mubr.bf16.gmra.mxu0 %v1830
        %v1882 = vpop.f32.mrf.mxu0
        %v1883 = vadd.f32 0.0, %v1882
        %v1884 = vpop.f32.mrf.mxu0
        %v1885 = vadd.f32 0.0, %v1884
        %v1886 = vpop.f32.mrf.mxu0
        %v1887 = vadd.f32 0.0, %v1886
        %v1888 = vpop.f32.mrf.mxu0
        %v1889 = vadd.f32 0.0, %v1888
        %1890 = vmatprep.mubr.bf16.mxu0 0
        %1891 = vmatmul.mubr.bf16.gmra.mxu0 %v1833
        %v1892 = vpop.f32.mrf.mxu0
        %v1893 = vadd.f32 0.0, %v1892
        %v1894 = vpop.f32.mrf.mxu0
        %v1895 = vadd.f32 0.0, %v1894
        %v1896 = vpop.f32.mrf.mxu0
        %v1897 = vadd.f32 0.0, %v1896
        %v1898 = vpop.f32.mrf.mxu0
        %v1899 = vadd.f32 0.0, %v1898
        %1900 = vmatprep.mubr.bf16.mxu0 0
        %1901 = vmatmul.mubr.bf16.gmra.mxu0 %v1836
        %v1902 = vpop.f32.mrf.mxu0
        %v1903 = vadd.f32 0.0, %v1902
        %v1904 = vpop.f32.mrf.mxu0
        %v1905 = vadd.f32 0.0, %v1904
        %v1906 = vpop.f32.mrf.mxu0
        %v1907 = vadd.f32 0.0, %v1906
        %v1908 = vpop.f32.mrf.mxu0
        %v1909 = vadd.f32 0.0, %v1908
        %1910 = vdwg.mxu0
        %v1911 = vadd.f32 %v1724, %v1873
        %v1912 = vadd.f32 %v1725, %v1875
        %v1913 = vadd.f32 %v1726, %v1877
        %v1914 = vadd.f32 %v1727, %v1879
        %v1915 = vadd.f32 %v1728, %v1883
        %v1916 = vadd.f32 %v1729, %v1885
        %v1917 = vadd.f32 %v1730, %v1887
        %v1918 = vadd.f32 %v1731, %v1889
        %v1919 = vadd.f32 %v1732, %v1893
        %v1920 = vadd.f32 %v1733, %v1895
        %v1921 = vadd.f32 %v1734, %v1897
        %v1922 = vadd.f32 %v1735, %v1899
        %v1923 = vadd.f32 %v1736, %v1903
        %v1924 = vadd.f32 %v1737, %v1905
        %v1925 = vadd.f32 %v1738, %v1907
        %v1926 = vadd.f32 %v1739, %v1909
        %v1927 = vld [vmem:[%s1740 + $0x2] sm:$0xff]
        %v1928 = vld [vmem:[%s1740 + $0x12] sm:$0xff]
        %v1929 = vld [vmem:[%s1740 + $0x22] sm:$0xff]
        %v1930 = vld [vmem:[%s1740 + $0x32] sm:$0xff]
        %v1931 = vld [vmem:[%s1740 + $0x42] sm:$0xff]
        %v1932 = vld [vmem:[%s1740 + $0x52] sm:$0xff]
        %v1933 = vld [vmem:[%s1740 + $0x62] sm:$0xff]
        %v1934 = vld [vmem:[%s1740 + $0x72] sm:$0xff]
        %v1935 = vpack.c.bf16 %v1928, %v1927
        %v1936 = vpack.c.bf16 %v1930, %v1929
        %v1937 = vpack.c.bf16 %v1932, %v1931
        %v1938 = vpack.c.bf16 %v1934, %v1933
        %s1939 = scalar_lea.vmem [#allocation6], 672
        %v1940 = vld [vmem:[%s1939] sm:$0xff]
        %v1941 = vld [vmem:[%s1939 + $0x8] sm:$0xff]
        %v1942 = vld [vmem:[%s1939 + $0x10] sm:$0xff]
        %v1943 = vld [vmem:[%s1939 + $0x18] sm:$0xff]
        %v1944 = vld [vmem:[%s1939 + $0x20] sm:$0xff]
        %v1945 = vld [vmem:[%s1939 + $0x28] sm:$0xff]
        %v1946 = vld [vmem:[%s1939 + $0x30] sm:$0xff]
        %v1947 = vld [vmem:[%s1939 + $0x38] sm:$0xff]
        %v1948 = vld [vmem:[%s1939 + $0x40] sm:$0xff]
        %v1949 = vld [vmem:[%s1939 + $0x48] sm:$0xff]
        %v1950 = vld [vmem:[%s1939 + $0x50] sm:$0xff]
        %v1951 = vld [vmem:[%s1939 + $0x58] sm:$0xff]
        %v1964 = vunpack.c.l.b16 %v1940
        %v1965 = vunpack.c.h.b16 %v1940
        %v1966 = vunpack.c.l.b16 %v1941
        %v1967 = vunpack.c.h.b16 %v1941
        %v1968 = vunpack.c.l.b16 %v1942
        %v1969 = vunpack.c.h.b16 %v1942
        %v1970 = vunpack.c.l.b16 %v1943
        %v1971 = vunpack.c.h.b16 %v1943
        %v1972 = vunpack.c.l.b16 %v1944
        %v1973 = vunpack.c.h.b16 %v1944
        %v1974 = vunpack.c.l.b16 %v1945
        %v1975 = vunpack.c.h.b16 %v1945
        %v1976 = vunpack.c.l.b16 %v1946
        %v1977 = vunpack.c.h.b16 %v1946
        %v1978 = vunpack.c.l.b16 %v1947
        %v1979 = vunpack.c.h.b16 %v1947
        %v1980 = vunpack.c.l.b16 %v1948
        %v1981 = vunpack.c.h.b16 %v1948
        %v1982 = vunpack.c.l.b16 %v1949
        %v1983 = vunpack.c.h.b16 %v1949
        %v1984 = vunpack.c.l.b16 %v1950
        %v1985 = vunpack.c.h.b16 %v1950
        %v1986 = vunpack.c.l.b16 %v1951
        %v1987 = vunpack.c.h.b16 %v1951
        %v1988 = vpack.c.b16 %v1966, %v1964
        %v1989 = vpack.c.b16 %v1967, %v1965
        %v1990 = vpack.c.b16 %v1970, %v1968
        %v1991 = vpack.c.b16 %v1971, %v1969
        %v1992 = vpack.c.b16 %v1974, %v1972
        %v1993 = vpack.c.b16 %v1975, %v1973
        %v1994 = vpack.c.b16 %v1978, %v1976
        %v1995 = vpack.c.b16 %v1979, %v1977
        %v1996 = vpack.c.b16 %v1982, %v1980
        %v1997 = vpack.c.b16 %v1983, %v1981
        %v1998 = vpack.c.b16 %v1986, %v1984
        %v1999 = vpack.c.b16 %v1987, %v1985
        %v2013 = vsel %vm313, %v1935, 0
        %v2016 = vsel %vm313, %v1936, 0
        %v2019 = vsel %vm313, %v1937, 0
        %v2022 = vsel %vm313, %v1938, 0
        %2024 = vmatprep.subr.bf16.mxu0 0
        %2025 = vmatpush1.bf16.msra.mxu0 0
        %2026 = vmatprep.subr.bf16.mxu0 0
        %2027 = vmatpush1.bf16.msra.mxu0 0
        %2028 = vmatprep.subr.bf16.mxu0 %v1999
        %2029 = vmatpush1.bf16.msra.mxu0 %v1998
        %2030 = vmatprep.subr.bf16.mxu0 %v1997
        %2031 = vmatpush1.bf16.msra.mxu0 %v1996
        %2032 = vmatprep.subr.bf16.mxu0 %v1995
        %2033 = vmatpush1.bf16.msra.mxu0 %v1994
        %2034 = vmatprep.subr.bf16.mxu0 %v1993
        %2035 = vmatpush1.bf16.msra.mxu0 %v1992
        %2036 = vmatprep.subr.bf16.mxu0 %v1991
        %2037 = vmatpush1.bf16.msra.mxu0 %v1990
        %2038 = vmatprep.subr.bf16.mxu0 %v1989
        %2039 = vmatpush1.bf16.msra.mxu0 %v1988
        %2040 = vmatprep.subr.bf16.mxu0 0
        %2041 = vmatpush2.bf16.msra.mxu0 0
        %2042 = vmatprep.subr.bf16.mxu0 0
        %2043 = vmatpush2.bf16.msra.mxu0 0
        %2044 = vmatprep.subr.bf16.mxu0 0
        %2045 = vmatpush2.bf16.msra.mxu0 0
        %2046 = vmatprep.subr.bf16.mxu0 0
        %2047 = vmatpush2.bf16.msra.mxu0 0
        %2048 = vmatprep.subr.bf16.mxu0 0
        %2049 = vmatpush2.bf16.msra.mxu0 0
        %2050 = vmatprep.subr.bf16.mxu0 0
        %2051 = vmatpush2.bf16.msra.mxu0 0
        %2052 = vmatprep.subr.bf16.mxu0 0
        %2053 = vmatpush2.bf16.msra.mxu0 0
        %2054 = vmatprep.subr.bf16.mxu0 0
        %2055 = vmatpush2.bf16.msra.mxu0 0
        %2056 = vmatprep.mubr.bf16.mxu0 0
        %2057 = vmatmul.mubr.bf16.gmra.mxu0 %v2013
        %v2058 = vpop.f32.mrf.mxu0
        %v2059 = vadd.f32 0.0, %v2058
        %v2060 = vpop.f32.mrf.mxu0
        %v2061 = vadd.f32 0.0, %v2060
        %v2062 = vpop.f32.mrf.mxu0
        %v2063 = vadd.f32 0.0, %v2062
        %v2064 = vpop.f32.mrf.mxu0
        %v2065 = vadd.f32 0.0, %v2064
        %2066 = vmatprep.mubr.bf16.mxu0 0
        %2067 = vmatmul.mubr.bf16.gmra.mxu0 %v2016
        %v2068 = vpop.f32.mrf.mxu0
        %v2069 = vadd.f32 0.0, %v2068
        %v2070 = vpop.f32.mrf.mxu0
        %v2071 = vadd.f32 0.0, %v2070
        %v2072 = vpop.f32.mrf.mxu0
        %v2073 = vadd.f32 0.0, %v2072
        %v2074 = vpop.f32.mrf.mxu0
        %v2075 = vadd.f32 0.0, %v2074
        %2076 = vmatprep.mubr.bf16.mxu0 0
        %2077 = vmatmul.mubr.bf16.gmra.mxu0 %v2019
        %v2078 = vpop.f32.mrf.mxu0
        %v2079 = vadd.f32 0.0, %v2078
        %v2080 = vpop.f32.mrf.mxu0
        %v2081 = vadd.f32 0.0, %v2080
        %v2082 = vpop.f32.mrf.mxu0
        %v2083 = vadd.f32 0.0, %v2082
        %v2084 = vpop.f32.mrf.mxu0
        %v2085 = vadd.f32 0.0, %v2084
        %2086 = vmatprep.mubr.bf16.mxu0 0
        %2087 = vmatmul.mubr.bf16.gmra.mxu0 %v2022
        %v2088 = vpop.f32.mrf.mxu0
        %v2089 = vadd.f32 0.0, %v2088
        %v2090 = vpop.f32.mrf.mxu0
        %v2091 = vadd.f32 0.0, %v2090
        %v2092 = vpop.f32.mrf.mxu0
        %v2093 = vadd.f32 0.0, %v2092
        %v2094 = vpop.f32.mrf.mxu0
        %v2095 = vadd.f32 0.0, %v2094
        %2096 = vdwg.mxu0
        %v2097 = vadd.f32 %v1911, %v2059
        %v2098 = vadd.f32 %v1912, %v2061
        %v2099 = vadd.f32 %v1913, %v2063
        %v2100 = vadd.f32 %v1914, %v2065
        %v2101 = vadd.f32 %v1915, %v2069
        %v2102 = vadd.f32 %v1916, %v2071
        %v2103 = vadd.f32 %v1917, %v2073
        %v2104 = vadd.f32 %v1918, %v2075
        %v2105 = vadd.f32 %v1919, %v2079
        %v2106 = vadd.f32 %v1920, %v2081
        %v2107 = vadd.f32 %v1921, %v2083
        %v2108 = vadd.f32 %v1922, %v2085
        %v2109 = vadd.f32 %v1923, %v2089
        %v2110 = vadd.f32 %v1924, %v2091
        %v2111 = vadd.f32 %v1925, %v2093
        %v2112 = vadd.f32 %v1926, %v2095
        %v2113 = vld [vmem:[%s1740 + $0x3] sm:$0xff]
        %v2114 = vld [vmem:[%s1740 + $0x13] sm:$0xff]
        %v2115 = vld [vmem:[%s1740 + $0x23] sm:$0xff]
        %v2116 = vld [vmem:[%s1740 + $0x33] sm:$0xff]
        %v2117 = vld [vmem:[%s1740 + $0x43] sm:$0xff]
        %v2118 = vld [vmem:[%s1740 + $0x53] sm:$0xff]
        %v2119 = vld [vmem:[%s1740 + $0x63] sm:$0xff]
        %v2120 = vld [vmem:[%s1740 + $0x73] sm:$0xff]
        %v2121 = vpack.c.bf16 %v2114, %v2113
        %v2122 = vpack.c.bf16 %v2116, %v2115
        %v2123 = vpack.c.bf16 %v2118, %v2117
        %v2124 = vpack.c.bf16 %v2120, %v2119
        %s2125 = scalar_lea.vmem [#allocation6], 768
        %v2126 = vld [vmem:[%s2125] sm:$0xff]
        %v2127 = vld [vmem:[%s2125 + $0x8] sm:$0xff]
        %v2128 = vld [vmem:[%s2125 + $0x10] sm:$0xff]
        %v2129 = vld [vmem:[%s2125 + $0x18] sm:$0xff]
        %v2130 = vld [vmem:[%s2125 + $0x20] sm:$0xff]
        %v2131 = vld [vmem:[%s2125 + $0x28] sm:$0xff]
        %v2132 = vld [vmem:[%s2125 + $0x30] sm:$0xff]
        %v2133 = vld [vmem:[%s2125 + $0x38] sm:$0xff]
        %v2134 = vld [vmem:[%s2125 + $0x40] sm:$0xff]
        %v2135 = vld [vmem:[%s2125 + $0x48] sm:$0xff]
        %v2136 = vld [vmem:[%s2125 + $0x50] sm:$0xff]
        %v2137 = vld [vmem:[%s2125 + $0x58] sm:$0xff]
        %v2150 = vunpack.c.l.b16 %v2126
        %v2151 = vunpack.c.h.b16 %v2126
        %v2152 = vunpack.c.l.b16 %v2127
        %v2153 = vunpack.c.h.b16 %v2127
        %v2154 = vunpack.c.l.b16 %v2128
        %v2155 = vunpack.c.h.b16 %v2128
        %v2156 = vunpack.c.l.b16 %v2129
        %v2157 = vunpack.c.h.b16 %v2129
        %v2158 = vunpack.c.l.b16 %v2130
        %v2159 = vunpack.c.h.b16 %v2130
        %v2160 = vunpack.c.l.b16 %v2131
        %v2161 = vunpack.c.h.b16 %v2131
        %v2162 = vunpack.c.l.b16 %v2132
        %v2163 = vunpack.c.h.b16 %v2132
        %v2164 = vunpack.c.l.b16 %v2133
        %v2165 = vunpack.c.h.b16 %v2133
        %v2166 = vunpack.c.l.b16 %v2134
        %v2167 = vunpack.c.h.b16 %v2134
        %v2168 = vunpack.c.l.b16 %v2135
        %v2169 = vunpack.c.h.b16 %v2135
        %v2170 = vunpack.c.l.b16 %v2136
        %v2171 = vunpack.c.h.b16 %v2136
        %v2172 = vunpack.c.l.b16 %v2137
        %v2173 = vunpack.c.h.b16 %v2137
        %v2174 = vpack.c.b16 %v2152, %v2150
        %v2175 = vpack.c.b16 %v2153, %v2151
        %v2176 = vpack.c.b16 %v2156, %v2154
        %v2177 = vpack.c.b16 %v2157, %v2155
        %v2178 = vpack.c.b16 %v2160, %v2158
        %v2179 = vpack.c.b16 %v2161, %v2159
        %v2180 = vpack.c.b16 %v2164, %v2162
        %v2181 = vpack.c.b16 %v2165, %v2163
        %v2182 = vpack.c.b16 %v2168, %v2166
        %v2183 = vpack.c.b16 %v2169, %v2167
        %v2184 = vpack.c.b16 %v2172, %v2170
        %v2185 = vpack.c.b16 %v2173, %v2171
        %v2199 = vsel %vm313, %v2121, 0
        %v2202 = vsel %vm313, %v2122, 0
        %v2205 = vsel %vm313, %v2123, 0
        %v2208 = vsel %vm313, %v2124, 0
        %2210 = vmatprep.subr.bf16.mxu0 0
        %2211 = vmatpush1.bf16.msra.mxu0 0
        %2212 = vmatprep.subr.bf16.mxu0 0
        %2213 = vmatpush1.bf16.msra.mxu0 0
        %2214 = vmatprep.subr.bf16.mxu0 %v2185
        %2215 = vmatpush1.bf16.msra.mxu0 %v2184
        %2216 = vmatprep.subr.bf16.mxu0 %v2183
        %2217 = vmatpush1.bf16.msra.mxu0 %v2182
        %2218 = vmatprep.subr.bf16.mxu0 %v2181
        %2219 = vmatpush1.bf16.msra.mxu0 %v2180
        %2220 = vmatprep.subr.bf16.mxu0 %v2179
        %2221 = vmatpush1.bf16.msra.mxu0 %v2178
        %2222 = vmatprep.subr.bf16.mxu0 %v2177
        %2223 = vmatpush1.bf16.msra.mxu0 %v2176
        %2224 = vmatprep.subr.bf16.mxu0 %v2175
        %2225 = vmatpush1.bf16.msra.mxu0 %v2174
        %2226 = vmatprep.subr.bf16.mxu0 0
        %2227 = vmatpush2.bf16.msra.mxu0 0
        %2228 = vmatprep.subr.bf16.mxu0 0
        %2229 = vmatpush2.bf16.msra.mxu0 0
        %2230 = vmatprep.subr.bf16.mxu0 0
        %2231 = vmatpush2.bf16.msra.mxu0 0
        %2232 = vmatprep.subr.bf16.mxu0 0
        %2233 = vmatpush2.bf16.msra.mxu0 0
        %2234 = vmatprep.subr.bf16.mxu0 0
        %2235 = vmatpush2.bf16.msra.mxu0 0
        %2236 = vmatprep.subr.bf16.mxu0 0
        %2237 = vmatpush2.bf16.msra.mxu0 0
        %2238 = vmatprep.subr.bf16.mxu0 0
        %2239 = vmatpush2.bf16.msra.mxu0 0
        %2240 = vmatprep.subr.bf16.mxu0 0
        %2241 = vmatpush2.bf16.msra.mxu0 0
        %2242 = vmatprep.mubr.bf16.mxu0 0
        %2243 = vmatmul.mubr.bf16.gmra.mxu0 %v2199
        %v2244 = vpop.f32.mrf.mxu0
        %v2245 = vadd.f32 0.0, %v2244
        %v2246 = vpop.f32.mrf.mxu0
        %v2247 = vadd.f32 0.0, %v2246
        %v2248 = vpop.f32.mrf.mxu0
        %v2249 = vadd.f32 0.0, %v2248
        %v2250 = vpop.f32.mrf.mxu0
        %v2251 = vadd.f32 0.0, %v2250
        %2252 = vmatprep.mubr.bf16.mxu0 0
        %2253 = vmatmul.mubr.bf16.gmra.mxu0 %v2202
        %v2254 = vpop.f32.mrf.mxu0
        %v2255 = vadd.f32 0.0, %v2254
        %v2256 = vpop.f32.mrf.mxu0
        %v2257 = vadd.f32 0.0, %v2256
        %v2258 = vpop.f32.mrf.mxu0
        %v2259 = vadd.f32 0.0, %v2258
        %v2260 = vpop.f32.mrf.mxu0
        %v2261 = vadd.f32 0.0, %v2260
        %2262 = vmatprep.mubr.bf16.mxu0 0
        %2263 = vmatmul.mubr.bf16.gmra.mxu0 %v2205
        %v2264 = vpop.f32.mrf.mxu0
        %v2265 = vadd.f32 0.0, %v2264
        %v2266 = vpop.f32.mrf.mxu0
        %v2267 = vadd.f32 0.0, %v2266
        %v2268 = vpop.f32.mrf.mxu0
        %v2269 = vadd.f32 0.0, %v2268
        %v2270 = vpop.f32.mrf.mxu0
        %v2271 = vadd.f32 0.0, %v2270
        %2272 = vmatprep.mubr.bf16.mxu0 0
        %2273 = vmatmul.mubr.bf16.gmra.mxu0 %v2208
        %v2274 = vpop.f32.mrf.mxu0
        %v2275 = vadd.f32 0.0, %v2274
        %v2276 = vpop.f32.mrf.mxu0
        %v2277 = vadd.f32 0.0, %v2276
        %v2278 = vpop.f32.mrf.mxu0
        %v2279 = vadd.f32 0.0, %v2278
        %v2280 = vpop.f32.mrf.mxu0
        %v2281 = vadd.f32 0.0, %v2280
        %2282 = vdwg.mxu0
        %v2283 = vadd.f32 %v2097, %v2245
        %v2284 = vadd.f32 %v2098, %v2247
        %v2285 = vadd.f32 %v2099, %v2249
        %v2286 = vadd.f32 %v2100, %v2251
        %v2287 = vadd.f32 %v2101, %v2255
        %v2288 = vadd.f32 %v2102, %v2257
        %v2289 = vadd.f32 %v2103, %v2259
        %v2290 = vadd.f32 %v2104, %v2261
        %v2291 = vadd.f32 %v2105, %v2265
        %v2292 = vadd.f32 %v2106, %v2267
        %v2293 = vadd.f32 %v2107, %v2269
        %v2294 = vadd.f32 %v2108, %v2271
        %v2295 = vadd.f32 %v2109, %v2275
        %v2296 = vadd.f32 %v2110, %v2277
        %v2297 = vadd.f32 %v2111, %v2279
        %v2298 = vadd.f32 %v2112, %v2281
        %v2299 = vld [vmem:[#allocation2] sm:$0xff]
        %v2300 = vld [vmem:[#allocation2 + $0x10] sm:$0xff]
        %v2301 = vld [vmem:[#allocation2 + $0x20] sm:$0xff]
        %v2302 = vld [vmem:[#allocation2 + $0x30] sm:$0xff]
        %v2303 = vld [vmem:[#allocation2 + $0x40] sm:$0xff]
        %v2304 = vld [vmem:[#allocation2 + $0x50] sm:$0xff]
        %v2305 = vld [vmem:[#allocation2 + $0x60] sm:$0xff]
        %v2306 = vld [vmem:[#allocation2 + $0x70] sm:$0xff]
        %v2307 = vpack.c.bf16 %v2300, %v2299
        %v2308 = vpack.c.bf16 %v2302, %v2301
        %v2309 = vpack.c.bf16 %v2304, %v2303
        %v2310 = vpack.c.bf16 %v2306, %v2305
        %s2311 = scalar_lea.vmem [#allocation6], 864
        %v2312 = vld [vmem:[%s2311] sm:$0xff]
        %v2313 = vld [vmem:[%s2311 + $0x8] sm:$0xff]
        %v2314 = vld [vmem:[%s2311 + $0x10] sm:$0xff]
        %v2315 = vld [vmem:[%s2311 + $0x18] sm:$0xff]
        %v2316 = vld [vmem:[%s2311 + $0x20] sm:$0xff]
        %v2317 = vld [vmem:[%s2311 + $0x28] sm:$0xff]
        %v2318 = vld [vmem:[%s2311 + $0x30] sm:$0xff]
        %v2319 = vld [vmem:[%s2311 + $0x38] sm:$0xff]
        %v2320 = vld [vmem:[%s2311 + $0x40] sm:$0xff]
        %v2321 = vld [vmem:[%s2311 + $0x48] sm:$0xff]
        %v2322 = vld [vmem:[%s2311 + $0x50] sm:$0xff]
        %v2323 = vld [vmem:[%s2311 + $0x58] sm:$0xff]
        %v2324 = vld [vmem:[#allocation2 + $0x2] sm:$0xff]
        %v2325 = vld [vmem:[#allocation2 + $0x12] sm:$0xff]
        %v2326 = vld [vmem:[#allocation2 + $0x22] sm:$0xff]
        %v2327 = vld [vmem:[#allocation2 + $0x32] sm:$0xff]
        %v2328 = vld [vmem:[#allocation2 + $0x42] sm:$0xff]
        %v2329 = vld [vmem:[#allocation2 + $0x52] sm:$0xff]
        %v2330 = vld [vmem:[#allocation2 + $0x62] sm:$0xff]
        %v2331 = vld [vmem:[#allocation2 + $0x72] sm:$0xff]
        %v2332 = vpack.c.bf16 %v2325, %v2324
        %v2333 = vpack.c.bf16 %v2327, %v2326
        %v2334 = vpack.c.bf16 %v2329, %v2328
        %v2335 = vpack.c.bf16 %v2331, %v2330
        %s2336 = scalar_lea.vmem [#allocation6], 960
        %v2337 = vld [vmem:[%s2336] sm:$0xff]
        %v2338 = vld [vmem:[%s2336 + $0x8] sm:$0xff]
        %v2339 = vld [vmem:[%s2336 + $0x10] sm:$0xff]
        %v2340 = vld [vmem:[%s2336 + $0x18] sm:$0xff]
        %v2341 = vld [vmem:[%s2336 + $0x20] sm:$0xff]
        %v2342 = vld [vmem:[%s2336 + $0x28] sm:$0xff]
        %v2343 = vld [vmem:[%s2336 + $0x30] sm:$0xff]
        %v2344 = vld [vmem:[%s2336 + $0x38] sm:$0xff]
        %v2345 = vld [vmem:[%s2336 + $0x40] sm:$0xff]
        %v2346 = vld [vmem:[%s2336 + $0x48] sm:$0xff]
        %v2347 = vld [vmem:[%s2336 + $0x50] sm:$0xff]
        %v2348 = vld [vmem:[%s2336 + $0x58] sm:$0xff]
        %v2361 = vunpack.c.l.b16 %v2337
        %v2362 = vunpack.c.h.b16 %v2337
        %v2363 = vunpack.c.l.b16 %v2338
        %v2364 = vunpack.c.h.b16 %v2338
        %v2365 = vunpack.c.l.b16 %v2339
        %v2366 = vunpack.c.h.b16 %v2339
        %v2367 = vunpack.c.l.b16 %v2340
        %v2368 = vunpack.c.h.b16 %v2340
        %v2369 = vunpack.c.l.b16 %v2341
        %v2370 = vunpack.c.h.b16 %v2341
        %v2371 = vunpack.c.l.b16 %v2342
        %v2372 = vunpack.c.h.b16 %v2342
        %v2373 = vunpack.c.l.b16 %v2343
        %v2374 = vunpack.c.h.b16 %v2343
        %v2375 = vunpack.c.l.b16 %v2344
        %v2376 = vunpack.c.h.b16 %v2344
        %v2377 = vunpack.c.l.b16 %v2345
        %v2378 = vunpack.c.h.b16 %v2345
        %v2379 = vunpack.c.l.b16 %v2346
        %v2380 = vunpack.c.h.b16 %v2346
        %v2381 = vunpack.c.l.b16 %v2347
        %v2382 = vunpack.c.h.b16 %v2347
        %v2383 = vunpack.c.l.b16 %v2348
        %v2384 = vunpack.c.h.b16 %v2348
        %v2385 = vpack.c.b16 %v2363, %v2361
        %v2386 = vpack.c.b16 %v2364, %v2362
        %v2387 = vpack.c.b16 %v2367, %v2365
        %v2388 = vpack.c.b16 %v2368, %v2366
        %v2389 = vpack.c.b16 %v2371, %v2369
        %v2390 = vpack.c.b16 %v2372, %v2370
        %v2391 = vpack.c.b16 %v2375, %v2373
        %v2392 = vpack.c.b16 %v2376, %v2374
        %v2393 = vpack.c.b16 %v2379, %v2377
        %v2394 = vpack.c.b16 %v2380, %v2378
        %v2395 = vpack.c.b16 %v2383, %v2381
        %v2396 = vpack.c.b16 %v2384, %v2382
        %v2410 = vsel %vm313, %v2332, 0
        %v2413 = vsel %vm313, %v2333, 0
        %v2416 = vsel %vm313, %v2334, 0
        %v2419 = vsel %vm313, %v2335, 0
        %2421 = vmatprep.subr.bf16.mxu0 0
        %2422 = vmatpush1.bf16.msra.mxu0 0
        %2423 = vmatprep.subr.bf16.mxu0 0
        %2424 = vmatpush1.bf16.msra.mxu0 0
        %2425 = vmatprep.subr.bf16.mxu0 %v2396
        %2426 = vmatpush1.bf16.msra.mxu0 %v2395
        %2427 = vmatprep.subr.bf16.mxu0 %v2394
        %2428 = vmatpush1.bf16.msra.mxu0 %v2393
        %2429 = vmatprep.subr.bf16.mxu0 %v2392
        %2430 = vmatpush1.bf16.msra.mxu0 %v2391
        %2431 = vmatprep.subr.bf16.mxu0 %v2390
        %2432 = vmatpush1.bf16.msra.mxu0 %v2389
        %2433 = vmatprep.subr.bf16.mxu0 %v2388
        %2434 = vmatpush1.bf16.msra.mxu0 %v2387
        %2435 = vmatprep.subr.bf16.mxu0 %v2386
        %2436 = vmatpush1.bf16.msra.mxu0 %v2385
        %2437 = vmatprep.subr.bf16.mxu0 0
        %2438 = vmatpush2.bf16.msra.mxu0 0
        %2439 = vmatprep.subr.bf16.mxu0 0
        %2440 = vmatpush2.bf16.msra.mxu0 0
        %2441 = vmatprep.subr.bf16.mxu0 0
        %2442 = vmatpush2.bf16.msra.mxu0 0
        %2443 = vmatprep.subr.bf16.mxu0 0
        %2444 = vmatpush2.bf16.msra.mxu0 0
        %2445 = vmatprep.subr.bf16.mxu0 0
        %2446 = vmatpush2.bf16.msra.mxu0 0
        %2447 = vmatprep.subr.bf16.mxu0 0
        %2448 = vmatpush2.bf16.msra.mxu0 0
        %2449 = vmatprep.subr.bf16.mxu0 0
        %2450 = vmatpush2.bf16.msra.mxu0 0
        %2451 = vmatprep.subr.bf16.mxu0 0
        %2452 = vmatpush2.bf16.msra.mxu0 0
        %2453 = vmatprep.mubr.bf16.mxu0 0
        %2454 = vmatmul.mubr.bf16.gmra.mxu0 %v2410
        %v2455 = vpop.f32.mrf.mxu0
        %v2456 = vadd.f32 0.0, %v2455
        %v2457 = vpop.f32.mrf.mxu0
        %v2458 = vadd.f32 0.0, %v2457
        %v2459 = vpop.f32.mrf.mxu0
        %v2460 = vadd.f32 0.0, %v2459
        %v2461 = vpop.f32.mrf.mxu0
        %v2462 = vadd.f32 0.0, %v2461
        %2463 = vmatprep.mubr.bf16.mxu0 0
        %2464 = vmatmul.mubr.bf16.gmra.mxu0 %v2413
        %v2465 = vpop.f32.mrf.mxu0
        %v2466 = vadd.f32 0.0, %v2465
        %v2467 = vpop.f32.mrf.mxu0
        %v2468 = vadd.f32 0.0, %v2467
        %v2469 = vpop.f32.mrf.mxu0
        %v2470 = vadd.f32 0.0, %v2469
        %v2471 = vpop.f32.mrf.mxu0
        %v2472 = vadd.f32 0.0, %v2471
        %2473 = vmatprep.mubr.bf16.mxu0 0
        %2474 = vmatmul.mubr.bf16.gmra.mxu0 %v2416
        %v2475 = vpop.f32.mrf.mxu0
        %v2476 = vadd.f32 0.0, %v2475
        %v2477 = vpop.f32.mrf.mxu0
        %v2478 = vadd.f32 0.0, %v2477
        %v2479 = vpop.f32.mrf.mxu0
        %v2480 = vadd.f32 0.0, %v2479
        %v2481 = vpop.f32.mrf.mxu0
        %v2482 = vadd.f32 0.0, %v2481
        %2483 = vmatprep.mubr.bf16.mxu0 0
        %2484 = vmatmul.mubr.bf16.gmra.mxu0 %v2419
        %v2485 = vpop.f32.mrf.mxu0
        %v2486 = vadd.f32 0.0, %v2485
        %v2487 = vpop.f32.mrf.mxu0
        %v2488 = vadd.f32 0.0, %v2487
        %v2489 = vpop.f32.mrf.mxu0
        %v2490 = vadd.f32 0.0, %v2489
        %v2491 = vpop.f32.mrf.mxu0
        %v2492 = vadd.f32 0.0, %v2491
        %2493 = vdwg.mxu0
        %v2506 = vunpack.c.l.b16 %v2312
        %v2507 = vunpack.c.h.b16 %v2312
        %v2508 = vunpack.c.l.b16 %v2313
        %v2509 = vunpack.c.h.b16 %v2313
        %v2510 = vunpack.c.l.b16 %v2314
        %v2511 = vunpack.c.h.b16 %v2314
        %v2512 = vunpack.c.l.b16 %v2315
        %v2513 = vunpack.c.h.b16 %v2315
        %v2514 = vunpack.c.l.b16 %v2316
        %v2515 = vunpack.c.h.b16 %v2316
        %v2516 = vunpack.c.l.b16 %v2317
        %v2517 = vunpack.c.h.b16 %v2317
        %v2518 = vunpack.c.l.b16 %v2318
        %v2519 = vunpack.c.h.b16 %v2318
        %v2520 = vunpack.c.l.b16 %v2319
        %v2521 = vunpack.c.h.b16 %v2319
        %v2522 = vunpack.c.l.b16 %v2320
        %v2523 = vunpack.c.h.b16 %v2320
        %v2524 = vunpack.c.l.b16 %v2321
        %v2525 = vunpack.c.h.b16 %v2321
        %v2526 = vunpack.c.l.b16 %v2322
        %v2527 = vunpack.c.h.b16 %v2322
        %v2528 = vunpack.c.l.b16 %v2323
        %v2529 = vunpack.c.h.b16 %v2323
        %v2530 = vpack.c.b16 %v2508, %v2506
        %v2531 = vpack.c.b16 %v2509, %v2507
        %v2532 = vpack.c.b16 %v2512, %v2510
        %v2533 = vpack.c.b16 %v2513, %v2511
        %v2534 = vpack.c.b16 %v2516, %v2514
        %v2535 = vpack.c.b16 %v2517, %v2515
        %v2536 = vpack.c.b16 %v2520, %v2518
        %v2537 = vpack.c.b16 %v2521, %v2519
        %v2538 = vpack.c.b16 %v2524, %v2522
        %v2539 = vpack.c.b16 %v2525, %v2523
        %v2540 = vpack.c.b16 %v2528, %v2526
        %v2541 = vpack.c.b16 %v2529, %v2527
        %v2555 = vsel %vm313, %v2307, 0
        %v2558 = vsel %vm313, %v2308, 0
        %v2561 = vsel %vm313, %v2309, 0
        %v2564 = vsel %vm313, %v2310, 0
        %2566 = vmatprep.subr.bf16.mxu0 0
        %2567 = vmatpush1.bf16.msra.mxu0 0
        %2568 = vmatprep.subr.bf16.mxu0 0
        %2569 = vmatpush1.bf16.msra.mxu0 0
        %2570 = vmatprep.subr.bf16.mxu0 %v2541
        %2571 = vmatpush1.bf16.msra.mxu0 %v2540
        %2572 = vmatprep.subr.bf16.mxu0 %v2539
        %2573 = vmatpush1.bf16.msra.mxu0 %v2538
        %2574 = vmatprep.subr.bf16.mxu0 %v2537
        %2575 = vmatpush1.bf16.msra.mxu0 %v2536
        %2576 = vmatprep.subr.bf16.mxu0 %v2535
        %2577 = vmatpush1.bf16.msra.mxu0 %v2534
        %2578 = vmatprep.subr.bf16.mxu0 %v2533
        %2579 = vmatpush1.bf16.msra.mxu0 %v2532
        %2580 = vmatprep.subr.bf16.mxu0 %v2531
        %2581 = vmatpush1.bf16.msra.mxu0 %v2530
        %2582 = vmatprep.subr.bf16.mxu0 0
        %2583 = vmatpush2.bf16.msra.mxu0 0
        %2584 = vmatprep.subr.bf16.mxu0 0
        %2585 = vmatpush2.bf16.msra.mxu0 0
        %2586 = vmatprep.subr.bf16.mxu0 0
        %2587 = vmatpush2.bf16.msra.mxu0 0
        %2588 = vmatprep.subr.bf16.mxu0 0
        %2589 = vmatpush2.bf16.msra.mxu0 0
        %2590 = vmatprep.subr.bf16.mxu0 0
        %2591 = vmatpush2.bf16.msra.mxu0 0
        %2592 = vmatprep.subr.bf16.mxu0 0
        %2593 = vmatpush2.bf16.msra.mxu0 0
        %2594 = vmatprep.subr.bf16.mxu0 0
        %2595 = vmatpush2.bf16.msra.mxu0 0
        %2596 = vmatprep.subr.bf16.mxu0 0
        %2597 = vmatpush2.bf16.msra.mxu0 0
        %2598 = vmatprep.mubr.bf16.mxu0 0
        %2599 = vmatmul.mubr.bf16.gmra.mxu0 %v2555
        %v2600 = vpop.f32.mrf.mxu0
        %v2601 = vadd.f32 %v2456, %v2600
        %v2602 = vpop.f32.mrf.mxu0
        %v2603 = vadd.f32 %v2458, %v2602
        %v2604 = vpop.f32.mrf.mxu0
        %v2605 = vadd.f32 %v2460, %v2604
        %v2606 = vpop.f32.mrf.mxu0
        %v2607 = vadd.f32 %v2462, %v2606
        %2608 = vmatprep.mubr.bf16.mxu0 0
        %2609 = vmatmul.mubr.bf16.gmra.mxu0 %v2558
        %v2610 = vpop.f32.mrf.mxu0
        %v2611 = vadd.f32 %v2466, %v2610
        %v2612 = vpop.f32.mrf.mxu0
        %v2613 = vadd.f32 %v2468, %v2612
        %v2614 = vpop.f32.mrf.mxu0
        %v2615 = vadd.f32 %v2470, %v2614
        %v2616 = vpop.f32.mrf.mxu0
        %v2617 = vadd.f32 %v2472, %v2616
        %2618 = vmatprep.mubr.bf16.mxu0 0
        %2619 = vmatmul.mubr.bf16.gmra.mxu0 %v2561
        %v2620 = vpop.f32.mrf.mxu0
        %v2621 = vadd.f32 %v2476, %v2620
        %v2622 = vpop.f32.mrf.mxu0
        %v2623 = vadd.f32 %v2478, %v2622
        %v2624 = vpop.f32.mrf.mxu0
        %v2625 = vadd.f32 %v2480, %v2624
        %v2626 = vpop.f32.mrf.mxu0
        %v2627 = vadd.f32 %v2482, %v2626
        %2628 = vmatprep.mubr.bf16.mxu0 0
        %2629 = vmatmul.mubr.bf16.gmra.mxu0 %v2564
        %v2630 = vpop.f32.mrf.mxu0
        %v2631 = vadd.f32 %v2486, %v2630
        %v2632 = vpop.f32.mrf.mxu0
        %v2633 = vadd.f32 %v2488, %v2632
        %v2634 = vpop.f32.mrf.mxu0
        %v2635 = vadd.f32 %v2490, %v2634
        %v2636 = vpop.f32.mrf.mxu0
        %v2637 = vadd.f32 %v2492, %v2636
        %2638 = vdwg.mxu0
        %v2639 = vld [vmem:[#allocation2 + $0x4] sm:$0xff]
        %v2640 = vld [vmem:[#allocation2 + $0x14] sm:$0xff]
        %v2641 = vld [vmem:[#allocation2 + $0x24] sm:$0xff]
        %v2642 = vld [vmem:[#allocation2 + $0x34] sm:$0xff]
        %v2643 = vld [vmem:[#allocation2 + $0x44] sm:$0xff]
        %v2644 = vld [vmem:[#allocation2 + $0x54] sm:$0xff]
        %v2645 = vld [vmem:[#allocation2 + $0x64] sm:$0xff]
        %v2646 = vld [vmem:[#allocation2 + $0x74] sm:$0xff]
        %v2647 = vpack.c.bf16 %v2640, %v2639
        %v2648 = vpack.c.bf16 %v2642, %v2641
        %v2649 = vpack.c.bf16 %v2644, %v2643
        %v2650 = vpack.c.bf16 %v2646, %v2645
        %s2651 = scalar_lea.vmem [#allocation6], 1056
        %v2652 = vld [vmem:[%s2651] sm:$0xff]
        %v2653 = vld [vmem:[%s2651 + $0x8] sm:$0xff]
        %v2654 = vld [vmem:[%s2651 + $0x10] sm:$0xff]
        %v2655 = vld [vmem:[%s2651 + $0x18] sm:$0xff]
        %v2656 = vld [vmem:[%s2651 + $0x20] sm:$0xff]
        %v2657 = vld [vmem:[%s2651 + $0x28] sm:$0xff]
        %v2658 = vld [vmem:[%s2651 + $0x30] sm:$0xff]
        %v2659 = vld [vmem:[%s2651 + $0x38] sm:$0xff]
        %v2660 = vld [vmem:[%s2651 + $0x40] sm:$0xff]
        %v2661 = vld [vmem:[%s2651 + $0x48] sm:$0xff]
        %v2662 = vld [vmem:[%s2651 + $0x50] sm:$0xff]
        %v2663 = vld [vmem:[%s2651 + $0x58] sm:$0xff]
        %v2676 = vunpack.c.l.b16 %v2652
        %v2677 = vunpack.c.h.b16 %v2652
        %v2678 = vunpack.c.l.b16 %v2653
        %v2679 = vunpack.c.h.b16 %v2653
        %v2680 = vunpack.c.l.b16 %v2654
        %v2681 = vunpack.c.h.b16 %v2654
        %v2682 = vunpack.c.l.b16 %v2655
        %v2683 = vunpack.c.h.b16 %v2655
        %v2684 = vunpack.c.l.b16 %v2656
        %v2685 = vunpack.c.h.b16 %v2656
        %v2686 = vunpack.c.l.b16 %v2657
        %v2687 = vunpack.c.h.b16 %v2657
        %v2688 = vunpack.c.l.b16 %v2658
        %v2689 = vunpack.c.h.b16 %v2658
        %v2690 = vunpack.c.l.b16 %v2659
        %v2691 = vunpack.c.h.b16 %v2659
        %v2692 = vunpack.c.l.b16 %v2660
        %v2693 = vunpack.c.h.b16 %v2660
        %v2694 = vunpack.c.l.b16 %v2661
        %v2695 = vunpack.c.h.b16 %v2661
        %v2696 = vunpack.c.l.b16 %v2662
        %v2697 = vunpack.c.h.b16 %v2662
        %v2698 = vunpack.c.l.b16 %v2663
        %v2699 = vunpack.c.h.b16 %v2663
        %v2700 = vpack.c.b16 %v2678, %v2676
        %v2701 = vpack.c.b16 %v2679, %v2677
        %v2702 = vpack.c.b16 %v2682, %v2680
        %v2703 = vpack.c.b16 %v2683, %v2681
        %v2704 = vpack.c.b16 %v2686, %v2684
        %v2705 = vpack.c.b16 %v2687, %v2685
        %v2706 = vpack.c.b16 %v2690, %v2688
        %v2707 = vpack.c.b16 %v2691, %v2689
        %v2708 = vpack.c.b16 %v2694, %v2692
        %v2709 = vpack.c.b16 %v2695, %v2693
        %v2710 = vpack.c.b16 %v2698, %v2696
        %v2711 = vpack.c.b16 %v2699, %v2697
        %v2725 = vsel %vm313, %v2647, 0
        %v2728 = vsel %vm313, %v2648, 0
        %v2731 = vsel %vm313, %v2649, 0
        %v2734 = vsel %vm313, %v2650, 0
        %2736 = vmatprep.subr.bf16.mxu0 0
        %2737 = vmatpush1.bf16.msra.mxu0 0
        %2738 = vmatprep.subr.bf16.mxu0 0
        %2739 = vmatpush1.bf16.msra.mxu0 0
        %2740 = vmatprep.subr.bf16.mxu0 %v2711
        %2741 = vmatpush1.bf16.msra.mxu0 %v2710
        %2742 = vmatprep.subr.bf16.mxu0 %v2709
        %2743 = vmatpush1.bf16.msra.mxu0 %v2708
        %2744 = vmatprep.subr.bf16.mxu0 %v2707
        %2745 = vmatpush1.bf16.msra.mxu0 %v2706
        %2746 = vmatprep.subr.bf16.mxu0 %v2705
        %2747 = vmatpush1.bf16.msra.mxu0 %v2704
        %2748 = vmatprep.subr.bf16.mxu0 %v2703
        %2749 = vmatpush1.bf16.msra.mxu0 %v2702
        %2750 = vmatprep.subr.bf16.mxu0 %v2701
        %2751 = vmatpush1.bf16.msra.mxu0 %v2700
        %2752 = vmatprep.subr.bf16.mxu0 0
        %2753 = vmatpush2.bf16.msra.mxu0 0
        %2754 = vmatprep.subr.bf16.mxu0 0
        %2755 = vmatpush2.bf16.msra.mxu0 0
        %2756 = vmatprep.subr.bf16.mxu0 0
        %2757 = vmatpush2.bf16.msra.mxu0 0
        %2758 = vmatprep.subr.bf16.mxu0 0
        %2759 = vmatpush2.bf16.msra.mxu0 0
        %2760 = vmatprep.subr.bf16.mxu0 0
        %2761 = vmatpush2.bf16.msra.mxu0 0
        %2762 = vmatprep.subr.bf16.mxu0 0
        %2763 = vmatpush2.bf16.msra.mxu0 0
        %2764 = vmatprep.subr.bf16.mxu0 0
        %2765 = vmatpush2.bf16.msra.mxu0 0
        %2766 = vmatprep.subr.bf16.mxu0 0
        %2767 = vmatpush2.bf16.msra.mxu0 0
        %2768 = vmatprep.mubr.bf16.mxu0 0
        %2769 = vmatmul.mubr.bf16.gmra.mxu0 %v2725
        %v2770 = vpop.f32.mrf.mxu0
        %v2771 = vadd.f32 0.0, %v2770
        %v2772 = vpop.f32.mrf.mxu0
        %v2773 = vadd.f32 0.0, %v2772
        %v2774 = vpop.f32.mrf.mxu0
        %v2775 = vadd.f32 0.0, %v2774
        %v2776 = vpop.f32.mrf.mxu0
        %v2777 = vadd.f32 0.0, %v2776
        %2778 = vmatprep.mubr.bf16.mxu0 0
        %2779 = vmatmul.mubr.bf16.gmra.mxu0 %v2728
        %v2780 = vpop.f32.mrf.mxu0
        %v2781 = vadd.f32 0.0, %v2780
        %v2782 = vpop.f32.mrf.mxu0
        %v2783 = vadd.f32 0.0, %v2782
        %v2784 = vpop.f32.mrf.mxu0
        %v2785 = vadd.f32 0.0, %v2784
        %v2786 = vpop.f32.mrf.mxu0
        %v2787 = vadd.f32 0.0, %v2786
        %2788 = vmatprep.mubr.bf16.mxu0 0
        %2789 = vmatmul.mubr.bf16.gmra.mxu0 %v2731
        %v2790 = vpop.f32.mrf.mxu0
        %v2791 = vadd.f32 0.0, %v2790
        %v2792 = vpop.f32.mrf.mxu0
        %v2793 = vadd.f32 0.0, %v2792
        %v2794 = vpop.f32.mrf.mxu0
        %v2795 = vadd.f32 0.0, %v2794
        %v2796 = vpop.f32.mrf.mxu0
        %v2797 = vadd.f32 0.0, %v2796
        %2798 = vmatprep.mubr.bf16.mxu0 0
        %2799 = vmatmul.mubr.bf16.gmra.mxu0 %v2734
        %v2800 = vpop.f32.mrf.mxu0
        %v2801 = vadd.f32 0.0, %v2800
        %v2802 = vpop.f32.mrf.mxu0
        %v2803 = vadd.f32 0.0, %v2802
        %v2804 = vpop.f32.mrf.mxu0
        %v2805 = vadd.f32 0.0, %v2804
        %v2806 = vpop.f32.mrf.mxu0
        %v2807 = vadd.f32 0.0, %v2806
        %2808 = vdwg.mxu0
        %v2809 = vadd.f32 %v2601, %v2771
        %v2810 = vadd.f32 %v2603, %v2773
        %v2811 = vadd.f32 %v2605, %v2775
        %v2812 = vadd.f32 %v2607, %v2777
        %v2813 = vadd.f32 %v2611, %v2781
        %v2814 = vadd.f32 %v2613, %v2783
        %v2815 = vadd.f32 %v2615, %v2785
        %v2816 = vadd.f32 %v2617, %v2787
        %v2817 = vadd.f32 %v2621, %v2791
        %v2818 = vadd.f32 %v2623, %v2793
        %v2819 = vadd.f32 %v2625, %v2795
        %v2820 = vadd.f32 %v2627, %v2797
        %v2821 = vadd.f32 %v2631, %v2801
        %v2822 = vadd.f32 %v2633, %v2803
        %v2823 = vadd.f32 %v2635, %v2805
        %v2824 = vadd.f32 %v2637, %v2807
        %v2825 = vld [vmem:[%s324] sm:$0xff]
        %v2826 = vld [vmem:[%s324 + $0x10] sm:$0xff]
        %v2827 = vld [vmem:[%s324 + $0x20] sm:$0xff]
        %v2828 = vld [vmem:[%s324 + $0x30] sm:$0xff]
        %v2829 = vld [vmem:[%s324 + $0x40] sm:$0xff]
        %v2830 = vld [vmem:[%s324 + $0x50] sm:$0xff]
        %v2831 = vld [vmem:[%s324 + $0x60] sm:$0xff]
        %v2832 = vld [vmem:[%s324 + $0x70] sm:$0xff]
        %v2833 = vpack.c.bf16 %v2826, %v2825
        %v2834 = vpack.c.bf16 %v2828, %v2827
        %v2835 = vpack.c.bf16 %v2830, %v2829
        %v2836 = vpack.c.bf16 %v2832, %v2831
        %s2837 = scalar_lea.vmem [#allocation6], 1152
        %v2838 = vld [vmem:[%s2837] sm:$0xff]
        %v2839 = vld [vmem:[%s2837 + $0x8] sm:$0xff]
        %v2840 = vld [vmem:[%s2837 + $0x10] sm:$0xff]
        %v2841 = vld [vmem:[%s2837 + $0x18] sm:$0xff]
        %v2842 = vld [vmem:[%s2837 + $0x20] sm:$0xff]
        %v2843 = vld [vmem:[%s2837 + $0x28] sm:$0xff]
        %v2844 = vld [vmem:[%s2837 + $0x30] sm:$0xff]
        %v2845 = vld [vmem:[%s2837 + $0x38] sm:$0xff]
        %v2846 = vld [vmem:[%s2837 + $0x40] sm:$0xff]
        %v2847 = vld [vmem:[%s2837 + $0x48] sm:$0xff]
        %v2848 = vld [vmem:[%s2837 + $0x50] sm:$0xff]
        %v2849 = vld [vmem:[%s2837 + $0x58] sm:$0xff]
        %v2862 = vunpack.c.l.b16 %v2838
        %v2863 = vunpack.c.h.b16 %v2838
        %v2864 = vunpack.c.l.b16 %v2839
        %v2865 = vunpack.c.h.b16 %v2839
        %v2866 = vunpack.c.l.b16 %v2840
        %v2867 = vunpack.c.h.b16 %v2840
        %v2868 = vunpack.c.l.b16 %v2841
        %v2869 = vunpack.c.h.b16 %v2841
        %v2870 = vunpack.c.l.b16 %v2842
        %v2871 = vunpack.c.h.b16 %v2842
        %v2872 = vunpack.c.l.b16 %v2843
        %v2873 = vunpack.c.h.b16 %v2843
        %v2874 = vunpack.c.l.b16 %v2844
        %v2875 = vunpack.c.h.b16 %v2844
        %v2876 = vunpack.c.l.b16 %v2845
        %v2877 = vunpack.c.h.b16 %v2845
        %v2878 = vunpack.c.l.b16 %v2846
        %v2879 = vunpack.c.h.b16 %v2846
        %v2880 = vunpack.c.l.b16 %v2847
        %v2881 = vunpack.c.h.b16 %v2847
        %v2882 = vunpack.c.l.b16 %v2848
        %v2883 = vunpack.c.h.b16 %v2848
        %v2884 = vunpack.c.l.b16 %v2849
        %v2885 = vunpack.c.h.b16 %v2849
        %v2886 = vpack.c.b16 %v2864, %v2862
        %v2887 = vpack.c.b16 %v2865, %v2863
        %v2888 = vpack.c.b16 %v2868, %v2866
        %v2889 = vpack.c.b16 %v2869, %v2867
        %v2890 = vpack.c.b16 %v2872, %v2870
        %v2891 = vpack.c.b16 %v2873, %v2871
        %v2892 = vpack.c.b16 %v2876, %v2874
        %v2893 = vpack.c.b16 %v2877, %v2875
        %v2894 = vpack.c.b16 %v2880, %v2878
        %v2895 = vpack.c.b16 %v2881, %v2879
        %v2896 = vpack.c.b16 %v2884, %v2882
        %v2897 = vpack.c.b16 %v2885, %v2883
        %v2911 = vsel %vm313, %v2833, 0
        %v2914 = vsel %vm313, %v2834, 0
        %v2917 = vsel %vm313, %v2835, 0
        %v2920 = vsel %vm313, %v2836, 0
        %2922 = vmatprep.subr.bf16.mxu0 0
        %2923 = vmatpush1.bf16.msra.mxu0 0
        %2924 = vmatprep.subr.bf16.mxu0 0
        %2925 = vmatpush1.bf16.msra.mxu0 0
        %2926 = vmatprep.subr.bf16.mxu0 %v2897
        %2927 = vmatpush1.bf16.msra.mxu0 %v2896
        %2928 = vmatprep.subr.bf16.mxu0 %v2895
        %2929 = vmatpush1.bf16.msra.mxu0 %v2894
        %2930 = vmatprep.subr.bf16.mxu0 %v2893
        %2931 = vmatpush1.bf16.msra.mxu0 %v2892
        %2932 = vmatprep.subr.bf16.mxu0 %v2891
        %2933 = vmatpush1.bf16.msra.mxu0 %v2890
        %2934 = vmatprep.subr.bf16.mxu0 %v2889
        %2935 = vmatpush1.bf16.msra.mxu0 %v2888
        %2936 = vmatprep.subr.bf16.mxu0 %v2887
        %2937 = vmatpush1.bf16.msra.mxu0 %v2886
        %2938 = vmatprep.subr.bf16.mxu0 0
        %2939 = vmatpush2.bf16.msra.mxu0 0
        %2940 = vmatprep.subr.bf16.mxu0 0
        %2941 = vmatpush2.bf16.msra.mxu0 0
        %2942 = vmatprep.subr.bf16.mxu0 0
        %2943 = vmatpush2.bf16.msra.mxu0 0
        %2944 = vmatprep.subr.bf16.mxu0 0
        %2945 = vmatpush2.bf16.msra.mxu0 0
        %2946 = vmatprep.subr.bf16.mxu0 0
        %2947 = vmatpush2.bf16.msra.mxu0 0
        %2948 = vmatprep.subr.bf16.mxu0 0
        %2949 = vmatpush2.bf16.msra.mxu0 0
        %2950 = vmatprep.subr.bf16.mxu0 0
        %2951 = vmatpush2.bf16.msra.mxu0 0
        %2952 = vmatprep.subr.bf16.mxu0 0
        %2953 = vmatpush2.bf16.msra.mxu0 0
        %2954 = vmatprep.mubr.bf16.mxu0 0
        %2955 = vmatmul.mubr.bf16.gmra.mxu0 %v2911
        %v2956 = vpop.f32.mrf.mxu0
        %v2957 = vadd.f32 0.0, %v2956
        %v2958 = vpop.f32.mrf.mxu0
        %v2959 = vadd.f32 0.0, %v2958
        %v2960 = vpop.f32.mrf.mxu0
        %v2961 = vadd.f32 0.0, %v2960
        %v2962 = vpop.f32.mrf.mxu0
        %v2963 = vadd.f32 0.0, %v2962
        %2964 = vmatprep.mubr.bf16.mxu0 0
        %2965 = vmatmul.mubr.bf16.gmra.mxu0 %v2914
        %v2966 = vpop.f32.mrf.mxu0
        %v2967 = vadd.f32 0.0, %v2966
        %v2968 = vpop.f32.mrf.mxu0
        %v2969 = vadd.f32 0.0, %v2968
        %v2970 = vpop.f32.mrf.mxu0
        %v2971 = vadd.f32 0.0, %v2970
        %v2972 = vpop.f32.mrf.mxu0
        %v2973 = vadd.f32 0.0, %v2972
        %2974 = vmatprep.mubr.bf16.mxu0 0
        %2975 = vmatmul.mubr.bf16.gmra.mxu0 %v2917
        %v2976 = vpop.f32.mrf.mxu0
        %v2977 = vadd.f32 0.0, %v2976
        %v2978 = vpop.f32.mrf.mxu0
        %v2979 = vadd.f32 0.0, %v2978
        %v2980 = vpop.f32.mrf.mxu0
        %v2981 = vadd.f32 0.0, %v2980
        %v2982 = vpop.f32.mrf.mxu0
        %v2983 = vadd.f32 0.0, %v2982
        %2984 = vmatprep.mubr.bf16.mxu0 0
        %2985 = vmatmul.mubr.bf16.gmra.mxu0 %v2920
        %v2986 = vpop.f32.mrf.mxu0
        %v2987 = vadd.f32 0.0, %v2986
        %v2988 = vpop.f32.mrf.mxu0
        %v2989 = vadd.f32 0.0, %v2988
        %v2990 = vpop.f32.mrf.mxu0
        %v2991 = vadd.f32 0.0, %v2990
        %v2992 = vpop.f32.mrf.mxu0
        %v2993 = vadd.f32 0.0, %v2992
        %2994 = vdwg.mxu0
        %v2995 = vadd.f32 %v2809, %v2957
        %v2996 = vadd.f32 %v2810, %v2959
        %v2997 = vadd.f32 %v2811, %v2961
        %v2998 = vadd.f32 %v2812, %v2963
        %v2999 = vadd.f32 %v2813, %v2967
        %v3000 = vadd.f32 %v2814, %v2969
        %v3001 = vadd.f32 %v2815, %v2971
        %v3002 = vadd.f32 %v2816, %v2973
        %v3003 = vadd.f32 %v2817, %v2977
        %v3004 = vadd.f32 %v2818, %v2979
        %v3005 = vadd.f32 %v2819, %v2981
        %v3006 = vadd.f32 %v2820, %v2983
        %v3007 = vadd.f32 %v2821, %v2987
        %v3008 = vadd.f32 %v2822, %v2989
        %v3009 = vadd.f32 %v2823, %v2991
        %v3010 = vadd.f32 %v2824, %v2993
        %s3011 = scalar_lea.vmem [#allocation6], 1248
        %v3012 = vld [vmem:[%s3011] sm:$0xff]
        %v3013 = vld [vmem:[%s3011 + $0x8] sm:$0xff]
        %v3014 = vld [vmem:[%s3011 + $0x10] sm:$0xff]
        %v3015 = vld [vmem:[%s3011 + $0x18] sm:$0xff]
        %v3016 = vld [vmem:[%s3011 + $0x20] sm:$0xff]
        %v3017 = vld [vmem:[%s3011 + $0x28] sm:$0xff]
        %v3018 = vld [vmem:[%s3011 + $0x30] sm:$0xff]
        %v3019 = vld [vmem:[%s3011 + $0x38] sm:$0xff]
        %v3020 = vld [vmem:[%s3011 + $0x40] sm:$0xff]
        %v3021 = vld [vmem:[%s3011 + $0x48] sm:$0xff]
        %v3022 = vld [vmem:[%s3011 + $0x50] sm:$0xff]
        %v3023 = vld [vmem:[%s3011 + $0x58] sm:$0xff]
        %v3036 = vunpack.c.l.b16 %v3012
        %v3037 = vunpack.c.h.b16 %v3012
        %v3038 = vunpack.c.l.b16 %v3013
        %v3039 = vunpack.c.h.b16 %v3013
        %v3040 = vunpack.c.l.b16 %v3014
        %v3041 = vunpack.c.h.b16 %v3014
        %v3042 = vunpack.c.l.b16 %v3015
        %v3043 = vunpack.c.h.b16 %v3015
        %v3044 = vunpack.c.l.b16 %v3016
        %v3045 = vunpack.c.h.b16 %v3016
        %v3046 = vunpack.c.l.b16 %v3017
        %v3047 = vunpack.c.h.b16 %v3017
        %v3048 = vunpack.c.l.b16 %v3018
        %v3049 = vunpack.c.h.b16 %v3018
        %v3050 = vunpack.c.l.b16 %v3019
        %v3051 = vunpack.c.h.b16 %v3019
        %v3052 = vunpack.c.l.b16 %v3020
        %v3053 = vunpack.c.h.b16 %v3020
        %v3054 = vunpack.c.l.b16 %v3021
        %v3055 = vunpack.c.h.b16 %v3021
        %v3056 = vunpack.c.l.b16 %v3022
        %v3057 = vunpack.c.h.b16 %v3022
        %v3058 = vunpack.c.l.b16 %v3023
        %v3059 = vunpack.c.h.b16 %v3023
        %v3060 = vpack.c.b16 %v3038, %v3036
        %v3061 = vpack.c.b16 %v3039, %v3037
        %v3062 = vpack.c.b16 %v3042, %v3040
        %v3063 = vpack.c.b16 %v3043, %v3041
        %v3064 = vpack.c.b16 %v3046, %v3044
        %v3065 = vpack.c.b16 %v3047, %v3045
        %v3066 = vpack.c.b16 %v3050, %v3048
        %v3067 = vpack.c.b16 %v3051, %v3049
        %v3068 = vpack.c.b16 %v3054, %v3052
        %v3069 = vpack.c.b16 %v3055, %v3053
        %v3070 = vpack.c.b16 %v3058, %v3056
        %v3071 = vpack.c.b16 %v3059, %v3057
        %3084 = vmatprep.subr.bf16.mxu0 0
        %3085 = vmatpush1.bf16.msra.mxu0 0
        %3086 = vmatprep.subr.bf16.mxu0 0
        %3087 = vmatpush1.bf16.msra.mxu0 0
        %3088 = vmatprep.subr.bf16.mxu0 %v3071
        %3089 = vmatpush1.bf16.msra.mxu0 %v3070
        %3090 = vmatprep.subr.bf16.mxu0 %v3069
        %3091 = vmatpush1.bf16.msra.mxu0 %v3068
        %3092 = vmatprep.subr.bf16.mxu0 %v3067
        %3093 = vmatpush1.bf16.msra.mxu0 %v3066
        %3094 = vmatprep.subr.bf16.mxu0 %v3065
        %3095 = vmatpush1.bf16.msra.mxu0 %v3064
        %3096 = vmatprep.subr.bf16.mxu0 %v3063
        %3097 = vmatpush1.bf16.msra.mxu0 %v3062
        %3098 = vmatprep.subr.bf16.mxu0 %v3061
        %3099 = vmatpush1.bf16.msra.mxu0 %v3060
        %3100 = vmatprep.subr.bf16.mxu0 0
        %3101 = vmatpush2.bf16.msra.mxu0 0
        %3102 = vmatprep.subr.bf16.mxu0 0
        %3103 = vmatpush2.bf16.msra.mxu0 0
        %3104 = vmatprep.subr.bf16.mxu0 0
        %3105 = vmatpush2.bf16.msra.mxu0 0
        %3106 = vmatprep.subr.bf16.mxu0 0
        %3107 = vmatpush2.bf16.msra.mxu0 0
        %3108 = vmatprep.subr.bf16.mxu0 0
        %3109 = vmatpush2.bf16.msra.mxu0 0
        %3110 = vmatprep.subr.bf16.mxu0 0
        %3111 = vmatpush2.bf16.msra.mxu0 0
        %3112 = vmatprep.subr.bf16.mxu0 0
        %3113 = vmatpush2.bf16.msra.mxu0 0
        %3114 = vmatprep.subr.bf16.mxu0 0
        %3115 = vmatpush2.bf16.msra.mxu0 0
        %3116 = vmatprep.mubr.bf16.mxu0 0
        %3117 = vmatmul.mubr.bf16.gmra.mxu0 %v1454
        %v3118 = vpop.f32.mrf.mxu0
        %v3119 = vadd.f32 0.0, %v3118
        %v3120 = vpop.f32.mrf.mxu0
        %v3121 = vadd.f32 0.0, %v3120
        %v3122 = vpop.f32.mrf.mxu0
        %v3123 = vadd.f32 0.0, %v3122
        %v3124 = vpop.f32.mrf.mxu0
        %v3125 = vadd.f32 0.0, %v3124
        %3126 = vmatprep.mubr.bf16.mxu0 0
        %3127 = vmatmul.mubr.bf16.gmra.mxu0 %v1457
        %v3128 = vpop.f32.mrf.mxu0
        %v3129 = vadd.f32 0.0, %v3128
        %v3130 = vpop.f32.mrf.mxu0
        %v3131 = vadd.f32 0.0, %v3130
        %v3132 = vpop.f32.mrf.mxu0
        %v3133 = vadd.f32 0.0, %v3132
        %v3134 = vpop.f32.mrf.mxu0
        %v3135 = vadd.f32 0.0, %v3134
        %3136 = vmatprep.mubr.bf16.mxu0 0
        %3137 = vmatmul.mubr.bf16.gmra.mxu0 %v1460
        %v3138 = vpop.f32.mrf.mxu0
        %v3139 = vadd.f32 0.0, %v3138
        %v3140 = vpop.f32.mrf.mxu0
        %v3141 = vadd.f32 0.0, %v3140
        %v3142 = vpop.f32.mrf.mxu0
        %v3143 = vadd.f32 0.0, %v3142
        %v3144 = vpop.f32.mrf.mxu0
        %v3145 = vadd.f32 0.0, %v3144
        %3146 = vmatprep.mubr.bf16.mxu0 0
        %3147 = vmatmul.mubr.bf16.gmra.mxu0 %v1463
        %v3148 = vpop.f32.mrf.mxu0
        %v3149 = vadd.f32 0.0, %v3148
        %v3150 = vpop.f32.mrf.mxu0
        %v3151 = vadd.f32 0.0, %v3150
        %v3152 = vpop.f32.mrf.mxu0
        %v3153 = vadd.f32 0.0, %v3152
        %v3154 = vpop.f32.mrf.mxu0
        %v3155 = vadd.f32 0.0, %v3154
        %3156 = vdwg.mxu0
        %v3157 = vadd.f32 %v2995, %v3119
        %v3158 = vadd.f32 %v2996, %v3121
        %v3159 = vadd.f32 %v2997, %v3123
        %v3160 = vadd.f32 %v2998, %v3125
        %v3161 = vadd.f32 %v2999, %v3129
        %v3162 = vadd.f32 %v3000, %v3131
        %v3163 = vadd.f32 %v3001, %v3133
        %v3164 = vadd.f32 %v3002, %v3135
        %v3165 = vadd.f32 %v3003, %v3139
        %v3166 = vadd.f32 %v3004, %v3141
        %v3167 = vadd.f32 %v3005, %v3143
        %v3168 = vadd.f32 %v3006, %v3145
        %v3169 = vadd.f32 %v3007, %v3149
        %v3170 = vadd.f32 %v3008, %v3151
        %v3171 = vadd.f32 %v3009, %v3153
        %v3172 = vadd.f32 %v3010, %v3155
        %v3173 = vld [vmem:[%s324 + $0x4] sm:$0xff]
        %v3174 = vld [vmem:[%s324 + $0x14] sm:$0xff]
        %v3175 = vld [vmem:[%s324 + $0x24] sm:$0xff]
        %v3176 = vld [vmem:[%s324 + $0x34] sm:$0xff]
        %v3177 = vld [vmem:[%s324 + $0x44] sm:$0xff]
        %v3178 = vld [vmem:[%s324 + $0x54] sm:$0xff]
        %v3179 = vld [vmem:[%s324 + $0x64] sm:$0xff]
        %v3180 = vld [vmem:[%s324 + $0x74] sm:$0xff]
        %v3181 = vpack.c.bf16 %v3174, %v3173
        %v3182 = vpack.c.bf16 %v3176, %v3175
        %v3183 = vpack.c.bf16 %v3178, %v3177
        %v3184 = vpack.c.bf16 %v3180, %v3179
        %s3185 = scalar_lea.vmem [#allocation6], 1344
        %v3186 = vld [vmem:[%s3185] sm:$0xff]
        %v3187 = vld [vmem:[%s3185 + $0x8] sm:$0xff]
        %v3188 = vld [vmem:[%s3185 + $0x10] sm:$0xff]
        %v3189 = vld [vmem:[%s3185 + $0x18] sm:$0xff]
        %v3190 = vld [vmem:[%s3185 + $0x20] sm:$0xff]
        %v3191 = vld [vmem:[%s3185 + $0x28] sm:$0xff]
        %v3192 = vld [vmem:[%s3185 + $0x30] sm:$0xff]
        %v3193 = vld [vmem:[%s3185 + $0x38] sm:$0xff]
        %v3194 = vld [vmem:[%s3185 + $0x40] sm:$0xff]
        %v3195 = vld [vmem:[%s3185 + $0x48] sm:$0xff]
        %v3196 = vld [vmem:[%s3185 + $0x50] sm:$0xff]
        %v3197 = vld [vmem:[%s3185 + $0x58] sm:$0xff]
        %v3210 = vunpack.c.l.b16 %v3186
        %v3211 = vunpack.c.h.b16 %v3186
        %v3212 = vunpack.c.l.b16 %v3187
        %v3213 = vunpack.c.h.b16 %v3187
        %v3214 = vunpack.c.l.b16 %v3188
        %v3215 = vunpack.c.h.b16 %v3188
        %v3216 = vunpack.c.l.b16 %v3189
        %v3217 = vunpack.c.h.b16 %v3189
        %v3218 = vunpack.c.l.b16 %v3190
        %v3219 = vunpack.c.h.b16 %v3190
        %v3220 = vunpack.c.l.b16 %v3191
        %v3221 = vunpack.c.h.b16 %v3191
        %v3222 = vunpack.c.l.b16 %v3192
        %v3223 = vunpack.c.h.b16 %v3192
        %v3224 = vunpack.c.l.b16 %v3193
        %v3225 = vunpack.c.h.b16 %v3193
        %v3226 = vunpack.c.l.b16 %v3194
        %v3227 = vunpack.c.h.b16 %v3194
        %v3228 = vunpack.c.l.b16 %v3195
        %v3229 = vunpack.c.h.b16 %v3195
        %v3230 = vunpack.c.l.b16 %v3196
        %v3231 = vunpack.c.h.b16 %v3196
        %v3232 = vunpack.c.l.b16 %v3197
        %v3233 = vunpack.c.h.b16 %v3197
        %v3234 = vpack.c.b16 %v3212, %v3210
        %v3235 = vpack.c.b16 %v3213, %v3211
        %v3236 = vpack.c.b16 %v3216, %v3214
        %v3237 = vpack.c.b16 %v3217, %v3215
        %v3238 = vpack.c.b16 %v3220, %v3218
        %v3239 = vpack.c.b16 %v3221, %v3219
        %v3240 = vpack.c.b16 %v3224, %v3222
        %v3241 = vpack.c.b16 %v3225, %v3223
        %v3242 = vpack.c.b16 %v3228, %v3226
        %v3243 = vpack.c.b16 %v3229, %v3227
        %v3244 = vpack.c.b16 %v3232, %v3230
        %v3245 = vpack.c.b16 %v3233, %v3231
        %v3259 = vsel %vm313, %v3181, 0
        %v3262 = vsel %vm313, %v3182, 0
        %v3265 = vsel %vm313, %v3183, 0
        %v3268 = vsel %vm313, %v3184, 0
        %3270 = vmatprep.subr.bf16.mxu0 0
        %3271 = vmatpush1.bf16.msra.mxu0 0
        %3272 = vmatprep.subr.bf16.mxu0 0
        %3273 = vmatpush1.bf16.msra.mxu0 0
        %3274 = vmatprep.subr.bf16.mxu0 %v3245
        %3275 = vmatpush1.bf16.msra.mxu0 %v3244
        %3276 = vmatprep.subr.bf16.mxu0 %v3243
        %3277 = vmatpush1.bf16.msra.mxu0 %v3242
        %3278 = vmatprep.subr.bf16.mxu0 %v3241
        %3279 = vmatpush1.bf16.msra.mxu0 %v3240
        %3280 = vmatprep.subr.bf16.mxu0 %v3239
        %3281 = vmatpush1.bf16.msra.mxu0 %v3238
        %3282 = vmatprep.subr.bf16.mxu0 %v3237
        %3283 = vmatpush1.bf16.msra.mxu0 %v3236
        %3284 = vmatprep.subr.bf16.mxu0 %v3235
        %3285 = vmatpush1.bf16.msra.mxu0 %v3234
        %3286 = vmatprep.subr.bf16.mxu0 0
        %3287 = vmatpush2.bf16.msra.mxu0 0
        %3288 = vmatprep.subr.bf16.mxu0 0
        %3289 = vmatpush2.bf16.msra.mxu0 0
        %3290 = vmatprep.subr.bf16.mxu0 0
        %3291 = vmatpush2.bf16.msra.mxu0 0
        %3292 = vmatprep.subr.bf16.mxu0 0
        %3293 = vmatpush2.bf16.msra.mxu0 0
        %3294 = vmatprep.subr.bf16.mxu0 0
        %3295 = vmatpush2.bf16.msra.mxu0 0
        %3296 = vmatprep.subr.bf16.mxu0 0
        %3297 = vmatpush2.bf16.msra.mxu0 0
        %3298 = vmatprep.subr.bf16.mxu0 0
        %3299 = vmatpush2.bf16.msra.mxu0 0
        %3300 = vmatprep.subr.bf16.mxu0 0
        %3301 = vmatpush2.bf16.msra.mxu0 0
        %3302 = vmatprep.mubr.bf16.mxu0 0
        %3303 = vmatmul.mubr.bf16.gmra.mxu0 %v3259
        %v3304 = vpop.f32.mrf.mxu0
        %v3305 = vadd.f32 0.0, %v3304
        %v3306 = vpop.f32.mrf.mxu0
        %v3307 = vadd.f32 0.0, %v3306
        %v3308 = vpop.f32.mrf.mxu0
        %v3309 = vadd.f32 0.0, %v3308
        %v3310 = vpop.f32.mrf.mxu0
        %v3311 = vadd.f32 0.0, %v3310
        %3312 = vmatprep.mubr.bf16.mxu0 0
        %3313 = vmatmul.mubr.bf16.gmra.mxu0 %v3262
        %v3314 = vpop.f32.mrf.mxu0
        %v3315 = vadd.f32 0.0, %v3314
        %v3316 = vpop.f32.mrf.mxu0
        %v3317 = vadd.f32 0.0, %v3316
        %v3318 = vpop.f32.mrf.mxu0
        %v3319 = vadd.f32 0.0, %v3318
        %v3320 = vpop.f32.mrf.mxu0
        %v3321 = vadd.f32 0.0, %v3320
        %3322 = vmatprep.mubr.bf16.mxu0 0
        %3323 = vmatmul.mubr.bf16.gmra.mxu0 %v3265
        %v3324 = vpop.f32.mrf.mxu0
        %v3325 = vadd.f32 0.0, %v3324
        %v3326 = vpop.f32.mrf.mxu0
        %v3327 = vadd.f32 0.0, %v3326
        %v3328 = vpop.f32.mrf.mxu0
        %v3329 = vadd.f32 0.0, %v3328
        %v3330 = vpop.f32.mrf.mxu0
        %v3331 = vadd.f32 0.0, %v3330
        %3332 = vmatprep.mubr.bf16.mxu0 0
        %3333 = vmatmul.mubr.bf16.gmra.mxu0 %v3268
        %v3334 = vpop.f32.mrf.mxu0
        %v3335 = vadd.f32 0.0, %v3334
        %v3336 = vpop.f32.mrf.mxu0
        %v3337 = vadd.f32 0.0, %v3336
        %v3338 = vpop.f32.mrf.mxu0
        %v3339 = vadd.f32 0.0, %v3338
        %v3340 = vpop.f32.mrf.mxu0
        %v3341 = vadd.f32 0.0, %v3340
        %3342 = vdwg.mxu0
        %v3343 = vadd.f32 %v3157, %v3305
        %v3344 = vadd.f32 %v3158, %v3307
        %v3345 = vadd.f32 %v3159, %v3309
        %v3346 = vadd.f32 %v3160, %v3311
        %v3347 = vadd.f32 %v3161, %v3315
        %v3348 = vadd.f32 %v3162, %v3317
        %v3349 = vadd.f32 %v3163, %v3319
        %v3350 = vadd.f32 %v3164, %v3321
        %v3351 = vadd.f32 %v3165, %v3325
        %v3352 = vadd.f32 %v3166, %v3327
        %v3353 = vadd.f32 %v3167, %v3329
        %v3354 = vadd.f32 %v3168, %v3331
        %v3355 = vadd.f32 %v3169, %v3335
        %v3356 = vadd.f32 %v3170, %v3337
        %v3357 = vadd.f32 %v3171, %v3339
        %v3358 = vadd.f32 %v3172, %v3341
        %s3359 = scalar_lea.vmem [#allocation2], 64
        %v3360 = vld [vmem:[%s3359] sm:$0xff]
        %v3361 = vld [vmem:[%s3359 + $0x10] sm:$0xff]
        %v3362 = vld [vmem:[%s3359 + $0x20] sm:$0xff]
        %v3363 = vld [vmem:[%s3359 + $0x30] sm:$0xff]
        %v3364 = vld [vmem:[%s3359 + $0x40] sm:$0xff]
        %v3365 = vld [vmem:[%s3359 + $0x50] sm:$0xff]
        %v3366 = vld [vmem:[%s3359 + $0x60] sm:$0xff]
        %v3367 = vld [vmem:[%s3359 + $0x70] sm:$0xff]
        %v3368 = vpack.c.bf16 %v3361, %v3360
        %v3369 = vpack.c.bf16 %v3363, %v3362
        %v3370 = vpack.c.bf16 %v3365, %v3364
        %v3371 = vpack.c.bf16 %v3367, %v3366
        %s3372 = scalar_lea.vmem [#allocation6], 1440
        %v3373 = vld [vmem:[%s3372] sm:$0xff]
        %v3374 = vld [vmem:[%s3372 + $0x8] sm:$0xff]
        %v3375 = vld [vmem:[%s3372 + $0x10] sm:$0xff]
        %v3376 = vld [vmem:[%s3372 + $0x18] sm:$0xff]
        %v3377 = vld [vmem:[%s3372 + $0x20] sm:$0xff]
        %v3378 = vld [vmem:[%s3372 + $0x28] sm:$0xff]
        %v3379 = vld [vmem:[%s3372 + $0x30] sm:$0xff]
        %v3380 = vld [vmem:[%s3372 + $0x38] sm:$0xff]
        %v3381 = vld [vmem:[%s3372 + $0x40] sm:$0xff]
        %v3382 = vld [vmem:[%s3372 + $0x48] sm:$0xff]
        %v3383 = vld [vmem:[%s3372 + $0x50] sm:$0xff]
        %v3384 = vld [vmem:[%s3372 + $0x58] sm:$0xff]
        %v3397 = vunpack.c.l.b16 %v3373
        %v3398 = vunpack.c.h.b16 %v3373
        %v3399 = vunpack.c.l.b16 %v3374
        %v3400 = vunpack.c.h.b16 %v3374
        %v3401 = vunpack.c.l.b16 %v3375
        %v3402 = vunpack.c.h.b16 %v3375
        %v3403 = vunpack.c.l.b16 %v3376
        %v3404 = vunpack.c.h.b16 %v3376
        %v3405 = vunpack.c.l.b16 %v3377
        %v3406 = vunpack.c.h.b16 %v3377
        %v3407 = vunpack.c.l.b16 %v3378
        %v3408 = vunpack.c.h.b16 %v3378
        %v3409 = vunpack.c.l.b16 %v3379
        %v3410 = vunpack.c.h.b16 %v3379
        %v3411 = vunpack.c.l.b16 %v3380
        %v3412 = vunpack.c.h.b16 %v3380
        %v3413 = vunpack.c.l.b16 %v3381
        %v3414 = vunpack.c.h.b16 %v3381
        %v3415 = vunpack.c.l.b16 %v3382
        %v3416 = vunpack.c.h.b16 %v3382
        %v3417 = vunpack.c.l.b16 %v3383
        %v3418 = vunpack.c.h.b16 %v3383
        %v3419 = vunpack.c.l.b16 %v3384
        %v3420 = vunpack.c.h.b16 %v3384
        %v3421 = vpack.c.b16 %v3399, %v3397
        %v3422 = vpack.c.b16 %v3400, %v3398
        %v3423 = vpack.c.b16 %v3403, %v3401
        %v3424 = vpack.c.b16 %v3404, %v3402
        %v3425 = vpack.c.b16 %v3407, %v3405
        %v3426 = vpack.c.b16 %v3408, %v3406
        %v3427 = vpack.c.b16 %v3411, %v3409
        %v3428 = vpack.c.b16 %v3412, %v3410
        %v3429 = vpack.c.b16 %v3415, %v3413
        %v3430 = vpack.c.b16 %v3416, %v3414
        %v3431 = vpack.c.b16 %v3419, %v3417
        %v3432 = vpack.c.b16 %v3420, %v3418
        %v3446 = vsel %vm313, %v3368, 0
        %v3449 = vsel %vm313, %v3369, 0
        %v3452 = vsel %vm313, %v3370, 0
        %v3455 = vsel %vm313, %v3371, 0
        %3457 = vmatprep.subr.bf16.mxu0 0
        %3458 = vmatpush1.bf16.msra.mxu0 0
        %3459 = vmatprep.subr.bf16.mxu0 0
        %3460 = vmatpush1.bf16.msra.mxu0 0
        %3461 = vmatprep.subr.bf16.mxu0 %v3432
        %3462 = vmatpush1.bf16.msra.mxu0 %v3431
        %3463 = vmatprep.subr.bf16.mxu0 %v3430
        %3464 = vmatpush1.bf16.msra.mxu0 %v3429
        %3465 = vmatprep.subr.bf16.mxu0 %v3428
        %3466 = vmatpush1.bf16.msra.mxu0 %v3427
        %3467 = vmatprep.subr.bf16.mxu0 %v3426
        %3468 = vmatpush1.bf16.msra.mxu0 %v3425
        %3469 = vmatprep.subr.bf16.mxu0 %v3424
        %3470 = vmatpush1.bf16.msra.mxu0 %v3423
        %3471 = vmatprep.subr.bf16.mxu0 %v3422
        %3472 = vmatpush1.bf16.msra.mxu0 %v3421
        %3473 = vmatprep.subr.bf16.mxu0 0
        %3474 = vmatpush2.bf16.msra.mxu0 0
        %3475 = vmatprep.subr.bf16.mxu0 0
        %3476 = vmatpush2.bf16.msra.mxu0 0
        %3477 = vmatprep.subr.bf16.mxu0 0
        %3478 = vmatpush2.bf16.msra.mxu0 0
        %3479 = vmatprep.subr.bf16.mxu0 0
        %3480 = vmatpush2.bf16.msra.mxu0 0
        %3481 = vmatprep.subr.bf16.mxu0 0
        %3482 = vmatpush2.bf16.msra.mxu0 0
        %3483 = vmatprep.subr.bf16.mxu0 0
        %3484 = vmatpush2.bf16.msra.mxu0 0
        %3485 = vmatprep.subr.bf16.mxu0 0
        %3486 = vmatpush2.bf16.msra.mxu0 0
        %3487 = vmatprep.subr.bf16.mxu0 0
        %3488 = vmatpush2.bf16.msra.mxu0 0
        %3489 = vmatprep.mubr.bf16.mxu0 0
        %3490 = vmatmul.mubr.bf16.gmra.mxu0 %v3446
        %v3491 = vpop.f32.mrf.mxu0
        %v3492 = vadd.f32 0.0, %v3491
        %v3493 = vpop.f32.mrf.mxu0
        %v3494 = vadd.f32 0.0, %v3493
        %v3495 = vpop.f32.mrf.mxu0
        %v3496 = vadd.f32 0.0, %v3495
        %v3497 = vpop.f32.mrf.mxu0
        %v3498 = vadd.f32 0.0, %v3497
        %3499 = vmatprep.mubr.bf16.mxu0 0
        %3500 = vmatmul.mubr.bf16.gmra.mxu0 %v3449
        %v3501 = vpop.f32.mrf.mxu0
        %v3502 = vadd.f32 0.0, %v3501
        %v3503 = vpop.f32.mrf.mxu0
        %v3504 = vadd.f32 0.0, %v3503
        %v3505 = vpop.f32.mrf.mxu0
        %v3506 = vadd.f32 0.0, %v3505
        %v3507 = vpop.f32.mrf.mxu0
        %v3508 = vadd.f32 0.0, %v3507
        %3509 = vmatprep.mubr.bf16.mxu0 0
        %3510 = vmatmul.mubr.bf16.gmra.mxu0 %v3452
        %v3511 = vpop.f32.mrf.mxu0
        %v3512 = vadd.f32 0.0, %v3511
        %v3513 = vpop.f32.mrf.mxu0
        %v3514 = vadd.f32 0.0, %v3513
        %v3515 = vpop.f32.mrf.mxu0
        %v3516 = vadd.f32 0.0, %v3515
        %v3517 = vpop.f32.mrf.mxu0
        %v3518 = vadd.f32 0.0, %v3517
        %3519 = vmatprep.mubr.bf16.mxu0 0
        %3520 = vmatmul.mubr.bf16.gmra.mxu0 %v3455
        %v3521 = vpop.f32.mrf.mxu0
        %v3522 = vadd.f32 0.0, %v3521
        %v3523 = vpop.f32.mrf.mxu0
        %v3524 = vadd.f32 0.0, %v3523
        %v3525 = vpop.f32.mrf.mxu0
        %v3526 = vadd.f32 0.0, %v3525
        %v3527 = vpop.f32.mrf.mxu0
        %v3528 = vadd.f32 0.0, %v3527
        %3529 = vdwg.mxu0
        %v3530 = vadd.f32 %v3343, %v3492
        %v3531 = vadd.f32 %v3344, %v3494
        %v3532 = vadd.f32 %v3345, %v3496
        %v3533 = vadd.f32 %v3346, %v3498
        %v3534 = vadd.f32 %v3347, %v3502
        %v3535 = vadd.f32 %v3348, %v3504
        %v3536 = vadd.f32 %v3349, %v3506
        %v3537 = vadd.f32 %v3350, %v3508
        %v3538 = vadd.f32 %v3351, %v3512
        %v3539 = vadd.f32 %v3352, %v3514
        %v3540 = vadd.f32 %v3353, %v3516
        %v3541 = vadd.f32 %v3354, %v3518
        %v3542 = vadd.f32 %v3355, %v3522
        %v3543 = vadd.f32 %v3356, %v3524
        %v3544 = vadd.f32 %v3357, %v3526
        %v3545 = vadd.f32 %v3358, %v3528
        %v3546 = vld [vmem:[%s3359 + $0x2] sm:$0xff]
        %v3547 = vld [vmem:[%s3359 + $0x12] sm:$0xff]
        %v3548 = vld [vmem:[%s3359 + $0x22] sm:$0xff]
        %v3549 = vld [vmem:[%s3359 + $0x32] sm:$0xff]
        %v3550 = vld [vmem:[%s3359 + $0x42] sm:$0xff]
        %v3551 = vld [vmem:[%s3359 + $0x52] sm:$0xff]
        %v3552 = vld [vmem:[%s3359 + $0x62] sm:$0xff]
        %v3553 = vld [vmem:[%s3359 + $0x72] sm:$0xff]
        %v3554 = vpack.c.bf16 %v3547, %v3546
        %v3555 = vpack.c.bf16 %v3549, %v3548
        %v3556 = vpack.c.bf16 %v3551, %v3550
        %v3557 = vpack.c.bf16 %v3553, %v3552
        %s3558 = scalar_lea.vmem [#allocation6], 1536
        %v3559 = vld [vmem:[%s3558] sm:$0xff]
        %v3560 = vld [vmem:[%s3558 + $0x8] sm:$0xff]
        %v3561 = vld [vmem:[%s3558 + $0x10] sm:$0xff]
        %v3562 = vld [vmem:[%s3558 + $0x18] sm:$0xff]
        %v3563 = vld [vmem:[%s3558 + $0x20] sm:$0xff]
        %v3564 = vld [vmem:[%s3558 + $0x28] sm:$0xff]
        %v3565 = vld [vmem:[%s3558 + $0x30] sm:$0xff]
        %v3566 = vld [vmem:[%s3558 + $0x38] sm:$0xff]
        %v3567 = vld [vmem:[%s3558 + $0x40] sm:$0xff]
        %v3568 = vld [vmem:[%s3558 + $0x48] sm:$0xff]
        %v3569 = vld [vmem:[%s3558 + $0x50] sm:$0xff]
        %v3570 = vld [vmem:[%s3558 + $0x58] sm:$0xff]
        %v3583 = vunpack.c.l.b16 %v3559
        %v3584 = vunpack.c.h.b16 %v3559
        %v3585 = vunpack.c.l.b16 %v3560
        %v3586 = vunpack.c.h.b16 %v3560
        %v3587 = vunpack.c.l.b16 %v3561
        %v3588 = vunpack.c.h.b16 %v3561
        %v3589 = vunpack.c.l.b16 %v3562
        %v3590 = vunpack.c.h.b16 %v3562
        %v3591 = vunpack.c.l.b16 %v3563
        %v3592 = vunpack.c.h.b16 %v3563
        %v3593 = vunpack.c.l.b16 %v3564
        %v3594 = vunpack.c.h.b16 %v3564
        %v3595 = vunpack.c.l.b16 %v3565
        %v3596 = vunpack.c.h.b16 %v3565
        %v3597 = vunpack.c.l.b16 %v3566
        %v3598 = vunpack.c.h.b16 %v3566
        %v3599 = vunpack.c.l.b16 %v3567
        %v3600 = vunpack.c.h.b16 %v3567
        %v3601 = vunpack.c.l.b16 %v3568
        %v3602 = vunpack.c.h.b16 %v3568
        %v3603 = vunpack.c.l.b16 %v3569
        %v3604 = vunpack.c.h.b16 %v3569
        %v3605 = vunpack.c.l.b16 %v3570
        %v3606 = vunpack.c.h.b16 %v3570
        %v3607 = vpack.c.b16 %v3585, %v3583
        %v3608 = vpack.c.b16 %v3586, %v3584
        %v3609 = vpack.c.b16 %v3589, %v3587
        %v3610 = vpack.c.b16 %v3590, %v3588
        %v3611 = vpack.c.b16 %v3593, %v3591
        %v3612 = vpack.c.b16 %v3594, %v3592
        %v3613 = vpack.c.b16 %v3597, %v3595
        %v3614 = vpack.c.b16 %v3598, %v3596
        %v3615 = vpack.c.b16 %v3601, %v3599
        %v3616 = vpack.c.b16 %v3602, %v3600
        %v3617 = vpack.c.b16 %v3605, %v3603
        %v3618 = vpack.c.b16 %v3606, %v3604
        %v3632 = vsel %vm313, %v3554, 0
        %v3635 = vsel %vm313, %v3555, 0
        %v3638 = vsel %vm313, %v3556, 0
        %v3641 = vsel %vm313, %v3557, 0
        %3643 = vmatprep.subr.bf16.mxu0 0
        %3644 = vmatpush1.bf16.msra.mxu0 0
        %3645 = vmatprep.subr.bf16.mxu0 0
        %3646 = vmatpush1.bf16.msra.mxu0 0
        %3647 = vmatprep.subr.bf16.mxu0 %v3618
        %3648 = vmatpush1.bf16.msra.mxu0 %v3617
        %3649 = vmatprep.subr.bf16.mxu0 %v3616
        %3650 = vmatpush1.bf16.msra.mxu0 %v3615
        %3651 = vmatprep.subr.bf16.mxu0 %v3614
        %3652 = vmatpush1.bf16.msra.mxu0 %v3613
        %3653 = vmatprep.subr.bf16.mxu0 %v3612
        %3654 = vmatpush1.bf16.msra.mxu0 %v3611
        %3655 = vmatprep.subr.bf16.mxu0 %v3610
        %3656 = vmatpush1.bf16.msra.mxu0 %v3609
        %3657 = vmatprep.subr.bf16.mxu0 %v3608
        %3658 = vmatpush1.bf16.msra.mxu0 %v3607
        %3659 = vmatprep.subr.bf16.mxu0 0
        %3660 = vmatpush2.bf16.msra.mxu0 0
        %3661 = vmatprep.subr.bf16.mxu0 0
        %3662 = vmatpush2.bf16.msra.mxu0 0
        %3663 = vmatprep.subr.bf16.mxu0 0
        %3664 = vmatpush2.bf16.msra.mxu0 0
        %3665 = vmatprep.subr.bf16.mxu0 0
        %3666 = vmatpush2.bf16.msra.mxu0 0
        %3667 = vmatprep.subr.bf16.mxu0 0
        %3668 = vmatpush2.bf16.msra.mxu0 0
        %3669 = vmatprep.subr.bf16.mxu0 0
        %3670 = vmatpush2.bf16.msra.mxu0 0
        %3671 = vmatprep.subr.bf16.mxu0 0
        %3672 = vmatpush2.bf16.msra.mxu0 0
        %3673 = vmatprep.subr.bf16.mxu0 0
        %3674 = vmatpush2.bf16.msra.mxu0 0
        %3675 = vmatprep.mubr.bf16.mxu0 0
        %3676 = vmatmul.mubr.bf16.gmra.mxu0 %v3632
        %v3677 = vpop.f32.mrf.mxu0
        %v3678 = vadd.f32 0.0, %v3677
        %v3679 = vpop.f32.mrf.mxu0
        %v3680 = vadd.f32 0.0, %v3679
        %v3681 = vpop.f32.mrf.mxu0
        %v3682 = vadd.f32 0.0, %v3681
        %v3683 = vpop.f32.mrf.mxu0
        %v3684 = vadd.f32 0.0, %v3683
        %3685 = vmatprep.mubr.bf16.mxu0 0
        %3686 = vmatmul.mubr.bf16.gmra.mxu0 %v3635
        %v3687 = vpop.f32.mrf.mxu0
        %v3688 = vadd.f32 0.0, %v3687
        %v3689 = vpop.f32.mrf.mxu0
        %v3690 = vadd.f32 0.0, %v3689
        %v3691 = vpop.f32.mrf.mxu0
        %v3692 = vadd.f32 0.0, %v3691
        %v3693 = vpop.f32.mrf.mxu0
        %v3694 = vadd.f32 0.0, %v3693
        %3695 = vmatprep.mubr.bf16.mxu0 0
        %3696 = vmatmul.mubr.bf16.gmra.mxu0 %v3638
        %v3697 = vpop.f32.mrf.mxu0
        %v3698 = vadd.f32 0.0, %v3697
        %v3699 = vpop.f32.mrf.mxu0
        %v3700 = vadd.f32 0.0, %v3699
        %v3701 = vpop.f32.mrf.mxu0
        %v3702 = vadd.f32 0.0, %v3701
        %v3703 = vpop.f32.mrf.mxu0
        %v3704 = vadd.f32 0.0, %v3703
        %3705 = vmatprep.mubr.bf16.mxu0 0
        %3706 = vmatmul.mubr.bf16.gmra.mxu0 %v3641
        %v3707 = vpop.f32.mrf.mxu0
        %v3708 = vadd.f32 0.0, %v3707
        %v3709 = vpop.f32.mrf.mxu0
        %v3710 = vadd.f32 0.0, %v3709
        %v3711 = vpop.f32.mrf.mxu0
        %v3712 = vadd.f32 0.0, %v3711
        %v3713 = vpop.f32.mrf.mxu0
        %v3714 = vadd.f32 0.0, %v3713
        %3715 = vdwg.mxu0
        %v3716 = vadd.f32 %v3530, %v3678
        %v3717 = vadd.f32 %v3531, %v3680
        %v3718 = vadd.f32 %v3532, %v3682
        %v3719 = vadd.f32 %v3533, %v3684
        %v3720 = vadd.f32 %v3534, %v3688
        %v3721 = vadd.f32 %v3535, %v3690
        %v3722 = vadd.f32 %v3536, %v3692
        %v3723 = vadd.f32 %v3537, %v3694
        %v3724 = vadd.f32 %v3538, %v3698
        %v3725 = vadd.f32 %v3539, %v3700
        %v3726 = vadd.f32 %v3540, %v3702
        %v3727 = vadd.f32 %v3541, %v3704
        %v3728 = vadd.f32 %v3542, %v3708
        %v3729 = vadd.f32 %v3543, %v3710
        %v3730 = vadd.f32 %v3544, %v3712
        %v3731 = vadd.f32 %v3545, %v3714
        %v3732 = vld [vmem:[%s3359 + $0x4] sm:$0xff]
        %v3733 = vld [vmem:[%s3359 + $0x14] sm:$0xff]
        %v3734 = vld [vmem:[%s3359 + $0x24] sm:$0xff]
        %v3735 = vld [vmem:[%s3359 + $0x34] sm:$0xff]
        %v3736 = vld [vmem:[%s3359 + $0x44] sm:$0xff]
        %v3737 = vld [vmem:[%s3359 + $0x54] sm:$0xff]
        %v3738 = vld [vmem:[%s3359 + $0x64] sm:$0xff]
        %v3739 = vld [vmem:[%s3359 + $0x74] sm:$0xff]
        %v3740 = vpack.c.bf16 %v3733, %v3732
        %v3741 = vpack.c.bf16 %v3735, %v3734
        %v3742 = vpack.c.bf16 %v3737, %v3736
        %v3743 = vpack.c.bf16 %v3739, %v3738
        %s3744 = scalar_lea.vmem [#allocation6], 1632
        %v3745 = vld [vmem:[%s3744] sm:$0xff]
        %v3746 = vld [vmem:[%s3744 + $0x8] sm:$0xff]
        %v3747 = vld [vmem:[%s3744 + $0x10] sm:$0xff]
        %v3748 = vld [vmem:[%s3744 + $0x18] sm:$0xff]
        %v3749 = vld [vmem:[%s3744 + $0x20] sm:$0xff]
        %v3750 = vld [vmem:[%s3744 + $0x28] sm:$0xff]
        %v3751 = vld [vmem:[%s3744 + $0x30] sm:$0xff]
        %v3752 = vld [vmem:[%s3744 + $0x38] sm:$0xff]
        %v3753 = vld [vmem:[%s3744 + $0x40] sm:$0xff]
        %v3754 = vld [vmem:[%s3744 + $0x48] sm:$0xff]
        %v3755 = vld [vmem:[%s3744 + $0x50] sm:$0xff]
        %v3756 = vld [vmem:[%s3744 + $0x58] sm:$0xff]
        %v3769 = vunpack.c.l.b16 %v3745
        %v3770 = vunpack.c.h.b16 %v3745
        %v3771 = vunpack.c.l.b16 %v3746
        %v3772 = vunpack.c.h.b16 %v3746
        %v3773 = vunpack.c.l.b16 %v3747
        %v3774 = vunpack.c.h.b16 %v3747
        %v3775 = vunpack.c.l.b16 %v3748
        %v3776 = vunpack.c.h.b16 %v3748
        %v3777 = vunpack.c.l.b16 %v3749
        %v3778 = vunpack.c.h.b16 %v3749
        %v3779 = vunpack.c.l.b16 %v3750
        %v3780 = vunpack.c.h.b16 %v3750
        %v3781 = vunpack.c.l.b16 %v3751
        %v3782 = vunpack.c.h.b16 %v3751
        %v3783 = vunpack.c.l.b16 %v3752
        %v3784 = vunpack.c.h.b16 %v3752
        %v3785 = vunpack.c.l.b16 %v3753
        %v3786 = vunpack.c.h.b16 %v3753
        %v3787 = vunpack.c.l.b16 %v3754
        %v3788 = vunpack.c.h.b16 %v3754
        %v3789 = vunpack.c.l.b16 %v3755
        %v3790 = vunpack.c.h.b16 %v3755
        %v3791 = vunpack.c.l.b16 %v3756
        %v3792 = vunpack.c.h.b16 %v3756
        %v3793 = vpack.c.b16 %v3771, %v3769
        %v3794 = vpack.c.b16 %v3772, %v3770
        %v3795 = vpack.c.b16 %v3775, %v3773
        %v3796 = vpack.c.b16 %v3776, %v3774
        %v3797 = vpack.c.b16 %v3779, %v3777
        %v3798 = vpack.c.b16 %v3780, %v3778
        %v3799 = vpack.c.b16 %v3783, %v3781
        %v3800 = vpack.c.b16 %v3784, %v3782
        %v3801 = vpack.c.b16 %v3787, %v3785
        %v3802 = vpack.c.b16 %v3788, %v3786
        %v3803 = vpack.c.b16 %v3791, %v3789
        %v3804 = vpack.c.b16 %v3792, %v3790
        %v3818 = vsel %vm313, %v3740, 0
        %v3821 = vsel %vm313, %v3741, 0
        %v3824 = vsel %vm313, %v3742, 0
        %v3827 = vsel %vm313, %v3743, 0
        %3829 = vmatprep.subr.bf16.mxu0 0
        %3830 = vmatpush1.bf16.msra.mxu0 0
        %3831 = vmatprep.subr.bf16.mxu0 0
        %3832 = vmatpush1.bf16.msra.mxu0 0
        %3833 = vmatprep.subr.bf16.mxu0 %v3804
        %3834 = vmatpush1.bf16.msra.mxu0 %v3803
        %3835 = vmatprep.subr.bf16.mxu0 %v3802
        %3836 = vmatpush1.bf16.msra.mxu0 %v3801
        %3837 = vmatprep.subr.bf16.mxu0 %v3800
        %3838 = vmatpush1.bf16.msra.mxu0 %v3799
        %3839 = vmatprep.subr.bf16.mxu0 %v3798
        %3840 = vmatpush1.bf16.msra.mxu0 %v3797
        %3841 = vmatprep.subr.bf16.mxu0 %v3796
        %3842 = vmatpush1.bf16.msra.mxu0 %v3795
        %3843 = vmatprep.subr.bf16.mxu0 %v3794
        %3844 = vmatpush1.bf16.msra.mxu0 %v3793
        %3845 = vmatprep.subr.bf16.mxu0 0
        %3846 = vmatpush2.bf16.msra.mxu0 0
        %3847 = vmatprep.subr.bf16.mxu0 0
        %3848 = vmatpush2.bf16.msra.mxu0 0
        %3849 = vmatprep.subr.bf16.mxu0 0
        %3850 = vmatpush2.bf16.msra.mxu0 0
        %3851 = vmatprep.subr.bf16.mxu0 0
        %3852 = vmatpush2.bf16.msra.mxu0 0
        %3853 = vmatprep.subr.bf16.mxu0 0
        %3854 = vmatpush2.bf16.msra.mxu0 0
        %3855 = vmatprep.subr.bf16.mxu0 0
        %3856 = vmatpush2.bf16.msra.mxu0 0
        %3857 = vmatprep.subr.bf16.mxu0 0
        %3858 = vmatpush2.bf16.msra.mxu0 0
        %3859 = vmatprep.subr.bf16.mxu0 0
        %3860 = vmatpush2.bf16.msra.mxu0 0
        %3861 = vmatprep.mubr.bf16.mxu0 0
        %3862 = vmatmul.mubr.bf16.gmra.mxu0 %v3818
        %v3863 = vpop.f32.mrf.mxu0
        %v3864 = vadd.f32 0.0, %v3863
        %v3865 = vpop.f32.mrf.mxu0
        %v3866 = vadd.f32 0.0, %v3865
        %v3867 = vpop.f32.mrf.mxu0
        %v3868 = vadd.f32 0.0, %v3867
        %v3869 = vpop.f32.mrf.mxu0
        %v3870 = vadd.f32 0.0, %v3869
        %3871 = vmatprep.mubr.bf16.mxu0 0
        %3872 = vmatmul.mubr.bf16.gmra.mxu0 %v3821
        %v3873 = vpop.f32.mrf.mxu0
        %v3874 = vadd.f32 0.0, %v3873
        %v3875 = vpop.f32.mrf.mxu0
        %v3876 = vadd.f32 0.0, %v3875
        %v3877 = vpop.f32.mrf.mxu0
        %v3878 = vadd.f32 0.0, %v3877
        %v3879 = vpop.f32.mrf.mxu0
        %v3880 = vadd.f32 0.0, %v3879
        %3881 = vmatprep.mubr.bf16.mxu0 0
        %3882 = vmatmul.mubr.bf16.gmra.mxu0 %v3824
        %v3883 = vpop.f32.mrf.mxu0
        %v3884 = vadd.f32 0.0, %v3883
        %v3885 = vpop.f32.mrf.mxu0
        %v3886 = vadd.f32 0.0, %v3885
        %v3887 = vpop.f32.mrf.mxu0
        %v3888 = vadd.f32 0.0, %v3887
        %v3889 = vpop.f32.mrf.mxu0
        %v3890 = vadd.f32 0.0, %v3889
        %3891 = vmatprep.mubr.bf16.mxu0 0
        %3892 = vmatmul.mubr.bf16.gmra.mxu0 %v3827
        %v3893 = vpop.f32.mrf.mxu0
        %v3894 = vadd.f32 0.0, %v3893
        %v3895 = vpop.f32.mrf.mxu0
        %v3896 = vadd.f32 0.0, %v3895
        %v3897 = vpop.f32.mrf.mxu0
        %v3898 = vadd.f32 0.0, %v3897
        %v3899 = vpop.f32.mrf.mxu0
        %v3900 = vadd.f32 0.0, %v3899
        %3901 = vdwg.mxu0
        %v3902 = vadd.f32 %v3716, %v3864
        %v3903 = vadd.f32 %v3717, %v3866
        %v3904 = vadd.f32 %v3718, %v3868
        %v3905 = vadd.f32 %v3719, %v3870
        %v3906 = vadd.f32 %v3720, %v3874
        %v3907 = vadd.f32 %v3721, %v3876
        %v3908 = vadd.f32 %v3722, %v3878
        %v3909 = vadd.f32 %v3723, %v3880
        %v3910 = vadd.f32 %v3724, %v3884
        %v3911 = vadd.f32 %v3725, %v3886
        %v3912 = vadd.f32 %v3726, %v3888
        %v3913 = vadd.f32 %v3727, %v3890
        %v3914 = vadd.f32 %v3728, %v3894
        %v3915 = vadd.f32 %v3729, %v3896
        %v3916 = vadd.f32 %v3730, %v3898
        %v3917 = vadd.f32 %v3731, %v3900
        %v3918 = vadd.f32 %v2283, %v3902
        %v3919 = vadd.f32 %v2284, %v3903
        %v3920 = vadd.f32 %v2285, %v3904
        %v3921 = vadd.f32 %v2286, %v3905
        %v3922 = vadd.f32 %v2287, %v3906
        %v3923 = vadd.f32 %v2288, %v3907
        %v3924 = vadd.f32 %v2289, %v3908
        %v3925 = vadd.f32 %v2290, %v3909
        %v3926 = vadd.f32 %v2291, %v3910
        %v3927 = vadd.f32 %v2292, %v3911
        %v3928 = vadd.f32 %v2293, %v3912
        %v3929 = vadd.f32 %v2294, %v3913
        %v3930 = vadd.f32 %v2295, %v3914
        %v3931 = vadd.f32 %v2296, %v3915
        %v3932 = vadd.f32 %v2297, %v3916
        %v3933 = vadd.f32 %v2298, %v3917
        %v3934 = vld [vmem:[%s5] sm:$0x3]
        %v3936 = vlaneseq
        %v3937 = vshrl.u32 %v3936, 7
        %v3938 = vsub.s32 0, %v3937
        %v3939 = vrot.slane %v3934, %v3938
        %v3940 = vlaneseq
        %v3941 = vshrl.u32 %v3940, 7
        %v3942 = vsub.s32 1, %v3941
        %v3943 = vrot.slane %v3934, %v3942
        %v3946 = vmul.f32 %v3918, %v3939
        %v3947 = vmul.f32 %v3919, %v3943
        %v3948 = vmul.f32 %v3920, %v3939
        %v3949 = vmul.f32 %v3921, %v3943
        %v3950 = vmul.f32 %v3922, %v3939
        %v3951 = vmul.f32 %v3923, %v3943
        %v3952 = vmul.f32 %v3924, %v3939
        %v3953 = vmul.f32 %v3925, %v3943
        %v3954 = vmul.f32 %v3926, %v3939
        %v3955 = vmul.f32 %v3927, %v3943
        %v3956 = vmul.f32 %v3928, %v3939
        %v3957 = vmul.f32 %v3929, %v3943
        %v3958 = vmul.f32 %v3930, %v3939
        %v3959 = vmul.f32 %v3931, %v3943
        %v3960 = vmul.f32 %v3932, %v3939
        %v3961 = vmul.f32 %v3933, %v3943
        %v3962 = vld [vmem:[%s6] sm:$0x3]
        %v3964 = vlaneseq
        %v3965 = vshrl.u32 %v3964, 7
        %v3966 = vsub.s32 0, %v3965
        %v3967 = vrot.slane %v3962, %v3966
        %v3968 = vlaneseq
        %v3969 = vshrl.u32 %v3968, 7
        %v3970 = vsub.s32 1, %v3969
        %v3971 = vrot.slane %v3962, %v3970
        %v3974 = vadd.f32 %v3946, %v3967
        %v3975 = vadd.f32 %v3947, %v3971
        %v3976 = vadd.f32 %v3948, %v3967
        %v3977 = vadd.f32 %v3949, %v3971
        %v3978 = vadd.f32 %v3950, %v3967
        %v3979 = vadd.f32 %v3951, %v3971
        %v3980 = vadd.f32 %v3952, %v3967
        %v3981 = vadd.f32 %v3953, %v3971
        %v3982 = vadd.f32 %v3954, %v3967
        %v3983 = vadd.f32 %v3955, %v3971
        %v3984 = vadd.f32 %v3956, %v3967
        %v3985 = vadd.f32 %v3957, %v3971
        %v3986 = vadd.f32 %v3958, %v3967
        %v3987 = vadd.f32 %v3959, %v3971
        %v3988 = vadd.f32 %v3960, %v3967
        %v3989 = vadd.f32 %v3961, %v3971
        %v3990 = vadd.f32 %v3974, %v360
        %v3991 = vadd.f32 %v3975, %v361
        %v3992 = vadd.f32 %v3976, %v362
        %v3993 = vadd.f32 %v3977, %v363
        %v3994 = vadd.f32 %v3978, %v364
        %v3995 = vadd.f32 %v3979, %v365
        %v3996 = vadd.f32 %v3980, %v366
        %v3997 = vadd.f32 %v3981, %v367
        %v3998 = vadd.f32 %v3982, %v368
        %v3999 = vadd.f32 %v3983, %v369
        %v4000 = vadd.f32 %v3984, %v370
        %v4001 = vadd.f32 %v3985, %v371
        %v4002 = vadd.f32 %v3986, %v372
        %v4003 = vadd.f32 %v3987, %v373
        %v4004 = vadd.f32 %v3988, %v374
        %v4005 = vadd.f32 %v3989, %v375
        %v4006 = vmax.f32 %v3990, 0.0
        %v4007 = vmax.f32 %v3991, 0.0
        %v4008 = vmax.f32 %v3992, 0.0
        %v4009 = vmax.f32 %v3993, 0.0
        %v4010 = vmax.f32 %v3994, 0.0
        %v4011 = vmax.f32 %v3995, 0.0
        %v4012 = vmax.f32 %v3996, 0.0
        %v4013 = vmax.f32 %v3997, 0.0
        %v4014 = vmax.f32 %v3998, 0.0
        %v4015 = vmax.f32 %v3999, 0.0
        %v4016 = vmax.f32 %v4000, 0.0
        %v4017 = vmax.f32 %v4001, 0.0
        %v4018 = vmax.f32 %v4002, 0.0
        %v4019 = vmax.f32 %v4003, 0.0
        %v4020 = vmax.f32 %v4004, 0.0
        %v4021 = vmax.f32 %v4005, 0.0
        %4022 = vst [vmem:[%s311] sm:$0xff] %v4006
        %4023 = vst [vmem:[%s311 + $0x8] sm:$0xff] %v4007
        %4024 = vst [vmem:[%s311 + $0x10] sm:$0xff] %v4008
        %4025 = vst [vmem:[%s311 + $0x18] sm:$0xff] %v4009
        %4026 = vst [vmem:[%s311 + $0x20] sm:$0xff] %v4010
        %4027 = vst [vmem:[%s311 + $0x28] sm:$0xff] %v4011
        %4028 = vst [vmem:[%s311 + $0x30] sm:$0xff] %v4012
        %4029 = vst [vmem:[%s311 + $0x38] sm:$0xff] %v4013
        %4030 = vst [vmem:[%s311 + $0x40] sm:$0xff] %v4014
        %4031 = vst [vmem:[%s311 + $0x48] sm:$0xff] %v4015
        %4032 = vst [vmem:[%s311 + $0x50] sm:$0xff] %v4016
        %4033 = vst [vmem:[%s311 + $0x58] sm:$0xff] %v4017
        %4034 = vst [vmem:[%s311 + $0x60] sm:$0xff] %v4018
        %4035 = vst [vmem:[%s311 + $0x68] sm:$0xff] %v4019
        %4036 = vst [vmem:[%s311 + $0x70] sm:$0xff] %v4020
        %4037 = vst [vmem:[%s311 + $0x78] sm:$0xff] %v4021
        %s4038 = sand.u32 %s185, 1
        %s4039 = scalar_lea.sflag [#allocation5], %s4038
        %s4040 = sand.u32 %s185, 1
        %s4041 = smul.addr %s4040, 128
        %s4042 = scalar_lea.vmem [#allocation8], %s4041
        // Predicated region
        $region57: #{tpu_custom_call.1} parent=47 // pred_check
          %p4043 = pneg %p195
        $region58: #{tpu_custom_call.1} parent=47 // pred_check_branch
          %4045 = sbr.rel (%p4043) target = $region60
        $region59: #{tpu_custom_call.1} parent=47 // pred_region
          %s4047 = ssub.s32 2048, 2048
          %4048 = vsyncadd %s4039, %s4047
          %s4049 = smul.addr %s25, 16
          %s4050 = smul.addr %s4049, 128
          %s4051 = scalar_lea.hbm %s7, %s4050
          %s4052 = sshll.u32 %s4042, 4
          %s4053 = int_to_ptr.vmem [resolvable:$true] %s4052
          %4058 = dma.vmem_to_hbm [thread:$0]  %s4053, 2048, %s4051, %s4039, 256, 256, 16
        $region60: #{tpu_custom_call.1} parent=47 // pred_fallthru
          _
      $region48: #{tpu_custom_call.1} parent=5 // pred_fallthru
        _
      %p4059 = scmp.le.s32.totalorder 2, %s20
      // Predicated region
      $region61: #{tpu_custom_call.1} parent=5 // pred_check
        %p4060 = pneg %p4059
      $region62: #{tpu_custom_call.1} parent=5 // pred_check_branch
        %4062 = sbr.rel (%p4060) target = $region64
      $region63: #{tpu_custom_call.1} parent=5 // pred_region
        %s4063 = ssub.s32 %s20, 2
        // Predicated region
        $region65: #{tpu_custom_call.1} parent=63 // pred_check
          %p4064 = pneg %p201
        $region66: #{tpu_custom_call.1} parent=63 // pred_check_branch
          %4066 = sbr.rel (%p4064) target = $region68
        $region67: #{tpu_custom_call.1} parent=63 // pred_region
          %s4067 = sand.u32 %s186, 1
          %s4068 = scalar_lea.sflag [#allocation5], %s4067
          %s4069 = sand.u32 %s186, 1
          %s4070 = smul.addr %s4069, 128
          %s4071 = scalar_lea.vmem [#allocation8], %s4070
          %4072 = dma.done %s4068, 2048
        $region68: #{tpu_custom_call.1} parent=63 // pred_fallthru
          _
      $region64: #{tpu_custom_call.1} parent=5 // pred_fallthru
        _
    $region6: #{tpu_custom_call.1} parent=1 // loop_footer
      %s24 = sadd.s32 1, %s20
    $region7: #{tpu_custom_call.1} parent=1 // loop_footer_branch
      %19 = sbr.rel target = $region3
    $region8: #{tpu_custom_call.1} parent=1 // loop_exit
      _
    %4073 = vsyncpa [#allocation4], 1
    %s4074 = scalar_lea.sflag [#allocation4], 1
    %4075 = vsyncpa %s4074, 1
    %4076 = vsyncpa [#allocation7], 1
    %4077 = vsyncpa [#allocation5], 1
    %s4078 = scalar_lea.sflag [#allocation5], 1
    %4079 = vsyncpa %s4078, 1

</llo_original>
